<compile_context>
chip_gen: v7x
topology: tpu7x:2x2x1
jax: 0.10.0
libtpu: 0.0.40
codegen_flags: <defaults>
</compile_context>

<pallas_src>
import functools
import math

import jax
import jax.numpy as jnp
import numpy as np
from jax.experimental import pallas as pl
from jax.experimental.pallas import tpu as pltpu

# -------------------------- configuration ----------------------------------
D_MODEL = 32
NHEAD = 4
DIM_FF = 64
NUM_LAYERS = 2
SEQ = 8
BATCH = 2
EPS = 1e-5


# ----------------------------- kernel ---------------------------------------
def _layernorm(x, gamma, beta):
    mean = jnp.mean(x, axis=-1, keepdims=True)
    var = jnp.mean((x - mean) ** 2, axis=-1, keepdims=True)
    return (x - mean) * jax.lax.rsqrt(var + EPS) * gamma + beta


def encoder_kernel(
    x_ref, pos_ref,                          # activations, (B*S, D)
    wqkv_ref, bqkv_ref,                      # packed QKV (pre-transposed, Q pre-scaled)
    wo_ref, bo_ref,                          # attention output projection
    w1_ref, b1_ref, w2_ref, b2_ref,          # FFN (pre-transposed)
    g1_ref, be1_ref, g2_ref, be2_ref,        # LayerNorm 1/2
    o_ref,
    *, batch, seq, nhead, num_layers,
):
    n, d = x_ref.shape
    hd = d // nhead

    x = x_ref[...]                            # (B*S, D)
    pos = pos_ref[...]
    wqkv = wqkv_ref[...]                      # (D, 3D)
    bqkv = bqkv_ref[...]                      # (1, 3D)
    wo, bo = wo_ref[...], bo_ref[...]
    w1, b1 = w1_ref[...], b1_ref[...]
    w2, b2 = w2_ref[...], b2_ref[...]
    g1, be1 = g1_ref[...], be1_ref[...]
    g2, be2 = g2_ref[...], be2_ref[...]

    # pos is constant across layers: project it through the (scaled) Q and K
    # weights once, outside the layer loop. Biases are added only in the
    # per-layer x projection, so no double-count.
    pos_qk = jnp.dot(pos, wqkv[:, : 2 * d], preferred_element_type=jnp.float32)
    pos_q = pos_qk[:, :d]
    pos_k = pos_qk[:, d:]

    for _ in range(num_layers):               # shared weights (_get_clones deepcopy)
        # ---- fused QKV projection: one (B*S, D) x (D, 3D) MXU pass ---------
        qkv = jnp.dot(x, wqkv, preferred_element_type=jnp.float32) + bqkv
        q = qkv[:, :d] + pos_q                # q/k use src+pos; v uses src only
        k = qkv[:, d:2 * d] + pos_k
        v = qkv[:, 2 * d:]

        # ---- multi-head attention, batched over B -------------------------
        q3 = q.reshape(batch, seq, d)         # major-dim split: layout-free
        k3 = k.reshape(batch, seq, d)
        v3 = v.reshape(batch, seq, d)
        head_outs = []
        for h in range(nhead):
            lo = h * hd
            qh = q3[:, :, lo:lo + hd]         # scale already folded into wq
            kh = k3[:, :, lo:lo + hd]
            vh = v3[:, :, lo:lo + hd]
            s = jnp.einsum("bqd,bkd->bqk", qh, kh,
                           preferred_element_type=jnp.float32)     # (B, S, S)
            s = s - jnp.max(s, axis=-1, keepdims=True)
            p = jnp.exp(s)
            p = p * pl.reciprocal(jnp.sum(p, axis=-1, keepdims=True), approx=True)
            head_outs.append(jnp.einsum("bqk,bkd->bqd", p, vh,
                                        preferred_element_type=jnp.float32))
        attn = jnp.concatenate(head_outs, axis=-1).reshape(n, d)
        attn = jnp.dot(attn, wo, preferred_element_type=jnp.float32) + bo

        # ---- residual + LayerNorm1 -----------------------------------------
        x = _layernorm(x + attn, g1, be1)

        # ---- FFN (ReLU) + residual + LayerNorm2 -----------------------------
        h1 = jnp.maximum(
            jnp.dot(x, w1, preferred_element_type=jnp.float32) + b1, 0.0)
        ff = jnp.dot(h1, w2, preferred_element_type=jnp.float32) + b2
        x = _layernorm(x + ff, g2, be2)

    # NOTE: out last-dim is D=32 (<128 lanes) -> masked store, but it is a
    # single ~2 KiB store for the whole kernel; reshaping to a lane-dense
    # (B, S*D) view in-kernel would cross (8,128) tile boundaries and cost
    # more than it saves at this size.
    o_ref[...] = x.astype(o_ref.dtype)


# ----------------------------- wrapper ---------------------------------------
def pack_params(p):
    """Host-side weight prep: pre-transpose, pack QKV, fold 1/sqrt(hd) into Q."""
    scale = 1.0 / math.sqrt(D_MODEL // NHEAD)
    wqkv = jnp.concatenate([p["wq"].T * scale, p["wk"].T, p["wv"].T], axis=1)  # (D, 3D)
    bqkv = jnp.concatenate([p["bq"] * scale, p["bk"], p["bv"]], axis=1)        # (1, 3D)
    return [
        wqkv, bqkv,
        p["wo"].T, p["bo"],
        p["w1"].T, p["b1"],
        p["w2"].T, p["b2"],
        p["g1"], p["be1"], p["g2"], p["be2"],
    ]


def transformer_encoder_pallas(src_sbd, pos_sbd, params, num_layers):
    """src_sbd, pos_sbd: (S, B, D) — PyTorch convention. Returns (S, B, D)."""
    S, B, D = src_sbd.shape
    # (S, B, D) -> (B, S, D) -> (B*S, D): every matmul in the kernel becomes a
    # single dense 2-D MXU pass over the whole batch.
    x = jnp.transpose(src_sbd, (1, 0, 2)).reshape(B * S, D)
    pos = jnp.transpose(pos_sbd, (1, 0, 2)).reshape(B * S, D)
    weights = pack_params(params)

    n_inputs = 2 + len(weights)
    out = pl.pallas_call(
        functools.partial(encoder_kernel, batch=B, seq=S, nhead=NHEAD,
                          num_layers=num_layers),
        out_shape=jax.ShapeDtypeStruct((B * S, D), src_sbd.dtype),
        in_specs=[pl.BlockSpec(memory_space=pltpu.MemorySpace.VMEM)
                  for _ in range(n_inputs)],
        out_specs=pl.BlockSpec(memory_space=pltpu.MemorySpace.VMEM),
    )(x, pos, *weights)

    return jnp.transpose(out.reshape(B, S, D), (1, 0, 2))


# ------------------------- pure-JAX reference --------------------------------
def _ref_layer(x, pos, p):
    hd = D_MODEL // NHEAD
    scale = 1.0 / math.sqrt(hd)
    xq = x + pos
    q = xq @ p["wq"].T + p["bq"]
    k = xq @ p["wk"].T + p["bk"]
    v = x @ p["wv"].T + p["bv"]

    def split(t):  # (B,S,D) -> (B,H,S,hd)
        B, S, _ = t.shape
        return jnp.transpose(t.reshape(B, S, NHEAD, hd), (0, 2, 1, 3))

    qh, kh, vh = split(q) * scale, split(k), split(v)
    s = jnp.einsum("bhqd,bhkd->bhqk", qh, kh)
    pattn = jax.nn.softmax(s, axis=-1)
    o = jnp.einsum("bhqk,bhkd->bhqd", pattn, vh)
    B, H, S, _ = o.shape
    o = jnp.transpose(o, (0, 2, 1, 3)).reshape(B, S, D_MODEL)
    o = o @ p["wo"].T + p["bo"]

    def ln(t, g, b):
        m = jnp.mean(t, -1, keepdims=True)
        var = jnp.mean((t - m) ** 2, -1, keepdims=True)
        return (t - m) / jnp.sqrt(var + EPS) * g + b

    x = ln(x + o, p["g1"], p["be1"])
    ff = jnp.maximum(x @ p["w1"].T + p["b1"], 0.0) @ p["w2"].T + p["b2"]
    return ln(x + ff, p["g2"], p["be2"])


def transformer_encoder_ref(src_sbd, pos_sbd, params, num_layers):
    x = jnp.transpose(src_sbd, (1, 0, 2))
    pos = jnp.transpose(pos_sbd, (1, 0, 2))
    for _ in range(num_layers):
        x = _ref_layer(x, pos, params)
    return jnp.transpose(x, (1, 0, 2))


# ------------------------------ parameters -----------------------------------
def init_params(key):
    ks = jax.random.split(key, 12)
    s = 0.05
    f32 = jnp.float32
    return {
        "wq": jax.random.normal(ks[0], (D_MODEL, D_MODEL), f32) * s,
        "wk": jax.random.normal(ks[1], (D_MODEL, D_MODEL), f32) * s,
        "wv": jax.random.normal(ks[2], (D_MODEL, D_MODEL), f32) * s,
        "wo": jax.random.normal(ks[3], (D_MODEL, D_MODEL), f32) * s,
        "bq": jax.random.normal(ks[4], (1, D_MODEL), f32) * s,
        "bk": jax.random.normal(ks[5], (1, D_MODEL), f32) * s,
        "bv": jax.random.normal(ks[6], (1, D_MODEL), f32) * s,
        "bo": jax.random.normal(ks[7], (1, D_MODEL), f32) * s,
        "w1": jax.random.normal(ks[8], (DIM_FF, D_MODEL), f32) * s,
        "b1": jax.random.normal(ks[9], (1, DIM_FF), f32) * s,
        "w2": jax.random.normal(ks[10], (D_MODEL, DIM_FF), f32) * s,
        "b2": jax.random.normal(ks[11], (1, D_MODEL), f32) * s,
        "g1": jnp.ones((1, D_MODEL), f32),
        "be1": jnp.zeros((1, D_MODEL), f32),
        "g2": jnp.ones((1, D_MODEL), f32),
        "be2": jnp.zeros((1, D_MODEL), f32),
    }


# --------------------------------- main ---------------------------------------
if __name__ == "__main__":
    key = jax.random.PRNGKey(0)
    k_src, k_pos, k_par = jax.random.split(key, 3)

    src = jax.random.normal(k_src, (SEQ, BATCH, D_MODEL), jnp.float32)   # (S, B, D)
    pos = jax.random.normal(k_pos, (SEQ, BATCH, D_MODEL), jnp.float32)
    params = init_params(k_par)

    out = transformer_encoder_pallas(src, pos, params, NUM_LAYERS)
    out = jax.block_until_ready(out)

    ref = jax.block_until_ready(transformer_encoder_ref(src, pos, params, NUM_LAYERS))
    # Tolerance loosened slightly vs exact math because the softmax denominator
    # uses the EUP approximate reciprocal (pl.reciprocal(..., approx=True)).
    np.testing.assert_allclose(np.asarray(out), np.asarray(ref), atol=2e-3, rtol=2e-3)

    print("KERNEL_OK")
</pallas_src>

<mosaic_0001>
module attributes {stable_mosaic.version = 11 : i64} {
  func.func @encoder_kernel(%arg0: memref<16x32xf32, #tpu.memory_space<vmem>>, %arg1: memref<16x32xf32, #tpu.memory_space<vmem>>, %arg2: memref<32x96xf32, #tpu.memory_space<vmem>>, %arg3: memref<1x96xf32, #tpu.memory_space<vmem>>, %arg4: memref<32x32xf32, #tpu.memory_space<vmem>>, %arg5: memref<1x32xf32, #tpu.memory_space<vmem>>, %arg6: memref<32x64xf32, #tpu.memory_space<vmem>>, %arg7: memref<1x64xf32, #tpu.memory_space<vmem>>, %arg8: memref<64x32xf32, #tpu.memory_space<vmem>>, %arg9: memref<1x32xf32, #tpu.memory_space<vmem>>, %arg10: memref<1x32xf32, #tpu.memory_space<vmem>>, %arg11: memref<1x32xf32, #tpu.memory_space<vmem>>, %arg12: memref<1x32xf32, #tpu.memory_space<vmem>>, %arg13: memref<1x32xf32, #tpu.memory_space<vmem>>, %arg14: memref<16x32xf32, #tpu.memory_space<vmem>>) attributes {dimension_semantics = [], scalar_prefetch = 0 : i64, scratch_operands = 0 : i64, tpu.core_type = #tpu.core_type<tc>} {
    %c0 = arith.constant 0 : index
    %c0_0 = arith.constant 0 : index
    %0 = vector.load %arg0[%c0, %c0_0] : memref<16x32xf32, #tpu.memory_space<vmem>>, vector<16x32xf32>
    %c0_1 = arith.constant 0 : index
    %c0_2 = arith.constant 0 : index
    %1 = vector.load %arg1[%c0_1, %c0_2] : memref<16x32xf32, #tpu.memory_space<vmem>>, vector<16x32xf32>
    %c0_3 = arith.constant 0 : index
    %c0_4 = arith.constant 0 : index
    %2 = vector.load %arg2[%c0_3, %c0_4] : memref<32x96xf32, #tpu.memory_space<vmem>>, vector<32x96xf32>
    %c0_5 = arith.constant 0 : index
    %c0_6 = arith.constant 0 : index
    %3 = vector.load %arg3[%c0_5, %c0_6] : memref<1x96xf32, #tpu.memory_space<vmem>>, vector<1x96xf32>
    %c0_7 = arith.constant 0 : index
    %c0_8 = arith.constant 0 : index
    %4 = vector.load %arg4[%c0_7, %c0_8] : memref<32x32xf32, #tpu.memory_space<vmem>>, vector<32x32xf32>
    %c0_9 = arith.constant 0 : index
    %c0_10 = arith.constant 0 : index
    %5 = vector.load %arg5[%c0_9, %c0_10] : memref<1x32xf32, #tpu.memory_space<vmem>>, vector<1x32xf32>
    %c0_11 = arith.constant 0 : index
    %c0_12 = arith.constant 0 : index
    %6 = vector.load %arg6[%c0_11, %c0_12] : memref<32x64xf32, #tpu.memory_space<vmem>>, vector<32x64xf32>
    %c0_13 = arith.constant 0 : index
    %c0_14 = arith.constant 0 : index
    %7 = vector.load %arg7[%c0_13, %c0_14] : memref<1x64xf32, #tpu.memory_space<vmem>>, vector<1x64xf32>
    %c0_15 = arith.constant 0 : index
    %c0_16 = arith.constant 0 : index
    %8 = vector.load %arg8[%c0_15, %c0_16] : memref<64x32xf32, #tpu.memory_space<vmem>>, vector<64x32xf32>
    %c0_17 = arith.constant 0 : index
    %c0_18 = arith.constant 0 : index
    %9 = vector.load %arg9[%c0_17, %c0_18] : memref<1x32xf32, #tpu.memory_space<vmem>>, vector<1x32xf32>
    %c0_19 = arith.constant 0 : index
    %c0_20 = arith.constant 0 : index
    %10 = vector.load %arg10[%c0_19, %c0_20] : memref<1x32xf32, #tpu.memory_space<vmem>>, vector<1x32xf32>
    %c0_21 = arith.constant 0 : index
    %c0_22 = arith.constant 0 : index
    %11 = vector.load %arg11[%c0_21, %c0_22] : memref<1x32xf32, #tpu.memory_space<vmem>>, vector<1x32xf32>
    %c0_23 = arith.constant 0 : index
    %c0_24 = arith.constant 0 : index
    %12 = vector.load %arg12[%c0_23, %c0_24] : memref<1x32xf32, #tpu.memory_space<vmem>>, vector<1x32xf32>
    %c0_25 = arith.constant 0 : index
    %c0_26 = arith.constant 0 : index
    %13 = vector.load %arg13[%c0_25, %c0_26] : memref<1x32xf32, #tpu.memory_space<vmem>>, vector<1x32xf32>
    %14 = vector.extract_strided_slice %2 {offsets = [0, 0], sizes = [32, 64], strides = [1, 1]} : vector<32x96xf32> to vector<32x64xf32>
    %cst = arith.constant dense<0.000000e+00> : vector<16x64xf32>
    %15 = tpu.matmul %1, %14, %cst {dimension_numbers = #tpu.dot_dimension_numbers<[1], [0], [0], [1], [0, 0, 1, 1], [], []>} : vector<16x32xf32>, vector<32x64xf32>, vector<16x64xf32> -> vector<16x64xf32>
    %16 = vector.extract_strided_slice %15 {offsets = [0, 0], sizes = [16, 32], strides = [1, 1]} : vector<16x64xf32> to vector<16x32xf32>
    %17 = vector.extract_strided_slice %15 {offsets = [0, 32], sizes = [16, 32], strides = [1, 1]} : vector<16x64xf32> to vector<16x32xf32>
    %cst_27 = arith.constant dense<0.000000e+00> : vector<16x96xf32>
    %18 = tpu.matmul %0, %2, %cst_27 {dimension_numbers = #tpu.dot_dimension_numbers<[1], [0], [0], [1], [0, 0, 1, 1], [], []>} : vector<16x32xf32>, vector<32x96xf32>, vector<16x96xf32> -> vector<16x96xf32>
    %19 = vector.broadcast %3 : vector<1x96xf32> to vector<16x96xf32>
    %20 = arith.addf %18, %19 : vector<16x96xf32>
    %21 = vector.extract_strided_slice %20 {offsets = [0, 0], sizes = [16, 32], strides = [1, 1]} : vector<16x96xf32> to vector<16x32xf32>
    %22 = arith.addf %21, %16 : vector<16x32xf32>
    %23 = vector.extract_strided_slice %20 {offsets = [0, 32], sizes = [16, 32], strides = [1, 1]} : vector<16x96xf32> to vector<16x32xf32>
    %24 = arith.addf %23, %17 : vector<16x32xf32>
    %25 = vector.extract_strided_slice %20 {offsets = [0, 64], sizes = [16, 32], strides = [1, 1]} : vector<16x96xf32> to vector<16x32xf32>
    %26 = vector.shape_cast %22 : vector<16x32xf32> to vector<2x8x32xf32>
    %27 = vector.shape_cast %24 : vector<16x32xf32> to vector<2x8x32xf32>
    %28 = vector.shape_cast %25 : vector<16x32xf32> to vector<2x8x32xf32>
    %29 = vector.extract_strided_slice %26 {offsets = [0, 0, 0], sizes = [2, 8, 8], strides = [1, 1, 1]} : vector<2x8x32xf32> to vector<2x8x8xf32>
    %30 = vector.extract_strided_slice %27 {offsets = [0, 0, 0], sizes = [2, 8, 8], strides = [1, 1, 1]} : vector<2x8x32xf32> to vector<2x8x8xf32>
    %31 = vector.extract_strided_slice %28 {offsets = [0, 0, 0], sizes = [2, 8, 8], strides = [1, 1, 1]} : vector<2x8x32xf32> to vector<2x8x8xf32>
    "tpu.trace_start"() <{level = 10 : i32, message = "bqd,bkd->bqk"}> : () -> ()
    %cst_28 = arith.constant dense<0.000000e+00> : vector<2x8x8xf32>
    %32 = tpu.matmul %29, %30, %cst_28 {dimension_numbers = #tpu.dot_dimension_numbers<[2], [2], [1], [1], [0, 0, 0, 1, 1, 1], [0], [0]>} : vector<2x8x8xf32>, vector<2x8x8xf32>, vector<2x8x8xf32> -> vector<2x8x8xf32>
    "tpu.trace_stop"() : () -> ()
    %cst_29 = arith.constant dense<0xFF800000> : vector<2x8xf32>
    %33 = vector.multi_reduction <maximumf>, %32, %cst_29 [2] : vector<2x8x8xf32> to vector<2x8xf32>
    %34 = vector.shape_cast %33 : vector<2x8xf32> to vector<2x8x1xf32>
    %35 = vector.broadcast %34 : vector<2x8x1xf32> to vector<2x8x8xf32>
    %36 = arith.subf %32, %35 : vector<2x8x8xf32>
    %37 = math.exp %36 : vector<2x8x8xf32>
    %cst_30 = arith.constant dense<0.000000e+00> : vector<2x8xf32>
    %38 = vector.multi_reduction <add>, %37, %cst_30 [2] : vector<2x8x8xf32> to vector<2x8xf32>
    %39 = vector.shape_cast %38 : vector<2x8xf32> to vector<2x8x1xf32>
    %40 = tpu.reciprocal %39 {approx = true} : vector<2x8x1xf32> -> vector<2x8x1xf32>
    %41 = vector.broadcast %40 : vector<2x8x1xf32> to vector<2x8x8xf32>
    %42 = arith.mulf %37, %41 : vector<2x8x8xf32>
    "tpu.trace_start"() <{level = 10 : i32, message = "bqk,bkd->bqd"}> : () -> ()
    %cst_31 = arith.constant dense<0.000000e+00> : vector<2x8x8xf32>
    %43 = tpu.matmul %42, %31, %cst_31 {dimension_numbers = #tpu.dot_dimension_numbers<[2], [1], [1], [2], [0, 0, 0, 1, 1, 2], [0], [0]>} : vector<2x8x8xf32>, vector<2x8x8xf32>, vector<2x8x8xf32> -> vector<2x8x8xf32>
    "tpu.trace_stop"() : () -> ()
    %44 = vector.extract_strided_slice %26 {offsets = [0, 0, 8], sizes = [2, 8, 8], strides = [1, 1, 1]} : vector<2x8x32xf32> to vector<2x8x8xf32>
    %45 = vector.extract_strided_slice %27 {offsets = [0, 0, 8], sizes = [2, 8, 8], strides = [1, 1, 1]} : vector<2x8x32xf32> to vector<2x8x8xf32>
    %46 = vector.extract_strided_slice %28 {offsets = [0, 0, 8], sizes = [2, 8, 8], strides = [1, 1, 1]} : vector<2x8x32xf32> to vector<2x8x8xf32>
    "tpu.trace_start"() <{level = 10 : i32, message = "bqd,bkd->bqk"}> : () -> ()
    %cst_32 = arith.constant dense<0.000000e+00> : vector<2x8x8xf32>
    %47 = tpu.matmul %44, %45, %cst_32 {dimension_numbers = #tpu.dot_dimension_numbers<[2], [2], [1], [1], [0, 0, 0, 1, 1, 1], [0], [0]>} : vector<2x8x8xf32>, vector<2x8x8xf32>, vector<2x8x8xf32> -> vector<2x8x8xf32>
    "tpu.trace_stop"() : () -> ()
    %cst_33 = arith.constant dense<0xFF800000> : vector<2x8xf32>
    %48 = vector.multi_reduction <maximumf>, %47, %cst_33 [2] : vector<2x8x8xf32> to vector<2x8xf32>
    %49 = vector.shape_cast %48 : vector<2x8xf32> to vector<2x8x1xf32>
    %50 = vector.broadcast %49 : vector<2x8x1xf32> to vector<2x8x8xf32>
    %51 = arith.subf %47, %50 : vector<2x8x8xf32>
    %52 = math.exp %51 : vector<2x8x8xf32>
    %cst_34 = arith.constant dense<0.000000e+00> : vector<2x8xf32>
    %53 = vector.multi_reduction <add>, %52, %cst_34 [2] : vector<2x8x8xf32> to vector<2x8xf32>
    %54 = vector.shape_cast %53 : vector<2x8xf32> to vector<2x8x1xf32>
    %55 = tpu.reciprocal %54 {approx = true} : vector<2x8x1xf32> -> vector<2x8x1xf32>
    %56 = vector.broadcast %55 : vector<2x8x1xf32> to vector<2x8x8xf32>
    %57 = arith.mulf %52, %56 : vector<2x8x8xf32>
    "tpu.trace_start"() <{level = 10 : i32, message = "bqk,bkd->bqd"}> : () -> ()
    %cst_35 = arith.constant dense<0.000000e+00> : vector<2x8x8xf32>
    %58 = tpu.matmul %57, %46, %cst_35 {dimension_numbers = #tpu.dot_dimension_numbers<[2], [1], [1], [2], [0, 0, 0, 1, 1, 2], [0], [0]>} : vector<2x8x8xf32>, vector<2x8x8xf32>, vector<2x8x8xf32> -> vector<2x8x8xf32>
    "tpu.trace_stop"() : () -> ()
    %59 = vector.extract_strided_slice %26 {offsets = [0, 0, 16], sizes = [2, 8, 8], strides = [1, 1, 1]} : vector<2x8x32xf32> to vector<2x8x8xf32>
    %60 = vector.extract_strided_slice %27 {offsets = [0, 0, 16], sizes = [2, 8, 8], strides = [1, 1, 1]} : vector<2x8x32xf32> to vector<2x8x8xf32>
    %61 = vector.extract_strided_slice %28 {offsets = [0, 0, 16], sizes = [2, 8, 8], strides = [1, 1, 1]} : vector<2x8x32xf32> to vector<2x8x8xf32>
    "tpu.trace_start"() <{level = 10 : i32, message = "bqd,bkd->bqk"}> : () -> ()
    %cst_36 = arith.constant dense<0.000000e+00> : vector<2x8x8xf32>
    %62 = tpu.matmul %59, %60, %cst_36 {dimension_numbers = #tpu.dot_dimension_numbers<[2], [2], [1], [1], [0, 0, 0, 1, 1, 1], [0], [0]>} : vector<2x8x8xf32>, vector<2x8x8xf32>, vector<2x8x8xf32> -> vector<2x8x8xf32>
    "tpu.trace_stop"() : () -> ()
    %cst_37 = arith.constant dense<0xFF800000> : vector<2x8xf32>
    %63 = vector.multi_reduction <maximumf>, %62, %cst_37 [2] : vector<2x8x8xf32> to vector<2x8xf32>
    %64 = vector.shape_cast %63 : vector<2x8xf32> to vector<2x8x1xf32>
    %65 = vector.broadcast %64 : vector<2x8x1xf32> to vector<2x8x8xf32>
    %66 = arith.subf %62, %65 : vector<2x8x8xf32>
    %67 = math.exp %66 : vector<2x8x8xf32>
    %cst_38 = arith.constant dense<0.000000e+00> : vector<2x8xf32>
    %68 = vector.multi_reduction <add>, %67, %cst_38 [2] : vector<2x8x8xf32> to vector<2x8xf32>
    %69 = vector.shape_cast %68 : vector<2x8xf32> to vector<2x8x1xf32>
    %70 = tpu.reciprocal %69 {approx = true} : vector<2x8x1xf32> -> vector<2x8x1xf32>
    %71 = vector.broadcast %70 : vector<2x8x1xf32> to vector<2x8x8xf32>
    %72 = arith.mulf %67, %71 : vector<2x8x8xf32>
    "tpu.trace_start"() <{level = 10 : i32, message = "bqk,bkd->bqd"}> : () -> ()
    %cst_39 = arith.constant dense<0.000000e+00> : vector<2x8x8xf32>
    %73 = tpu.matmul %72, %61, %cst_39 {dimension_numbers = #tpu.dot_dimension_numbers<[2], [1], [1], [2], [0, 0, 0, 1, 1, 2], [0], [0]>} : vector<2x8x8xf32>, vector<2x8x8xf32>, vector<2x8x8xf32> -> vector<2x8x8xf32>
    "tpu.trace_stop"() : () -> ()
    %74 = vector.extract_strided_slice %26 {offsets = [0, 0, 24], sizes = [2, 8, 8], strides = [1, 1, 1]} : vector<2x8x32xf32> to vector<2x8x8xf32>
    %75 = vector.extract_strided_slice %27 {offsets = [0, 0, 24], sizes = [2, 8, 8], strides = [1, 1, 1]} : vector<2x8x32xf32> to vector<2x8x8xf32>
    %76 = vector.extract_strided_slice %28 {offsets = [0, 0, 24], sizes = [2, 8, 8], strides = [1, 1, 1]} : vector<2x8x32xf32> to vector<2x8x8xf32>
    "tpu.trace_start"() <{level = 10 : i32, message = "bqd,bkd->bqk"}> : () -> ()
    %cst_40 = arith.constant dense<0.000000e+00> : vector<2x8x8xf32>
    %77 = tpu.matmul %74, %75, %cst_40 {dimension_numbers = #tpu.dot_dimension_numbers<[2], [2], [1], [1], [0, 0, 0, 1, 1, 1], [0], [0]>} : vector<2x8x8xf32>, vector<2x8x8xf32>, vector<2x8x8xf32> -> vector<2x8x8xf32>
    "tpu.trace_stop"() : () -> ()
    %cst_41 = arith.constant dense<0xFF800000> : vector<2x8xf32>
    %78 = vector.multi_reduction <maximumf>, %77, %cst_41 [2] : vector<2x8x8xf32> to vector<2x8xf32>
    %79 = vector.shape_cast %78 : vector<2x8xf32> to vector<2x8x1xf32>
    %80 = vector.broadcast %79 : vector<2x8x1xf32> to vector<2x8x8xf32>
    %81 = arith.subf %77, %80 : vector<2x8x8xf32>
    %82 = math.exp %81 : vector<2x8x8xf32>
    %cst_42 = arith.constant dense<0.000000e+00> : vector<2x8xf32>
    %83 = vector.multi_reduction <add>, %82, %cst_42 [2] : vector<2x8x8xf32> to vector<2x8xf32>
    %84 = vector.shape_cast %83 : vector<2x8xf32> to vector<2x8x1xf32>
    %85 = tpu.reciprocal %84 {approx = true} : vector<2x8x1xf32> -> vector<2x8x1xf32>
    %86 = vector.broadcast %85 : vector<2x8x1xf32> to vector<2x8x8xf32>
    %87 = arith.mulf %82, %86 : vector<2x8x8xf32>
    "tpu.trace_start"() <{level = 10 : i32, message = "bqk,bkd->bqd"}> : () -> ()
    %cst_43 = arith.constant dense<0.000000e+00> : vector<2x8x8xf32>
    %88 = tpu.matmul %87, %76, %cst_43 {dimension_numbers = #tpu.dot_dimension_numbers<[2], [1], [1], [2], [0, 0, 0, 1, 1, 2], [0], [0]>} : vector<2x8x8xf32>, vector<2x8x8xf32>, vector<2x8x8xf32> -> vector<2x8x8xf32>
    "tpu.trace_stop"() : () -> ()
    %89 = tpu.concatenate %43, %58, %73, %88 in 2 : vector<2x8x8xf32>, vector<2x8x8xf32>, vector<2x8x8xf32>, vector<2x8x8xf32> -> vector<2x8x32xf32>
    %90 = vector.shape_cast %89 : vector<2x8x32xf32> to vector<16x32xf32>
    %cst_44 = arith.constant dense<0.000000e+00> : vector<16x32xf32>
    %91 = tpu.matmul %90, %4, %cst_44 {dimension_numbers = #tpu.dot_dimension_numbers<[1], [0], [0], [1], [0, 0, 1, 1], [], []>} : vector<16x32xf32>, vector<32x32xf32>, vector<16x32xf32> -> vector<16x32xf32>
    %92 = vector.broadcast %5 : vector<1x32xf32> to vector<16x32xf32>
    %93 = arith.addf %91, %92 : vector<16x32xf32>
    %94 = arith.addf %0, %93 : vector<16x32xf32>
    %cst_45 = arith.constant dense<0.000000e+00> : vector<16xf32>
    %95 = vector.multi_reduction <add>, %94, %cst_45 [1] : vector<16x32xf32> to vector<16xf32>
    %96 = vector.shape_cast %95 : vector<16xf32> to vector<16x1xf32>
    %cst_46 = arith.constant 3.200000e+01 : f32
    %97 = vector.broadcast %cst_46 : f32 to vector<16x1xf32>
    %98 = arith.divf %96, %97 : vector<16x1xf32>
    %99 = vector.broadcast %98 : vector<16x1xf32> to vector<16x32xf32>
    %100 = arith.subf %94, %99 : vector<16x32xf32>
    %101 = arith.mulf %100, %100 : vector<16x32xf32>
    %cst_47 = arith.constant dense<0.000000e+00> : vector<16xf32>
    %102 = vector.multi_reduction <add>, %101, %cst_47 [1] : vector<16x32xf32> to vector<16xf32>
    %103 = vector.shape_cast %102 : vector<16xf32> to vector<16x1xf32>
    %cst_48 = arith.constant 3.200000e+01 : f32
    %104 = vector.broadcast %cst_48 : f32 to vector<16x1xf32>
    %105 = arith.divf %103, %104 : vector<16x1xf32>
    %106 = vector.broadcast %98 : vector<16x1xf32> to vector<16x32xf32>
    %107 = arith.subf %94, %106 : vector<16x32xf32>
    %cst_49 = arith.constant 9.99999974E-6 : f32
    %108 = vector.broadcast %cst_49 : f32 to vector<16x1xf32>
    %109 = arith.addf %105, %108 : vector<16x1xf32>
    %110 = math.rsqrt %109 : vector<16x1xf32>
    %111 = vector.broadcast %110 : vector<16x1xf32> to vector<16x32xf32>
    %112 = arith.mulf %107, %111 : vector<16x32xf32>
    %113 = vector.broadcast %10 : vector<1x32xf32> to vector<16x32xf32>
    %114 = arith.mulf %112, %113 : vector<16x32xf32>
    %115 = vector.broadcast %11 : vector<1x32xf32> to vector<16x32xf32>
    %116 = arith.addf %114, %115 : vector<16x32xf32>
    %cst_50 = arith.constant dense<0.000000e+00> : vector<16x64xf32>
    %117 = tpu.matmul %116, %6, %cst_50 {dimension_numbers = #tpu.dot_dimension_numbers<[1], [0], [0], [1], [0, 0, 1, 1], [], []>} : vector<16x32xf32>, vector<32x64xf32>, vector<16x64xf32> -> vector<16x64xf32>
    %118 = vector.broadcast %7 : vector<1x64xf32> to vector<16x64xf32>
    %119 = arith.addf %117, %118 : vector<16x64xf32>
    %cst_51 = arith.constant 0.000000e+00 : f32
    %120 = vector.broadcast %cst_51 : f32 to vector<16x64xf32>
    %121 = arith.maximumf %119, %120 : vector<16x64xf32>
    %cst_52 = arith.constant dense<0.000000e+00> : vector<16x32xf32>
    %122 = tpu.matmul %121, %8, %cst_52 {dimension_numbers = #tpu.dot_dimension_numbers<[1], [0], [0], [1], [0, 0, 1, 1], [], []>} : vector<16x64xf32>, vector<64x32xf32>, vector<16x32xf32> -> vector<16x32xf32>
    %123 = vector.broadcast %9 : vector<1x32xf32> to vector<16x32xf32>
    %124 = arith.addf %122, %123 : vector<16x32xf32>
    %125 = arith.addf %116, %124 : vector<16x32xf32>
    %cst_53 = arith.constant dense<0.000000e+00> : vector<16xf32>
    %126 = vector.multi_reduction <add>, %125, %cst_53 [1] : vector<16x32xf32> to vector<16xf32>
    %127 = vector.shape_cast %126 : vector<16xf32> to vector<16x1xf32>
    %cst_54 = arith.constant 3.200000e+01 : f32
    %128 = vector.broadcast %cst_54 : f32 to vector<16x1xf32>
    %129 = arith.divf %127, %128 : vector<16x1xf32>
    %130 = vector.broadcast %129 : vector<16x1xf32> to vector<16x32xf32>
    %131 = arith.subf %125, %130 : vector<16x32xf32>
    %132 = arith.mulf %131, %131 : vector<16x32xf32>
    %cst_55 = arith.constant dense<0.000000e+00> : vector<16xf32>
    %133 = vector.multi_reduction <add>, %132, %cst_55 [1] : vector<16x32xf32> to vector<16xf32>
    %134 = vector.shape_cast %133 : vector<16xf32> to vector<16x1xf32>
    %cst_56 = arith.constant 3.200000e+01 : f32
    %135 = vector.broadcast %cst_56 : f32 to vector<16x1xf32>
    %136 = arith.divf %134, %135 : vector<16x1xf32>
    %137 = vector.broadcast %129 : vector<16x1xf32> to vector<16x32xf32>
    %138 = arith.subf %125, %137 : vector<16x32xf32>
    %cst_57 = arith.constant 9.99999974E-6 : f32
    %139 = vector.broadcast %cst_57 : f32 to vector<16x1xf32>
    %140 = arith.addf %136, %139 : vector<16x1xf32>
    %141 = math.rsqrt %140 : vector<16x1xf32>
    %142 = vector.broadcast %141 : vector<16x1xf32> to vector<16x32xf32>
    %143 = arith.mulf %138, %142 : vector<16x32xf32>
    %144 = vector.broadcast %12 : vector<1x32xf32> to vector<16x32xf32>
    %145 = arith.mulf %143, %144 : vector<16x32xf32>
    %146 = vector.broadcast %13 : vector<1x32xf32> to vector<16x32xf32>
    %147 = arith.addf %145, %146 : vector<16x32xf32>
    %cst_58 = arith.constant dense<0.000000e+00> : vector<16x96xf32>
    %148 = tpu.matmul %147, %2, %cst_58 {dimension_numbers = #tpu.dot_dimension_numbers<[1], [0], [0], [1], [0, 0, 1, 1], [], []>} : vector<16x32xf32>, vector<32x96xf32>, vector<16x96xf32> -> vector<16x96xf32>
    %149 = vector.broadcast %3 : vector<1x96xf32> to vector<16x96xf32>
    %150 = arith.addf %148, %149 : vector<16x96xf32>
    %151 = vector.extract_strided_slice %150 {offsets = [0, 0], sizes = [16, 32], strides = [1, 1]} : vector<16x96xf32> to vector<16x32xf32>
    %152 = arith.addf %151, %16 : vector<16x32xf32>
    %153 = vector.extract_strided_slice %150 {offsets = [0, 32], sizes = [16, 32], strides = [1, 1]} : vector<16x96xf32> to vector<16x32xf32>
    %154 = arith.addf %153, %17 : vector<16x32xf32>
    %155 = vector.extract_strided_slice %150 {offsets = [0, 64], sizes = [16, 32], strides = [1, 1]} : vector<16x96xf32> to vector<16x32xf32>
    %156 = vector.shape_cast %152 : vector<16x32xf32> to vector<2x8x32xf32>
    %157 = vector.shape_cast %154 : vector<16x32xf32> to vector<2x8x32xf32>
    %158 = vector.shape_cast %155 : vector<16x32xf32> to vector<2x8x32xf32>
    %159 = vector.extract_strided_slice %156 {offsets = [0, 0, 0], sizes = [2, 8, 8], strides = [1, 1, 1]} : vector<2x8x32xf32> to vector<2x8x8xf32>
    %160 = vector.extract_strided_slice %157 {offsets = [0, 0, 0], sizes = [2, 8, 8], strides = [1, 1, 1]} : vector<2x8x32xf32> to vector<2x8x8xf32>
    %161 = vector.extract_strided_slice %158 {offsets = [0, 0, 0], sizes = [2, 8, 8], strides = [1, 1, 1]} : vector<2x8x32xf32> to vector<2x8x8xf32>
    "tpu.trace_start"() <{level = 10 : i32, message = "bqd,bkd->bqk"}> : () -> ()
    %cst_59 = arith.constant dense<0.000000e+00> : vector<2x8x8xf32>
    %162 = tpu.matmul %159, %160, %cst_59 {dimension_numbers = #tpu.dot_dimension_numbers<[2], [2], [1], [1], [0, 0, 0, 1, 1, 1], [0], [0]>} : vector<2x8x8xf32>, vector<2x8x8xf32>, vector<2x8x8xf32> -> vector<2x8x8xf32>
    "tpu.trace_stop"() : () -> ()
    %cst_60 = arith.constant dense<0xFF800000> : vector<2x8xf32>
    %163 = vector.multi_reduction <maximumf>, %162, %cst_60 [2] : vector<2x8x8xf32> to vector<2x8xf32>
    %164 = vector.shape_cast %163 : vector<2x8xf32> to vector<2x8x1xf32>
    %165 = vector.broadcast %164 : vector<2x8x1xf32> to vector<2x8x8xf32>
    %166 = arith.subf %162, %165 : vector<2x8x8xf32>
    %167 = math.exp %166 : vector<2x8x8xf32>
    %cst_61 = arith.constant dense<0.000000e+00> : vector<2x8xf32>
    %168 = vector.multi_reduction <add>, %167, %cst_61 [2] : vector<2x8x8xf32> to vector<2x8xf32>
    %169 = vector.shape_cast %168 : vector<2x8xf32> to vector<2x8x1xf32>
    %170 = tpu.reciprocal %169 {approx = true} : vector<2x8x1xf32> -> vector<2x8x1xf32>
    %171 = vector.broadcast %170 : vector<2x8x1xf32> to vector<2x8x8xf32>
    %172 = arith.mulf %167, %171 : vector<2x8x8xf32>
    "tpu.trace_start"() <{level = 10 : i32, message = "bqk,bkd->bqd"}> : () -> ()
    %cst_62 = arith.constant dense<0.000000e+00> : vector<2x8x8xf32>
    %173 = tpu.matmul %172, %161, %cst_62 {dimension_numbers = #tpu.dot_dimension_numbers<[2], [1], [1], [2], [0, 0, 0, 1, 1, 2], [0], [0]>} : vector<2x8x8xf32>, vector<2x8x8xf32>, vector<2x8x8xf32> -> vector<2x8x8xf32>
    "tpu.trace_stop"() : () -> ()
    %174 = vector.extract_strided_slice %156 {offsets = [0, 0, 8], sizes = [2, 8, 8], strides = [1, 1, 1]} : vector<2x8x32xf32> to vector<2x8x8xf32>
    %175 = vector.extract_strided_slice %157 {offsets = [0, 0, 8], sizes = [2, 8, 8], strides = [1, 1, 1]} : vector<2x8x32xf32> to vector<2x8x8xf32>
    %176 = vector.extract_strided_slice %158 {offsets = [0, 0, 8], sizes = [2, 8, 8], strides = [1, 1, 1]} : vector<2x8x32xf32> to vector<2x8x8xf32>
    "tpu.trace_start"() <{level = 10 : i32, message = "bqd,bkd->bqk"}> : () -> ()
    %cst_63 = arith.constant dense<0.000000e+00> : vector<2x8x8xf32>
    %177 = tpu.matmul %174, %175, %cst_63 {dimension_numbers = #tpu.dot_dimension_numbers<[2], [2], [1], [1], [0, 0, 0, 1, 1, 1], [0], [0]>} : vector<2x8x8xf32>, vector<2x8x8xf32>, vector<2x8x8xf32> -> vector<2x8x8xf32>
    "tpu.trace_stop"() : () -> ()
    %cst_64 = arith.constant dense<0xFF800000> : vector<2x8xf32>
    %178 = vector.multi_reduction <maximumf>, %177, %cst_64 [2] : vector<2x8x8xf32> to vector<2x8xf32>
    %179 = vector.shape_cast %178 : vector<2x8xf32> to vector<2x8x1xf32>
    %180 = vector.broadcast %179 : vector<2x8x1xf32> to vector<2x8x8xf32>
    %181 = arith.subf %177, %180 : vector<2x8x8xf32>
    %182 = math.exp %181 : vector<2x8x8xf32>
    %cst_65 = arith.constant dense<0.000000e+00> : vector<2x8xf32>
    %183 = vector.multi_reduction <add>, %182, %cst_65 [2] : vector<2x8x8xf32> to vector<2x8xf32>
    %184 = vector.shape_cast %183 : vector<2x8xf32> to vector<2x8x1xf32>
    %185 = tpu.reciprocal %184 {approx = true} : vector<2x8x1xf32> -> vector<2x8x1xf32>
    %186 = vector.broadcast %185 : vector<2x8x1xf32> to vector<2x8x8xf32>
    %187 = arith.mulf %182, %186 : vector<2x8x8xf32>
    "tpu.trace_start"() <{level = 10 : i32, message = "bqk,bkd->bqd"}> : () -> ()
    %cst_66 = arith.constant dense<0.000000e+00> : vector<2x8x8xf32>
    %188 = tpu.matmul %187, %176, %cst_66 {dimension_numbers = #tpu.dot_dimension_numbers<[2], [1], [1], [2], [0, 0, 0, 1, 1, 2], [0], [0]>} : vector<2x8x8xf32>, vector<2x8x8xf32>, vector<2x8x8xf32> -> vector<2x8x8xf32>
    "tpu.trace_stop"() : () -> ()
    %189 = vector.extract_strided_slice %156 {offsets = [0, 0, 16], sizes = [2, 8, 8], strides = [1, 1, 1]} : vector<2x8x32xf32> to vector<2x8x8xf32>
    %190 = vector.extract_strided_slice %157 {offsets = [0, 0, 16], sizes = [2, 8, 8], strides = [1, 1, 1]} : vector<2x8x32xf32> to vector<2x8x8xf32>
    %191 = vector.extract_strided_slice %158 {offsets = [0, 0, 16], sizes = [2, 8, 8], strides = [1, 1, 1]} : vector<2x8x32xf32> to vector<2x8x8xf32>
    "tpu.trace_start"() <{level = 10 : i32, message = "bqd,bkd->bqk"}> : () -> ()
    %cst_67 = arith.constant dense<0.000000e+00> : vector<2x8x8xf32>
    %192 = tpu.matmul %189, %190, %cst_67 {dimension_numbers = #tpu.dot_dimension_numbers<[2], [2], [1], [1], [0, 0, 0, 1, 1, 1], [0], [0]>} : vector<2x8x8xf32>, vector<2x8x8xf32>, vector<2x8x8xf32> -> vector<2x8x8xf32>
    "tpu.trace_stop"() : () -> ()
    %cst_68 = arith.constant dense<0xFF800000> : vector<2x8xf32>
    %193 = vector.multi_reduction <maximumf>, %192, %cst_68 [2] : vector<2x8x8xf32> to vector<2x8xf32>
    %194 = vector.shape_cast %193 : vector<2x8xf32> to vector<2x8x1xf32>
    %195 = vector.broadcast %194 : vector<2x8x1xf32> to vector<2x8x8xf32>
    %196 = arith.subf %192, %195 : vector<2x8x8xf32>
    %197 = math.exp %196 : vector<2x8x8xf32>
    %cst_69 = arith.constant dense<0.000000e+00> : vector<2x8xf32>
    %198 = vector.multi_reduction <add>, %197, %cst_69 [2] : vector<2x8x8xf32> to vector<2x8xf32>
    %199 = vector.shape_cast %198 : vector<2x8xf32> to vector<2x8x1xf32>
    %200 = tpu.reciprocal %199 {approx = true} : vector<2x8x1xf32> -> vector<2x8x1xf32>
    %201 = vector.broadcast %200 : vector<2x8x1xf32> to vector<2x8x8xf32>
    %202 = arith.mulf %197, %201 : vector<2x8x8xf32>
    "tpu.trace_start"() <{level = 10 : i32, message = "bqk,bkd->bqd"}> : () -> ()
    %cst_70 = arith.constant dense<0.000000e+00> : vector<2x8x8xf32>
    %203 = tpu.matmul %202, %191, %cst_70 {dimension_numbers = #tpu.dot_dimension_numbers<[2], [1], [1], [2], [0, 0, 0, 1, 1, 2], [0], [0]>} : vector<2x8x8xf32>, vector<2x8x8xf32>, vector<2x8x8xf32> -> vector<2x8x8xf32>
    "tpu.trace_stop"() : () -> ()
    %204 = vector.extract_strided_slice %156 {offsets = [0, 0, 24], sizes = [2, 8, 8], strides = [1, 1, 1]} : vector<2x8x32xf32> to vector<2x8x8xf32>
    %205 = vector.extract_strided_slice %157 {offsets = [0, 0, 24], sizes = [2, 8, 8], strides = [1, 1, 1]} : vector<2x8x32xf32> to vector<2x8x8xf32>
    %206 = vector.extract_strided_slice %158 {offsets = [0, 0, 24], sizes = [2, 8, 8], strides = [1, 1, 1]} : vector<2x8x32xf32> to vector<2x8x8xf32>
    "tpu.trace_start"() <{level = 10 : i32, message = "bqd,bkd->bqk"}> : () -> ()
    %cst_71 = arith.constant dense<0.000000e+00> : vector<2x8x8xf32>
    %207 = tpu.matmul %204, %205, %cst_71 {dimension_numbers = #tpu.dot_dimension_numbers<[2], [2], [1], [1], [0, 0, 0, 1, 1, 1], [0], [0]>} : vector<2x8x8xf32>, vector<2x8x8xf32>, vector<2x8x8xf32> -> vector<2x8x8xf32>
    "tpu.trace_stop"() : () -> ()
    %cst_72 = arith.constant dense<0xFF800000> : vector<2x8xf32>
    %208 = vector.multi_reduction <maximumf>, %207, %cst_72 [2] : vector<2x8x8xf32> to vector<2x8xf32>
    %209 = vector.shape_cast %208 : vector<2x8xf32> to vector<2x8x1xf32>
    %210 = vector.broadcast %209 : vector<2x8x1xf32> to vector<2x8x8xf32>
    %211 = arith.subf %207, %210 : vector<2x8x8xf32>
    %212 = math.exp %211 : vector<2x8x8xf32>
    %cst_73 = arith.constant dense<0.000000e+00> : vector<2x8xf32>
    %213 = vector.multi_reduction <add>, %212, %cst_73 [2] : vector<2x8x8xf32> to vector<2x8xf32>
    %214 = vector.shape_cast %213 : vector<2x8xf32> to vector<2x8x1xf32>
    %215 = tpu.reciprocal %214 {approx = true} : vector<2x8x1xf32> -> vector<2x8x1xf32>
    %216 = vector.broadcast %215 : vector<2x8x1xf32> to vector<2x8x8xf32>
    %217 = arith.mulf %212, %216 : vector<2x8x8xf32>
    "tpu.trace_start"() <{level = 10 : i32, message = "bqk,bkd->bqd"}> : () -> ()
    %cst_74 = arith.constant dense<0.000000e+00> : vector<2x8x8xf32>
    %218 = tpu.matmul %217, %206, %cst_74 {dimension_numbers = #tpu.dot_dimension_numbers<[2], [1], [1], [2], [0, 0, 0, 1, 1, 2], [0], [0]>} : vector<2x8x8xf32>, vector<2x8x8xf32>, vector<2x8x8xf32> -> vector<2x8x8xf32>
    "tpu.trace_stop"() : () -> ()
    %219 = tpu.concatenate %173, %188, %203, %218 in 2 : vector<2x8x8xf32>, vector<2x8x8xf32>, vector<2x8x8xf32>, vector<2x8x8xf32> -> vector<2x8x32xf32>
    %220 = vector.shape_cast %219 : vector<2x8x32xf32> to vector<16x32xf32>
    %cst_75 = arith.constant dense<0.000000e+00> : vector<16x32xf32>
    %221 = tpu.matmul %220, %4, %cst_75 {dimension_numbers = #tpu.dot_dimension_numbers<[1], [0], [0], [1], [0, 0, 1, 1], [], []>} : vector<16x32xf32>, vector<32x32xf32>, vector<16x32xf32> -> vector<16x32xf32>
    %222 = vector.broadcast %5 : vector<1x32xf32> to vector<16x32xf32>
    %223 = arith.addf %221, %222 : vector<16x32xf32>
    %224 = arith.addf %147, %223 : vector<16x32xf32>
    %cst_76 = arith.constant dense<0.000000e+00> : vector<16xf32>
    %225 = vector.multi_reduction <add>, %224, %cst_76 [1] : vector<16x32xf32> to vector<16xf32>
    %226 = vector.shape_cast %225 : vector<16xf32> to vector<16x1xf32>
    %cst_77 = arith.constant 3.200000e+01 : f32
    %227 = vector.broadcast %cst_77 : f32 to vector<16x1xf32>
    %228 = arith.divf %226, %227 : vector<16x1xf32>
    %229 = vector.broadcast %228 : vector<16x1xf32> to vector<16x32xf32>
    %230 = arith.subf %224, %229 : vector<16x32xf32>
    %231 = arith.mulf %230, %230 : vector<16x32xf32>
    %cst_78 = arith.constant dense<0.000000e+00> : vector<16xf32>
    %232 = vector.multi_reduction <add>, %231, %cst_78 [1] : vector<16x32xf32> to vector<16xf32>
    %233 = vector.shape_cast %232 : vector<16xf32> to vector<16x1xf32>
    %cst_79 = arith.constant 3.200000e+01 : f32
    %234 = vector.broadcast %cst_79 : f32 to vector<16x1xf32>
    %235 = arith.divf %233, %234 : vector<16x1xf32>
    %236 = vector.broadcast %228 : vector<16x1xf32> to vector<16x32xf32>
    %237 = arith.subf %224, %236 : vector<16x32xf32>
    %cst_80 = arith.constant 9.99999974E-6 : f32
    %238 = vector.broadcast %cst_80 : f32 to vector<16x1xf32>
    %239 = arith.addf %235, %238 : vector<16x1xf32>
    %240 = math.rsqrt %239 : vector<16x1xf32>
    %241 = vector.broadcast %240 : vector<16x1xf32> to vector<16x32xf32>
    %242 = arith.mulf %237, %241 : vector<16x32xf32>
    %243 = vector.broadcast %10 : vector<1x32xf32> to vector<16x32xf32>
    %244 = arith.mulf %242, %243 : vector<16x32xf32>
    %245 = vector.broadcast %11 : vector<1x32xf32> to vector<16x32xf32>
    %246 = arith.addf %244, %245 : vector<16x32xf32>
    %cst_81 = arith.constant dense<0.000000e+00> : vector<16x64xf32>
    %247 = tpu.matmul %246, %6, %cst_81 {dimension_numbers = #tpu.dot_dimension_numbers<[1], [0], [0], [1], [0, 0, 1, 1], [], []>} : vector<16x32xf32>, vector<32x64xf32>, vector<16x64xf32> -> vector<16x64xf32>
    %248 = vector.broadcast %7 : vector<1x64xf32> to vector<16x64xf32>
    %249 = arith.addf %247, %248 : vector<16x64xf32>
    %cst_82 = arith.constant 0.000000e+00 : f32
    %250 = vector.broadcast %cst_82 : f32 to vector<16x64xf32>
    %251 = arith.maximumf %249, %250 : vector<16x64xf32>
    %cst_83 = arith.constant dense<0.000000e+00> : vector<16x32xf32>
    %252 = tpu.matmul %251, %8, %cst_83 {dimension_numbers = #tpu.dot_dimension_numbers<[1], [0], [0], [1], [0, 0, 1, 1], [], []>} : vector<16x64xf32>, vector<64x32xf32>, vector<16x32xf32> -> vector<16x32xf32>
    %253 = vector.broadcast %9 : vector<1x32xf32> to vector<16x32xf32>
    %254 = arith.addf %252, %253 : vector<16x32xf32>
    %255 = arith.addf %246, %254 : vector<16x32xf32>
    %cst_84 = arith.constant dense<0.000000e+00> : vector<16xf32>
    %256 = vector.multi_reduction <add>, %255, %cst_84 [1] : vector<16x32xf32> to vector<16xf32>
    %257 = vector.shape_cast %256 : vector<16xf32> to vector<16x1xf32>
    %cst_85 = arith.constant 3.200000e+01 : f32
    %258 = vector.broadcast %cst_85 : f32 to vector<16x1xf32>
    %259 = arith.divf %257, %258 : vector<16x1xf32>
    %260 = vector.broadcast %259 : vector<16x1xf32> to vector<16x32xf32>
    %261 = arith.subf %255, %260 : vector<16x32xf32>
    %262 = arith.mulf %261, %261 : vector<16x32xf32>
    %cst_86 = arith.constant dense<0.000000e+00> : vector<16xf32>
    %263 = vector.multi_reduction <add>, %262, %cst_86 [1] : vector<16x32xf32> to vector<16xf32>
    %264 = vector.shape_cast %263 : vector<16xf32> to vector<16x1xf32>
    %cst_87 = arith.constant 3.200000e+01 : f32
    %265 = vector.broadcast %cst_87 : f32 to vector<16x1xf32>
    %266 = arith.divf %264, %265 : vector<16x1xf32>
    %267 = vector.broadcast %259 : vector<16x1xf32> to vector<16x32xf32>
    %268 = arith.subf %255, %267 : vector<16x32xf32>
    %cst_88 = arith.constant 9.99999974E-6 : f32
    %269 = vector.broadcast %cst_88 : f32 to vector<16x1xf32>
    %270 = arith.addf %266, %269 : vector<16x1xf32>
    %271 = math.rsqrt %270 : vector<16x1xf32>
    %272 = vector.broadcast %271 : vector<16x1xf32> to vector<16x32xf32>
    %273 = arith.mulf %268, %272 : vector<16x32xf32>
    %274 = vector.broadcast %12 : vector<1x32xf32> to vector<16x32xf32>
    %275 = arith.mulf %273, %274 : vector<16x32xf32>
    %276 = vector.broadcast %13 : vector<1x32xf32> to vector<16x32xf32>
    %277 = arith.addf %275, %276 : vector<16x32xf32>
    %c0_89 = arith.constant 0 : index
    %c0_90 = arith.constant 0 : index
    %278 = vector.load %arg14[%c0_89, %c0_90] : memref<16x32xf32, #tpu.memory_space<vmem>>, vector<16x32xf32>
    tpu.vector_store %arg14[%c0_89, %c0_90], %277 {strides = array<i32>} : memref<16x32xf32, #tpu.memory_space<vmem>>, vector<16x32xf32>,
    return
  }
}

</mosaic_0001>

<llo_original>
// kernel: tpu_custom_call.1
$region0: #{tpu_custom_call.1}
  #allocation0 [shape = 'u32[]', space=smem, size = 0x4, offset = 0x4, fixed_abs, tag = 'smem constant byte address 0x4 - core index']
  #allocation1 [shape = 'u32[144,128]{1,0:T(1,128)}', space=vmem, size = 0x12000, scoped, tag = 'internal scratch']
  %s0 = inlined_call_operand.hbm [shape: f32[16,32], index: 0, kind: input, shape index: {}]
  %s1 = inlined_call_operand.hbm [shape: f32[16,32], index: 1, kind: input, shape index: {}]
  %s2 = inlined_call_operand.vmem [shape: f32[32,96], index: 2, kind: input, shape index: {}]
  %s3 = inlined_call_operand.vmem [shape: f32[1,96], index: 3, kind: input, shape index: {}]
  %s4 = inlined_call_operand.vmem [shape: f32[32,32], index: 4, kind: input, shape index: {}]
  %s5 = inlined_call_operand.vmem [shape: f32[1,32], index: 5, kind: input, shape index: {}]
  %s6 = inlined_call_operand.vmem [shape: f32[32,64], index: 6, kind: input, shape index: {}]
  %s7 = inlined_call_operand.vmem [shape: f32[1,64], index: 7, kind: input, shape index: {}]
  %s8 = inlined_call_operand.vmem [shape: f32[64,32], index: 8, kind: input, shape index: {}]
  %s9 = inlined_call_operand.vmem [shape: f32[1,32], index: 9, kind: input, shape index: {}]
  %s10 = inlined_call_operand.vmem [shape: f32[1,32], index: 10, kind: input, shape index: {}]
  %s11 = inlined_call_operand.vmem [shape: f32[1,32], index: 11, kind: input, shape index: {}]
  %s12 = inlined_call_operand.vmem [shape: f32[1,32], index: 12, kind: input, shape index: {}]
  %s13 = inlined_call_operand.vmem [shape: f32[1,32], index: 13, kind: input, shape index: {}]
  %s14 = inlined_call_operand.hbm [shape: f32[16,32], index: 14, kind: output, shape index: {}]
  %s15 = sld [smem:[#allocation0]]
  $region74: #{tpu_custom_call.1} parent=0
    _
  %s17 = ssub.s32 1, %s15
  %s18 = scalar_select 0, %s17, %s15
  $region1: #{tpu_custom_call.1} parent=0
    #allocation2 [shape = 'u8[8192]{0}', space=vmem, size = 0x2000, scoped, tag = 'input window, operand 0, single buffered']
    #allocation3 [shape = 's32[1]{0}', space=sflag, size = 0x4, scoped, tag = 'scoped memory for tpu_custom_call.1']
    #allocation4 [shape = 's32[1]{0}', space=sflag, size = 0x4, scoped, tag = 'scoped memory for tpu_custom_call.1']
    #allocation5 [shape = 'u8[8192]{0}', space=vmem, size = 0x2000, scoped, tag = 'input window, operand 1, single buffered']
    #allocation6 [shape = 's32[1]{0}', space=sflag, size = 0x4, scoped, tag = 'scoped memory for tpu_custom_call.1']
    #allocation7 [shape = 'u8[8192]{0}', space=vmem, size = 0x2000, scoped, tag = 'output window, operand 0, single buffered']
    %19 = vsyncpa [#allocation3], 0
    %20 = vsyncpa [#allocation6], 0
    %21 = vsyncpa [#allocation4], 0
    // Predicated region
    $region2: #{tpu_custom_call.1} parent=1 // pred_check
      _
    $region3: #{tpu_custom_call.1} parent=1 // pred_check_branch
      %23 = sbr.rel (0) target = $region5
    $region4: #{tpu_custom_call.1} parent=1 // pred_region
      %s25 = ssub.s32 256, 256
      %26 = vsyncadd [#allocation3], %s25
      %s27 = sshll.u32 [#allocation2], 4
      %s28 = int_to_ptr.vmem [resolvable:$true] %s27
      %33 = dma.hbm_to_vmem [thread:$0]  %s0, 256, %s28, [#allocation3], 128, 128, 8
    $region5: #{tpu_custom_call.1} parent=1 // pred_fallthru
      _
    // Predicated region
    $region6: #{tpu_custom_call.1} parent=1 // pred_check
      _
    $region7: #{tpu_custom_call.1} parent=1 // pred_check_branch
      %35 = sbr.rel (0) target = $region9
    $region8: #{tpu_custom_call.1} parent=1 // pred_region
      %s37 = ssub.s32 256, 256
      %38 = vsyncadd [#allocation6], %s37
      %s39 = sshll.u32 [#allocation5], 4
      %s40 = int_to_ptr.vmem [resolvable:$true] %s39
      %45 = dma.hbm_to_vmem [thread:$0]  %s1, 256, %s40, [#allocation6], 128, 128, 8
    $region9: #{tpu_custom_call.1} parent=1 // pred_fallthru
      _
    // Predicated region
    $region10: #{tpu_custom_call.1} parent=1 // pred_check
      _
    $region11: #{tpu_custom_call.1} parent=1 // pred_check_branch
      %47 = sbr.rel (0) target = $region13
    $region12: #{tpu_custom_call.1} parent=1 // pred_region
      _
    $region13: #{tpu_custom_call.1} parent=1 // pred_fallthru
      _
    // Predicated region
    $region14: #{tpu_custom_call.1} parent=1 // pred_check
      _
    $region15: #{tpu_custom_call.1} parent=1 // pred_check_branch
      %49 = sbr.rel (0) target = $region17
    $region16: #{tpu_custom_call.1} parent=1 // pred_region
      _
    $region17: #{tpu_custom_call.1} parent=1 // pred_fallthru
      _
    // Predicated region
    $region18: #{tpu_custom_call.1} parent=1 // pred_check
      _
    $region19: #{tpu_custom_call.1} parent=1 // pred_check_branch
      %51 = sbr.rel (0) target = $region21
    $region20: #{tpu_custom_call.1} parent=1 // pred_region
      _
    $region21: #{tpu_custom_call.1} parent=1 // pred_fallthru
      _
    // Predicated region
    $region22: #{tpu_custom_call.1} parent=1 // pred_check
      _
    $region23: #{tpu_custom_call.1} parent=1 // pred_check_branch
      %53 = sbr.rel (0) target = $region25
    $region24: #{tpu_custom_call.1} parent=1 // pred_region
      _
    $region25: #{tpu_custom_call.1} parent=1 // pred_fallthru
      _
    // Predicated region
    $region26: #{tpu_custom_call.1} parent=1 // pred_check
      _
    $region27: #{tpu_custom_call.1} parent=1 // pred_check_branch
      %55 = sbr.rel (0) target = $region29
    $region28: #{tpu_custom_call.1} parent=1 // pred_region
      _
    $region29: #{tpu_custom_call.1} parent=1 // pred_fallthru
      _
    // Predicated region
    $region30: #{tpu_custom_call.1} parent=1 // pred_check
      _
    $region31: #{tpu_custom_call.1} parent=1 // pred_check_branch
      %57 = sbr.rel (0) target = $region33
    $region32: #{tpu_custom_call.1} parent=1 // pred_region
      _
    $region33: #{tpu_custom_call.1} parent=1 // pred_fallthru
      _
    // Predicated region
    $region34: #{tpu_custom_call.1} parent=1 // pred_check
      _
    $region35: #{tpu_custom_call.1} parent=1 // pred_check_branch
      %59 = sbr.rel (0) target = $region37
    $region36: #{tpu_custom_call.1} parent=1 // pred_region
      _
    $region37: #{tpu_custom_call.1} parent=1 // pred_fallthru
      _
    // Predicated region
    $region38: #{tpu_custom_call.1} parent=1 // pred_check
      _
    $region39: #{tpu_custom_call.1} parent=1 // pred_check_branch
      %61 = sbr.rel (0) target = $region41
    $region40: #{tpu_custom_call.1} parent=1 // pred_region
      _
    $region41: #{tpu_custom_call.1} parent=1 // pred_fallthru
      _
    // Predicated region
    $region42: #{tpu_custom_call.1} parent=1 // pred_check
      _
    $region43: #{tpu_custom_call.1} parent=1 // pred_check_branch
      %63 = sbr.rel (0) target = $region45
    $region44: #{tpu_custom_call.1} parent=1 // pred_region
      _
    $region45: #{tpu_custom_call.1} parent=1 // pred_fallthru
      _
    // Predicated region
    $region46: #{tpu_custom_call.1} parent=1 // pred_check
      _
    $region47: #{tpu_custom_call.1} parent=1 // pred_check_branch
      %65 = sbr.rel (0) target = $region49
    $region48: #{tpu_custom_call.1} parent=1 // pred_region
      _
    $region49: #{tpu_custom_call.1} parent=1 // pred_fallthru
      _
    // Predicated region
    $region50: #{tpu_custom_call.1} parent=1 // pred_check
      _
    $region51: #{tpu_custom_call.1} parent=1 // pred_check_branch
      %67 = sbr.rel (0) target = $region53
    $region52: #{tpu_custom_call.1} parent=1 // pred_region
      _
    $region53: #{tpu_custom_call.1} parent=1 // pred_fallthru
      _
    // Predicated region
    $region54: #{tpu_custom_call.1} parent=1 // pred_check
      _
    $region55: #{tpu_custom_call.1} parent=1 // pred_check_branch
      %69 = sbr.rel (0) target = $region57
    $region56: #{tpu_custom_call.1} parent=1 // pred_region
      _
    $region57: #{tpu_custom_call.1} parent=1 // pred_fallthru
      _
    // Predicated region
    $region58: #{tpu_custom_call.1} parent=1 // pred_check
      _
    $region59: #{tpu_custom_call.1} parent=1 // pred_check_branch
      %71 = sbr.rel (0) target = $region61
    $region60: #{tpu_custom_call.1} parent=1 // pred_region
      %72 = dma.done [#allocation3], 256
    $region61: #{tpu_custom_call.1} parent=1 // pred_fallthru
      _
    // Predicated region
    $region62: #{tpu_custom_call.1} parent=1 // pred_check
      _
    $region63: #{tpu_custom_call.1} parent=1 // pred_check_branch
      %74 = sbr.rel (0) target = $region65
    $region64: #{tpu_custom_call.1} parent=1 // pred_region
      %75 = dma.done [#allocation6], 256
    $region65: #{tpu_custom_call.1} parent=1 // pred_fallthru
      _
    %v76 = vld [vmem:[#allocation2] sm:$0xff]
    %v77 = vld [vmem:[#allocation2 + $0x8] sm:$0xff]
    %v78 = vld [vmem:[#allocation5] sm:$0xff]
    %v79 = vld [vmem:[#allocation5 + $0x8] sm:$0xff]
    %v80 = vld [vmem:[%s2] sm:$0xff]
    %v81 = vld [vmem:[%s2 + $0x8] sm:$0xff]
    %v82 = vld [vmem:[%s2 + $0x10] sm:$0xff]
    %v83 = vld [vmem:[%s2 + $0x18] sm:$0xff]
    %v84 = vld [vmem:[%s3] sm:$0x1]
    %v85 = vld [vmem:[%s4] sm:$0xff]
    %v86 = vld [vmem:[%s4 + $0x8] sm:$0xff]
    %v87 = vld [vmem:[%s4 + $0x10] sm:$0xff]
    %v88 = vld [vmem:[%s4 + $0x18] sm:$0xff]
    %v89 = vld [vmem:[%s5] sm:$0x1]
    %v90 = vld [vmem:[%s6] sm:$0xff]
    %v91 = vld [vmem:[%s6 + $0x8] sm:$0xff]
    %v92 = vld [vmem:[%s6 + $0x10] sm:$0xff]
    %v93 = vld [vmem:[%s6 + $0x18] sm:$0xff]
    %v94 = vld [vmem:[%s7] sm:$0x1]
    %v95 = vld [vmem:[%s8] sm:$0xff]
    %v96 = vld [vmem:[%s8 + $0x8] sm:$0xff]
    %v97 = vld [vmem:[%s8 + $0x10] sm:$0xff]
    %v98 = vld [vmem:[%s8 + $0x18] sm:$0xff]
    %v99 = vld [vmem:[%s8 + $0x20] sm:$0xff]
    %v100 = vld [vmem:[%s8 + $0x28] sm:$0xff]
    %v101 = vld [vmem:[%s8 + $0x30] sm:$0xff]
    %v102 = vld [vmem:[%s8 + $0x38] sm:$0xff]
    %v103 = vld [vmem:[%s9] sm:$0x1]
    %v104 = vld [vmem:[%s10] sm:$0x1]
    %v105 = vld [vmem:[%s11] sm:$0x1]
    %v106 = vld [vmem:[%s12] sm:$0x1]
    %v107 = vld [vmem:[%s13] sm:$0x1]
    %vm108 = vcmask 261120
    %v110 = vsel %vm108, %v78, 0
    %v113 = vsel %vm108, %v79, 0
    %115 = vmatprep.subr.mxu0 0.0
    %116 = vmatpush1.msra.mxu0 %v80
    %117 = vmatprep.subr.mxu0 0.0
    %118 = vmatpush1.msra.mxu0 %v81
    %119 = vmatprep.subr.mxu0 0.0
    %120 = vmatpush1.msra.mxu0 %v82
    %121 = vmatprep.subr.mxu0 0.0
    %122 = vmatpush1.msra.mxu0 %v83
    %123 = vmatprep.subr.mxu0 0.0
    %124 = vmatpush1.msra.mxu0 0.0
    %125 = vmatprep.subr.mxu0 0.0
    %126 = vmatpush1.msra.mxu0 0.0
    %127 = vmatprep.subr.mxu0 0.0
    %128 = vmatpush1.msra.mxu0 0.0
    %129 = vmatprep.subr.mxu0 0.0
    %130 = vmatpush1.msra.mxu0 0.0
    %131 = vmatprep.subr.mxu0 0.0
    %132 = vmatpush1.msra.mxu0 0.0
    %133 = vmatprep.subr.mxu0 0.0
    %134 = vmatpush1.msra.mxu0 0.0
    %135 = vmatprep.subr.mxu0 0.0
    %136 = vmatpush1.msra.mxu0 0.0
    %137 = vmatprep.subr.mxu0 0.0
    %138 = vmatpush1.msra.mxu0 0.0
    %139 = vmatprep.subr.mxu0 0.0
    %140 = vmatpush1.msra.mxu0 0.0
    %141 = vmatprep.subr.mxu0 0.0
    %142 = vmatpush1.msra.mxu0 0.0
    %143 = vmatprep.subr.mxu0 0.0
    %144 = vmatpush1.msra.mxu0 0.0
    %145 = vmatprep.subr.mxu0 0.0
    %146 = vmatpush1.msra.mxu0 0.0
    %147 = vmatprep.subr.mxu0 0.0
    %148 = vmatpush1.msra.mxu0 0.0
    %149 = vmatprep.subr.mxu0 0.0
    %150 = vmatpush1.msra.mxu0 0.0
    %151 = vmatprep.subr.mxu0 0.0
    %152 = vmatpush1.msra.mxu0 0.0
    %153 = vmatprep.subr.mxu0 0.0
    %154 = vmatpush1.msra.mxu0 0.0
    %155 = vmatprep.subr.mxu0 0.0
    %156 = vmatpush1.msra.mxu0 0.0
    %157 = vmatprep.subr.mxu0 0.0
    %158 = vmatpush1.msra.mxu0 0.0
    %159 = vmatprep.subr.mxu0 0.0
    %160 = vmatpush1.msra.mxu0 0.0
    %161 = vmatprep.subr.mxu0 0.0
    %162 = vmatpush1.msra.mxu0 0.0
    %163 = vmatprep.subr.mxu0 0.0
    %164 = vmatpush1.msra.mxu0 0.0
    %165 = vmatprep.subr.mxu0 0.0
    %166 = vmatpush1.msra.mxu0 0.0
    %167 = vmatprep.subr.mxu0 0.0
    %168 = vmatpush1.msra.mxu0 0.0
    %169 = vmatprep.subr.mxu0 0.0
    %170 = vmatpush1.msra.mxu0 0.0
    %171 = vmatprep.subr.mxu0 0.0
    %172 = vmatpush1.msra.mxu0 0.0
    %173 = vmatprep.subr.mxu0 0.0
    %174 = vmatpush1.msra.mxu0 0.0
    %175 = vmatprep.subr.mxu0 0.0
    %176 = vmatpush1.msra.mxu0 0.0
    %177 = vmatprep.subr.mxu0 0.0
    %178 = vmatpush1.msra.mxu0 0.0
    %179 = vmatprep.mubr.f32.mxu0 0.0
    %180 = vmatmul.mubr.f32.gmra.mrb[0].mxu0 %v110
    %v181 = vpop.f32.mrb[0].mxu0
    %v182 = vadd.f32 0.0, %v181
    %v183 = vpop.f32.mrb[0].mxu0
    %184 = vmatprep.mubr.f32.mxu0 0.0
    %185 = vmatmul.mubr.f32.gmra.mrb[0].mxu0 %v113
    %v186 = vpop.f32.mrb[0].mxu0
    %v187 = vadd.f32 0.0, %v186
    %v188 = vpop.f32.mrb[0].mxu0
    %189 = vdwg.mxu0
    %v191 = vlaneseq
    %v192 = vshrl.u32 %v191, 7
    %v193 = vsub.s32 0, %v192
    %v194 = vrot.slane %v84, %v193
    %v197 = vsel %vm108, %v76, 0
    %v200 = vsel %vm108, %v77, 0
    %202 = vmatprep.subr.mxu0 0.0
    %203 = vmatpush1.msra.mxu0 %v80
    %204 = vmatprep.subr.mxu0 0.0
    %205 = vmatpush1.msra.mxu0 %v81
    %206 = vmatprep.subr.mxu0 0.0
    %207 = vmatpush1.msra.mxu0 %v82
    %208 = vmatprep.subr.mxu0 0.0
    %209 = vmatpush1.msra.mxu0 %v83
    %210 = vmatprep.subr.mxu0 0.0
    %211 = vmatpush1.msra.mxu0 0.0
    %212 = vmatprep.subr.mxu0 0.0
    %213 = vmatpush1.msra.mxu0 0.0
    %214 = vmatprep.subr.mxu0 0.0
    %215 = vmatpush1.msra.mxu0 0.0
    %216 = vmatprep.subr.mxu0 0.0
    %217 = vmatpush1.msra.mxu0 0.0
    %218 = vmatprep.subr.mxu0 0.0
    %219 = vmatpush1.msra.mxu0 0.0
    %220 = vmatprep.subr.mxu0 0.0
    %221 = vmatpush1.msra.mxu0 0.0
    %222 = vmatprep.subr.mxu0 0.0
    %223 = vmatpush1.msra.mxu0 0.0
    %224 = vmatprep.subr.mxu0 0.0
    %225 = vmatpush1.msra.mxu0 0.0
    %226 = vmatprep.subr.mxu0 0.0
    %227 = vmatpush1.msra.mxu0 0.0
    %228 = vmatprep.subr.mxu0 0.0
    %229 = vmatpush1.msra.mxu0 0.0
    %230 = vmatprep.subr.mxu0 0.0
    %231 = vmatpush1.msra.mxu0 0.0
    %232 = vmatprep.subr.mxu0 0.0
    %233 = vmatpush1.msra.mxu0 0.0
    %234 = vmatprep.subr.mxu0 0.0
    %235 = vmatpush1.msra.mxu0 0.0
    %236 = vmatprep.subr.mxu0 0.0
    %237 = vmatpush1.msra.mxu0 0.0
    %238 = vmatprep.subr.mxu0 0.0
    %239 = vmatpush1.msra.mxu0 0.0
    %240 = vmatprep.subr.mxu0 0.0
    %241 = vmatpush1.msra.mxu0 0.0
    %242 = vmatprep.subr.mxu0 0.0
    %243 = vmatpush1.msra.mxu0 0.0
    %244 = vmatprep.subr.mxu0 0.0
    %245 = vmatpush1.msra.mxu0 0.0
    %246 = vmatprep.subr.mxu0 0.0
    %247 = vmatpush1.msra.mxu0 0.0
    %248 = vmatprep.subr.mxu0 0.0
    %249 = vmatpush1.msra.mxu0 0.0
    %250 = vmatprep.subr.mxu0 0.0
    %251 = vmatpush1.msra.mxu0 0.0
    %252 = vmatprep.subr.mxu0 0.0
    %253 = vmatpush1.msra.mxu0 0.0
    %254 = vmatprep.subr.mxu0 0.0
    %255 = vmatpush1.msra.mxu0 0.0
    %256 = vmatprep.subr.mxu0 0.0
    %257 = vmatpush1.msra.mxu0 0.0
    %258 = vmatprep.subr.mxu0 0.0
    %259 = vmatpush1.msra.mxu0 0.0
    %260 = vmatprep.subr.mxu0 0.0
    %261 = vmatpush1.msra.mxu0 0.0
    %262 = vmatprep.subr.mxu0 0.0
    %263 = vmatpush1.msra.mxu0 0.0
    %264 = vmatprep.subr.mxu0 0.0
    %265 = vmatpush1.msra.mxu0 0.0
    %266 = vmatprep.mubr.f32.mxu0 0.0
    %267 = vmatmul.mubr.f32.gmra.mrb[0].mxu0 %v197
    %v268 = vpop.f32.mrb[0].mxu0
    %v269 = vadd.f32 %v194, %v268
    %v270 = vpop.f32.mrb[0].mxu0
    %271 = vmatprep.mubr.f32.mxu0 0.0
    %272 = vmatmul.mubr.f32.gmra.mrb[0].mxu0 %v200
    %v273 = vpop.f32.mrb[0].mxu0
    %v274 = vadd.f32 %v194, %v273
    %v275 = vpop.f32.mrb[0].mxu0
    %276 = vdwg.mxu0
    %v277 = vadd.f32 %v269, %v182
    %v278 = vadd.f32 %v274, %v187
    %280 = vrot.lane.b32.xlu0 %v277, 96
    %v281 = vpop.permute.xlu0 %280
    %vm282 = vcmask 64512
    %v283 = vsel %vm282, %v277, 0
    %v285 = vsel %vm282, %v281, 0
    %287 = vmatprep.subr.mxu0 0.0
    %288 = vmatpush1.xpose.msra.mxu0 %v285
    %289 = vmatprep.subr.mxu0 0.0
    %290 = vmatpush1.xpose.msra.mxu0 0.0
    %291 = vmatprep.subr.mxu0 0.0
    %292 = vmatpush1.xpose.msra.mxu0 0.0
    %293 = vmatprep.subr.mxu0 0.0
    %294 = vmatpush1.xpose.msra.mxu0 0.0
    %295 = vmatprep.subr.mxu0 0.0
    %296 = vmatpush1.xpose.msra.mxu0 0.0
    %297 = vmatprep.subr.mxu0 0.0
    %298 = vmatpush1.xpose.msra.mxu0 0.0
    %299 = vmatprep.subr.mxu0 0.0
    %300 = vmatpush1.xpose.msra.mxu0 0.0
    %301 = vmatprep.subr.mxu0 0.0
    %302 = vmatpush1.xpose.msra.mxu0 0.0
    %303 = vmatprep.subr.mxu0 0.0
    %304 = vmatpush1.xpose.msra.mxu0 0.0
    %305 = vmatprep.subr.mxu0 0.0
    %306 = vmatpush1.xpose.msra.mxu0 0.0
    %307 = vmatprep.subr.mxu0 0.0
    %308 = vmatpush1.xpose.msra.mxu0 0.0
    %309 = vmatprep.subr.mxu0 0.0
    %310 = vmatpush1.xpose.msra.mxu0 0.0
    %311 = vmatprep.subr.mxu0 0.0
    %312 = vmatpush1.xpose.msra.mxu0 0.0
    %313 = vmatprep.subr.mxu0 0.0
    %314 = vmatpush1.xpose.msra.mxu0 0.0
    %315 = vmatprep.subr.mxu0 0.0
    %316 = vmatpush1.xpose.msra.mxu0 0.0
    %317 = vmatprep.subr.mxu0 0.0
    %318 = vmatpush1.xpose.msra.mxu0 0.0
    %319 = vmatprep.subr.mxu0 0.0
    %320 = vmatpush1.xpose.msra.mxu0 0.0
    %321 = vmatprep.subr.mxu0 0.0
    %322 = vmatpush1.xpose.msra.mxu0 0.0
    %323 = vmatprep.subr.mxu0 0.0
    %324 = vmatpush1.xpose.msra.mxu0 0.0
    %325 = vmatprep.subr.mxu0 0.0
    %326 = vmatpush1.xpose.msra.mxu0 0.0
    %327 = vmatprep.subr.mxu0 0.0
    %328 = vmatpush1.xpose.msra.mxu0 0.0
    %329 = vmatprep.subr.mxu0 0.0
    %330 = vmatpush1.xpose.msra.mxu0 0.0
    %331 = vmatprep.subr.mxu0 0.0
    %332 = vmatpush1.xpose.msra.mxu0 0.0
    %333 = vmatprep.subr.mxu0 0.0
    %334 = vmatpush1.xpose.msra.mxu0 0.0
    %335 = vmatprep.subr.mxu0 0.0
    %336 = vmatpush1.xpose.msra.mxu0 0.0
    %337 = vmatprep.subr.mxu0 0.0
    %338 = vmatpush1.xpose.msra.mxu0 0.0
    %339 = vmatprep.subr.mxu0 0.0
    %340 = vmatpush1.xpose.msra.mxu0 0.0
    %341 = vmatprep.subr.mxu0 0.0
    %342 = vmatpush1.xpose.msra.mxu0 0.0
    %343 = vmatprep.subr.mxu0 0.0
    %344 = vmatpush1.xpose.msra.mxu0 0.0
    %345 = vmatprep.subr.mxu0 0.0
    %346 = vmatpush1.xpose.msra.mxu0 0.0
    %347 = vmatprep.subr.mxu0 0.0
    %348 = vmatpush1.xpose.msra.mxu0 0.0
    %349 = vmatprep.subr.mxu0 0.0
    %350 = vmatpush1.xpose.msra.mxu0 0.0
    %351 = vmatprep.mubr.f32.mxu0 0.0
    %352 = vmatmul.mubr.f32.gmra.mrb[0].mxu0 %v283
    %v353 = vpop.f32.mrb[0].mxu0
    %v354 = vadd.f32 0.0, %v353
    %v355 = vpop.f32.mrb[0].mxu0
    %356 = vdwg.mxu0
    %358 = vrot.lane.b32.xlu0 %v278, 96
    %v359 = vpop.permute.xlu0 %358
    %v360 = vsel %vm282, %v278, 0
    %v362 = vsel %vm282, %v359, 0
    %364 = vmatprep.subr.mxu0 0.0
    %365 = vmatpush1.xpose.msra.mxu0 %v362
    %366 = vmatprep.subr.mxu0 0.0
    %367 = vmatpush1.xpose.msra.mxu0 0.0
    %368 = vmatprep.subr.mxu0 0.0
    %369 = vmatpush1.xpose.msra.mxu0 0.0
    %370 = vmatprep.subr.mxu0 0.0
    %371 = vmatpush1.xpose.msra.mxu0 0.0
    %372 = vmatprep.subr.mxu0 0.0
    %373 = vmatpush1.xpose.msra.mxu0 0.0
    %374 = vmatprep.subr.mxu0 0.0
    %375 = vmatpush1.xpose.msra.mxu0 0.0
    %376 = vmatprep.subr.mxu0 0.0
    %377 = vmatpush1.xpose.msra.mxu0 0.0
    %378 = vmatprep.subr.mxu0 0.0
    %379 = vmatpush1.xpose.msra.mxu0 0.0
    %380 = vmatprep.subr.mxu0 0.0
    %381 = vmatpush1.xpose.msra.mxu0 0.0
    %382 = vmatprep.subr.mxu0 0.0
    %383 = vmatpush1.xpose.msra.mxu0 0.0
    %384 = vmatprep.subr.mxu0 0.0
    %385 = vmatpush1.xpose.msra.mxu0 0.0
    %386 = vmatprep.subr.mxu0 0.0
    %387 = vmatpush1.xpose.msra.mxu0 0.0
    %388 = vmatprep.subr.mxu0 0.0
    %389 = vmatpush1.xpose.msra.mxu0 0.0
    %390 = vmatprep.subr.mxu0 0.0
    %391 = vmatpush1.xpose.msra.mxu0 0.0
    %392 = vmatprep.subr.mxu0 0.0
    %393 = vmatpush1.xpose.msra.mxu0 0.0
    %394 = vmatprep.subr.mxu0 0.0
    %395 = vmatpush1.xpose.msra.mxu0 0.0
    %396 = vmatprep.subr.mxu0 0.0
    %397 = vmatpush1.xpose.msra.mxu0 0.0
    %398 = vmatprep.subr.mxu0 0.0
    %399 = vmatpush1.xpose.msra.mxu0 0.0
    %400 = vmatprep.subr.mxu0 0.0
    %401 = vmatpush1.xpose.msra.mxu0 0.0
    %402 = vmatprep.subr.mxu0 0.0
    %403 = vmatpush1.xpose.msra.mxu0 0.0
    %404 = vmatprep.subr.mxu0 0.0
    %405 = vmatpush1.xpose.msra.mxu0 0.0
    %406 = vmatprep.subr.mxu0 0.0
    %407 = vmatpush1.xpose.msra.mxu0 0.0
    %408 = vmatprep.subr.mxu0 0.0
    %409 = vmatpush1.xpose.msra.mxu0 0.0
    %410 = vmatprep.subr.mxu0 0.0
    %411 = vmatpush1.xpose.msra.mxu0 0.0
    %412 = vmatprep.subr.mxu0 0.0
    %413 = vmatpush1.xpose.msra.mxu0 0.0
    %414 = vmatprep.subr.mxu0 0.0
    %415 = vmatpush1.xpose.msra.mxu0 0.0
    %416 = vmatprep.subr.mxu0 0.0
    %417 = vmatpush1.xpose.msra.mxu0 0.0
    %418 = vmatprep.subr.mxu0 0.0
    %419 = vmatpush1.xpose.msra.mxu0 0.0
    %420 = vmatprep.subr.mxu0 0.0
    %421 = vmatpush1.xpose.msra.mxu0 0.0
    %422 = vmatprep.subr.mxu0 0.0
    %423 = vmatpush1.xpose.msra.mxu0 0.0
    %424 = vmatprep.subr.mxu0 0.0
    %425 = vmatpush1.xpose.msra.mxu0 0.0
    %426 = vmatprep.subr.mxu0 0.0
    %427 = vmatpush1.xpose.msra.mxu0 0.0
    %428 = vmatprep.mubr.f32.mxu0 0.0
    %429 = vmatmul.mubr.f32.gmra.mrb[0].mxu0 %v360
    %v430 = vpop.f32.mrb[0].mxu0
    %v431 = vadd.f32 0.0, %v430
    %v432 = vpop.f32.mrb[0].mxu0
    %433 = vdwg.mxu0
    %v434 = vsel %vm282, %v354, -inf
    %435 = vmax.xlane.f32.xlu0 %v434
    %v436 = vpop.xlane.xlu0 %435
    %v437 = vsel %vm282, %v431, -inf
    %438 = vmax.xlane.f32.xlu0 %v437
    %v439 = vpop.xlane.xlu0 %438
    %v440 = vsub.f32 %v354, %v436
    %v441 = vsub.f32 %v431, %v439
    %v442 = vmul.f32 %v440, 1.442695
    %v443 = vpow.pop %v442
    %v444 = vmul.f32 %v441, 1.442695
    %v445 = vpow.pop %v444
    %v446 = vsel %vm282, %v443, 0.0
    %447 = vadd.xlane.f32.xlu0 %v446
    %v448 = vpop.xlane.xlu0 %447
    %v449 = vsel %vm282, %v445, 0.0
    %450 = vadd.xlane.f32.xlu0 %v449
    %v451 = vpop.xlane.xlu0 %450
    %v452 = vrcp.pop %v448
    %v453 = vrcp.pop %v451
    %v454 = vmul.f32 %v443, %v452
    %v455 = vmul.f32 %v445, %v453
    %457 = vrot.lane.b32.xlu0 %v269, 64
    %v458 = vpop.permute.xlu0 %457
    %v461 = vsel %vm282, %v454, 0
    %463 = vmatprep.subr.mxu0 0.0
    %464 = vmatpush1.msra.mxu0 %v458
    %465 = vmatprep.subr.mxu0 0.0
    %466 = vmatpush1.msra.mxu0 0.0
    %467 = vmatprep.subr.mxu0 0.0
    %468 = vmatpush1.msra.mxu0 0.0
    %469 = vmatprep.subr.mxu0 0.0
    %470 = vmatpush1.msra.mxu0 0.0
    %471 = vmatprep.subr.mxu0 0.0
    %472 = vmatpush1.msra.mxu0 0.0
    %473 = vmatprep.subr.mxu0 0.0
    %474 = vmatpush1.msra.mxu0 0.0
    %475 = vmatprep.subr.mxu0 0.0
    %476 = vmatpush1.msra.mxu0 0.0
    %477 = vmatprep.subr.mxu0 0.0
    %478 = vmatpush1.msra.mxu0 0.0
    %479 = vmatprep.subr.mxu0 0.0
    %480 = vmatpush1.msra.mxu0 0.0
    %481 = vmatprep.subr.mxu0 0.0
    %482 = vmatpush1.msra.mxu0 0.0
    %483 = vmatprep.subr.mxu0 0.0
    %484 = vmatpush1.msra.mxu0 0.0
    %485 = vmatprep.subr.mxu0 0.0
    %486 = vmatpush1.msra.mxu0 0.0
    %487 = vmatprep.subr.mxu0 0.0
    %488 = vmatpush1.msra.mxu0 0.0
    %489 = vmatprep.subr.mxu0 0.0
    %490 = vmatpush1.msra.mxu0 0.0
    %491 = vmatprep.subr.mxu0 0.0
    %492 = vmatpush1.msra.mxu0 0.0
    %493 = vmatprep.subr.mxu0 0.0
    %494 = vmatpush1.msra.mxu0 0.0
    %495 = vmatprep.subr.mxu0 0.0
    %496 = vmatpush1.msra.mxu0 0.0
    %497 = vmatprep.subr.mxu0 0.0
    %498 = vmatpush1.msra.mxu0 0.0
    %499 = vmatprep.subr.mxu0 0.0
    %500 = vmatpush1.msra.mxu0 0.0
    %501 = vmatprep.subr.mxu0 0.0
    %502 = vmatpush1.msra.mxu0 0.0
    %503 = vmatprep.subr.mxu0 0.0
    %504 = vmatpush1.msra.mxu0 0.0
    %505 = vmatprep.subr.mxu0 0.0
    %506 = vmatpush1.msra.mxu0 0.0
    %507 = vmatprep.subr.mxu0 0.0
    %508 = vmatpush1.msra.mxu0 0.0
    %509 = vmatprep.subr.mxu0 0.0
    %510 = vmatpush1.msra.mxu0 0.0
    %511 = vmatprep.subr.mxu0 0.0
    %512 = vmatpush1.msra.mxu0 0.0
    %513 = vmatprep.subr.mxu0 0.0
    %514 = vmatpush1.msra.mxu0 0.0
    %515 = vmatprep.subr.mxu0 0.0
    %516 = vmatpush1.msra.mxu0 0.0
    %517 = vmatprep.subr.mxu0 0.0
    %518 = vmatpush1.msra.mxu0 0.0
    %519 = vmatprep.subr.mxu0 0.0
    %520 = vmatpush1.msra.mxu0 0.0
    %521 = vmatprep.subr.mxu0 0.0
    %522 = vmatpush1.msra.mxu0 0.0
    %523 = vmatprep.subr.mxu0 0.0
    %524 = vmatpush1.msra.mxu0 0.0
    %525 = vmatprep.subr.mxu0 0.0
    %526 = vmatpush1.msra.mxu0 0.0
    %527 = vmatprep.mubr.f32.mxu0 0.0
    %528 = vmatmul.mubr.f32.gmra.mrb[0].mxu0 %v461
    %v529 = vpop.f32.mrb[0].mxu0
    %v530 = vadd.f32 0.0, %v529
    %v531 = vpop.f32.mrb[0].mxu0
    %532 = vdwg.mxu0
    %534 = vrot.lane.b32.xlu0 %v274, 64
    %v535 = vpop.permute.xlu0 %534
    %v538 = vsel %vm282, %v455, 0
    %540 = vmatprep.subr.mxu0 0.0
    %541 = vmatpush1.msra.mxu0 %v535
    %542 = vmatprep.subr.mxu0 0.0
    %543 = vmatpush1.msra.mxu0 0.0
    %544 = vmatprep.subr.mxu0 0.0
    %545 = vmatpush1.msra.mxu0 0.0
    %546 = vmatprep.subr.mxu0 0.0
    %547 = vmatpush1.msra.mxu0 0.0
    %548 = vmatprep.subr.mxu0 0.0
    %549 = vmatpush1.msra.mxu0 0.0
    %550 = vmatprep.subr.mxu0 0.0
    %551 = vmatpush1.msra.mxu0 0.0
    %552 = vmatprep.subr.mxu0 0.0
    %553 = vmatpush1.msra.mxu0 0.0
    %554 = vmatprep.subr.mxu0 0.0
    %555 = vmatpush1.msra.mxu0 0.0
    %556 = vmatprep.subr.mxu0 0.0
    %557 = vmatpush1.msra.mxu0 0.0
    %558 = vmatprep.subr.mxu0 0.0
    %559 = vmatpush1.msra.mxu0 0.0
    %560 = vmatprep.subr.mxu0 0.0
    %561 = vmatpush1.msra.mxu0 0.0
    %562 = vmatprep.subr.mxu0 0.0
    %563 = vmatpush1.msra.mxu0 0.0
    %564 = vmatprep.subr.mxu0 0.0
    %565 = vmatpush1.msra.mxu0 0.0
    %566 = vmatprep.subr.mxu0 0.0
    %567 = vmatpush1.msra.mxu0 0.0
    %568 = vmatprep.subr.mxu0 0.0
    %569 = vmatpush1.msra.mxu0 0.0
    %570 = vmatprep.subr.mxu0 0.0
    %571 = vmatpush1.msra.mxu0 0.0
    %572 = vmatprep.subr.mxu0 0.0
    %573 = vmatpush1.msra.mxu0 0.0
    %574 = vmatprep.subr.mxu0 0.0
    %575 = vmatpush1.msra.mxu0 0.0
    %576 = vmatprep.subr.mxu0 0.0
    %577 = vmatpush1.msra.mxu0 0.0
    %578 = vmatprep.subr.mxu0 0.0
    %579 = vmatpush1.msra.mxu0 0.0
    %580 = vmatprep.subr.mxu0 0.0
    %581 = vmatpush1.msra.mxu0 0.0
    %582 = vmatprep.subr.mxu0 0.0
    %583 = vmatpush1.msra.mxu0 0.0
    %584 = vmatprep.subr.mxu0 0.0
    %585 = vmatpush1.msra.mxu0 0.0
    %586 = vmatprep.subr.mxu0 0.0
    %587 = vmatpush1.msra.mxu0 0.0
    %588 = vmatprep.subr.mxu0 0.0
    %589 = vmatpush1.msra.mxu0 0.0
    %590 = vmatprep.subr.mxu0 0.0
    %591 = vmatpush1.msra.mxu0 0.0
    %592 = vmatprep.subr.mxu0 0.0
    %593 = vmatpush1.msra.mxu0 0.0
    %594 = vmatprep.subr.mxu0 0.0
    %595 = vmatpush1.msra.mxu0 0.0
    %596 = vmatprep.subr.mxu0 0.0
    %597 = vmatpush1.msra.mxu0 0.0
    %598 = vmatprep.subr.mxu0 0.0
    %599 = vmatpush1.msra.mxu0 0.0
    %600 = vmatprep.subr.mxu0 0.0
    %601 = vmatpush1.msra.mxu0 0.0
    %602 = vmatprep.subr.mxu0 0.0
    %603 = vmatpush1.msra.mxu0 0.0
    %604 = vmatprep.mubr.f32.mxu0 0.0
    %605 = vmatmul.mubr.f32.gmra.mrb[0].mxu0 %v538
    %v606 = vpop.f32.mrb[0].mxu0
    %v607 = vadd.f32 0.0, %v606
    %v608 = vpop.f32.mrb[0].mxu0
    %609 = vdwg.mxu0
    %610 = vrot.lane.b32.xlu0 %v277, 120
    %v611 = vpop.permute.xlu0 %610
    %612 = vrot.lane.b32.xlu0 %v277, 88
    %v613 = vpop.permute.xlu0 %612
    %v614 = vsel %vm282, %v611, 0
    %v616 = vsel %vm282, %v613, 0
    %618 = vmatprep.subr.mxu0 0.0
    %619 = vmatpush1.xpose.msra.mxu0 %v616
    %620 = vmatprep.subr.mxu0 0.0
    %621 = vmatpush1.xpose.msra.mxu0 0.0
    %622 = vmatprep.subr.mxu0 0.0
    %623 = vmatpush1.xpose.msra.mxu0 0.0
    %624 = vmatprep.subr.mxu0 0.0
    %625 = vmatpush1.xpose.msra.mxu0 0.0
    %626 = vmatprep.subr.mxu0 0.0
    %627 = vmatpush1.xpose.msra.mxu0 0.0
    %628 = vmatprep.subr.mxu0 0.0
    %629 = vmatpush1.xpose.msra.mxu0 0.0
    %630 = vmatprep.subr.mxu0 0.0
    %631 = vmatpush1.xpose.msra.mxu0 0.0
    %632 = vmatprep.subr.mxu0 0.0
    %633 = vmatpush1.xpose.msra.mxu0 0.0
    %634 = vmatprep.subr.mxu0 0.0
    %635 = vmatpush1.xpose.msra.mxu0 0.0
    %636 = vmatprep.subr.mxu0 0.0
    %637 = vmatpush1.xpose.msra.mxu0 0.0
    %638 = vmatprep.subr.mxu0 0.0
    %639 = vmatpush1.xpose.msra.mxu0 0.0
    %640 = vmatprep.subr.mxu0 0.0
    %641 = vmatpush1.xpose.msra.mxu0 0.0
    %642 = vmatprep.subr.mxu0 0.0
    %643 = vmatpush1.xpose.msra.mxu0 0.0
    %644 = vmatprep.subr.mxu0 0.0
    %645 = vmatpush1.xpose.msra.mxu0 0.0
    %646 = vmatprep.subr.mxu0 0.0
    %647 = vmatpush1.xpose.msra.mxu0 0.0
    %648 = vmatprep.subr.mxu0 0.0
    %649 = vmatpush1.xpose.msra.mxu0 0.0
    %650 = vmatprep.subr.mxu0 0.0
    %651 = vmatpush1.xpose.msra.mxu0 0.0
    %652 = vmatprep.subr.mxu0 0.0
    %653 = vmatpush1.xpose.msra.mxu0 0.0
    %654 = vmatprep.subr.mxu0 0.0
    %655 = vmatpush1.xpose.msra.mxu0 0.0
    %656 = vmatprep.subr.mxu0 0.0
    %657 = vmatpush1.xpose.msra.mxu0 0.0
    %658 = vmatprep.subr.mxu0 0.0
    %659 = vmatpush1.xpose.msra.mxu0 0.0
    %660 = vmatprep.subr.mxu0 0.0
    %661 = vmatpush1.xpose.msra.mxu0 0.0
    %662 = vmatprep.subr.mxu0 0.0
    %663 = vmatpush1.xpose.msra.mxu0 0.0
    %664 = vmatprep.subr.mxu0 0.0
    %665 = vmatpush1.xpose.msra.mxu0 0.0
    %666 = vmatprep.subr.mxu0 0.0
    %667 = vmatpush1.xpose.msra.mxu0 0.0
    %668 = vmatprep.subr.mxu0 0.0
    %669 = vmatpush1.xpose.msra.mxu0 0.0
    %670 = vmatprep.subr.mxu0 0.0
    %671 = vmatpush1.xpose.msra.mxu0 0.0
    %672 = vmatprep.subr.mxu0 0.0
    %673 = vmatpush1.xpose.msra.mxu0 0.0
    %674 = vmatprep.subr.mxu0 0.0
    %675 = vmatpush1.xpose.msra.mxu0 0.0
    %676 = vmatprep.subr.mxu0 0.0
    %677 = vmatpush1.xpose.msra.mxu0 0.0
    %678 = vmatprep.subr.mxu0 0.0
    %679 = vmatpush1.xpose.msra.mxu0 0.0
    %680 = vmatprep.subr.mxu0 0.0
    %681 = vmatpush1.xpose.msra.mxu0 0.0
    %682 = vmatprep.mubr.f32.mxu0 0.0
    %683 = vmatmul.mubr.f32.gmra.mrb[0].mxu0 %v614
    %v684 = vpop.f32.mrb[0].mxu0
    %v685 = vadd.f32 0.0, %v684
    %v686 = vpop.f32.mrb[0].mxu0
    %687 = vdwg.mxu0
    %688 = vrot.lane.b32.xlu0 %v278, 120
    %v689 = vpop.permute.xlu0 %688
    %690 = vrot.lane.b32.xlu0 %v278, 88
    %v691 = vpop.permute.xlu0 %690
    %v692 = vsel %vm282, %v689, 0
    %v694 = vsel %vm282, %v691, 0
    %696 = vmatprep.subr.mxu0 0.0
    %697 = vmatpush1.xpose.msra.mxu0 %v694
    %698 = vmatprep.subr.mxu0 0.0
    %699 = vmatpush1.xpose.msra.mxu0 0.0
    %700 = vmatprep.subr.mxu0 0.0
    %701 = vmatpush1.xpose.msra.mxu0 0.0
    %702 = vmatprep.subr.mxu0 0.0
    %703 = vmatpush1.xpose.msra.mxu0 0.0
    %704 = vmatprep.subr.mxu0 0.0
    %705 = vmatpush1.xpose.msra.mxu0 0.0
    %706 = vmatprep.subr.mxu0 0.0
    %707 = vmatpush1.xpose.msra.mxu0 0.0
    %708 = vmatprep.subr.mxu0 0.0
    %709 = vmatpush1.xpose.msra.mxu0 0.0
    %710 = vmatprep.subr.mxu0 0.0
    %711 = vmatpush1.xpose.msra.mxu0 0.0
    %712 = vmatprep.subr.mxu0 0.0
    %713 = vmatpush1.xpose.msra.mxu0 0.0
    %714 = vmatprep.subr.mxu0 0.0
    %715 = vmatpush1.xpose.msra.mxu0 0.0
    %716 = vmatprep.subr.mxu0 0.0
    %717 = vmatpush1.xpose.msra.mxu0 0.0
    %718 = vmatprep.subr.mxu0 0.0
    %719 = vmatpush1.xpose.msra.mxu0 0.0
    %720 = vmatprep.subr.mxu0 0.0
    %721 = vmatpush1.xpose.msra.mxu0 0.0
    %722 = vmatprep.subr.mxu0 0.0
    %723 = vmatpush1.xpose.msra.mxu0 0.0
    %724 = vmatprep.subr.mxu0 0.0
    %725 = vmatpush1.xpose.msra.mxu0 0.0
    %726 = vmatprep.subr.mxu0 0.0
    %727 = vmatpush1.xpose.msra.mxu0 0.0
    %728 = vmatprep.subr.mxu0 0.0
    %729 = vmatpush1.xpose.msra.mxu0 0.0
    %730 = vmatprep.subr.mxu0 0.0
    %731 = vmatpush1.xpose.msra.mxu0 0.0
    %732 = vmatprep.subr.mxu0 0.0
    %733 = vmatpush1.xpose.msra.mxu0 0.0
    %734 = vmatprep.subr.mxu0 0.0
    %735 = vmatpush1.xpose.msra.mxu0 0.0
    %736 = vmatprep.subr.mxu0 0.0
    %737 = vmatpush1.xpose.msra.mxu0 0.0
    %738 = vmatprep.subr.mxu0 0.0
    %739 = vmatpush1.xpose.msra.mxu0 0.0
    %740 = vmatprep.subr.mxu0 0.0
    %741 = vmatpush1.xpose.msra.mxu0 0.0
    %742 = vmatprep.subr.mxu0 0.0
    %743 = vmatpush1.xpose.msra.mxu0 0.0
    %744 = vmatprep.subr.mxu0 0.0
    %745 = vmatpush1.xpose.msra.mxu0 0.0
    %746 = vmatprep.subr.mxu0 0.0
    %747 = vmatpush1.xpose.msra.mxu0 0.0
    %748 = vmatprep.subr.mxu0 0.0
    %749 = vmatpush1.xpose.msra.mxu0 0.0
    %750 = vmatprep.subr.mxu0 0.0
    %751 = vmatpush1.xpose.msra.mxu0 0.0
    %752 = vmatprep.subr.mxu0 0.0
    %753 = vmatpush1.xpose.msra.mxu0 0.0
    %754 = vmatprep.subr.mxu0 0.0
    %755 = vmatpush1.xpose.msra.mxu0 0.0
    %756 = vmatprep.subr.mxu0 0.0
    %757 = vmatpush1.xpose.msra.mxu0 0.0
    %758 = vmatprep.subr.mxu0 0.0
    %759 = vmatpush1.xpose.msra.mxu0 0.0
    %760 = vmatprep.mubr.f32.mxu0 0.0
    %761 = vmatmul.mubr.f32.gmra.mrb[0].mxu0 %v692
    %v762 = vpop.f32.mrb[0].mxu0
    %v763 = vadd.f32 0.0, %v762
    %v764 = vpop.f32.mrb[0].mxu0
    %765 = vdwg.mxu0
    %v766 = vsel %vm282, %v685, -inf
    %767 = vmax.xlane.f32.xlu0 %v766
    %v768 = vpop.xlane.xlu0 %767
    %v769 = vsel %vm282, %v763, -inf
    %770 = vmax.xlane.f32.xlu0 %v769
    %v771 = vpop.xlane.xlu0 %770
    %v772 = vsub.f32 %v685, %v768
    %v773 = vsub.f32 %v763, %v771
    %v774 = vmul.f32 %v772, 1.442695
    %v775 = vpow.pop %v774
    %v776 = vmul.f32 %v773, 1.442695
    %v777 = vpow.pop %v776
    %v778 = vsel %vm282, %v775, 0.0
    %779 = vadd.xlane.f32.xlu0 %v778
    %v780 = vpop.xlane.xlu0 %779
    %v781 = vsel %vm282, %v777, 0.0
    %782 = vadd.xlane.f32.xlu0 %v781
    %v783 = vpop.xlane.xlu0 %782
    %v784 = vrcp.pop %v780
    %v785 = vrcp.pop %v783
    %v786 = vmul.f32 %v775, %v784
    %v787 = vmul.f32 %v777, %v785
    %788 = vrot.lane.b32.xlu0 %v269, 56
    %v789 = vpop.permute.xlu0 %788
    %v792 = vsel %vm282, %v786, 0
    %794 = vmatprep.subr.mxu0 0.0
    %795 = vmatpush1.msra.mxu0 %v789
    %796 = vmatprep.subr.mxu0 0.0
    %797 = vmatpush1.msra.mxu0 0.0
    %798 = vmatprep.subr.mxu0 0.0
    %799 = vmatpush1.msra.mxu0 0.0
    %800 = vmatprep.subr.mxu0 0.0
    %801 = vmatpush1.msra.mxu0 0.0
    %802 = vmatprep.subr.mxu0 0.0
    %803 = vmatpush1.msra.mxu0 0.0
    %804 = vmatprep.subr.mxu0 0.0
    %805 = vmatpush1.msra.mxu0 0.0
    %806 = vmatprep.subr.mxu0 0.0
    %807 = vmatpush1.msra.mxu0 0.0
    %808 = vmatprep.subr.mxu0 0.0
    %809 = vmatpush1.msra.mxu0 0.0
    %810 = vmatprep.subr.mxu0 0.0
    %811 = vmatpush1.msra.mxu0 0.0
    %812 = vmatprep.subr.mxu0 0.0
    %813 = vmatpush1.msra.mxu0 0.0
    %814 = vmatprep.subr.mxu0 0.0
    %815 = vmatpush1.msra.mxu0 0.0
    %816 = vmatprep.subr.mxu0 0.0
    %817 = vmatpush1.msra.mxu0 0.0
    %818 = vmatprep.subr.mxu0 0.0
    %819 = vmatpush1.msra.mxu0 0.0
    %820 = vmatprep.subr.mxu0 0.0
    %821 = vmatpush1.msra.mxu0 0.0
    %822 = vmatprep.subr.mxu0 0.0
    %823 = vmatpush1.msra.mxu0 0.0
    %824 = vmatprep.subr.mxu0 0.0
    %825 = vmatpush1.msra.mxu0 0.0
    %826 = vmatprep.subr.mxu0 0.0
    %827 = vmatpush1.msra.mxu0 0.0
    %828 = vmatprep.subr.mxu0 0.0
    %829 = vmatpush1.msra.mxu0 0.0
    %830 = vmatprep.subr.mxu0 0.0
    %831 = vmatpush1.msra.mxu0 0.0
    %832 = vmatprep.subr.mxu0 0.0
    %833 = vmatpush1.msra.mxu0 0.0
    %834 = vmatprep.subr.mxu0 0.0
    %835 = vmatpush1.msra.mxu0 0.0
    %836 = vmatprep.subr.mxu0 0.0
    %837 = vmatpush1.msra.mxu0 0.0
    %838 = vmatprep.subr.mxu0 0.0
    %839 = vmatpush1.msra.mxu0 0.0
    %840 = vmatprep.subr.mxu0 0.0
    %841 = vmatpush1.msra.mxu0 0.0
    %842 = vmatprep.subr.mxu0 0.0
    %843 = vmatpush1.msra.mxu0 0.0
    %844 = vmatprep.subr.mxu0 0.0
    %845 = vmatpush1.msra.mxu0 0.0
    %846 = vmatprep.subr.mxu0 0.0
    %847 = vmatpush1.msra.mxu0 0.0
    %848 = vmatprep.subr.mxu0 0.0
    %849 = vmatpush1.msra.mxu0 0.0
    %850 = vmatprep.subr.mxu0 0.0
    %851 = vmatpush1.msra.mxu0 0.0
    %852 = vmatprep.subr.mxu0 0.0
    %853 = vmatpush1.msra.mxu0 0.0
    %854 = vmatprep.subr.mxu0 0.0
    %855 = vmatpush1.msra.mxu0 0.0
    %856 = vmatprep.subr.mxu0 0.0
    %857 = vmatpush1.msra.mxu0 0.0
    %858 = vmatprep.mubr.f32.mxu0 0.0
    %859 = vmatmul.mubr.f32.gmra.mrb[0].mxu0 %v792
    %v860 = vpop.f32.mrb[0].mxu0
    %v861 = vadd.f32 0.0, %v860
    %v862 = vpop.f32.mrb[0].mxu0
    %863 = vdwg.mxu0
    %864 = vrot.lane.b32.xlu0 %v274, 56
    %v865 = vpop.permute.xlu0 %864
    %v868 = vsel %vm282, %v787, 0
    %870 = vmatprep.subr.mxu0 0.0
    %871 = vmatpush1.msra.mxu0 %v865
    %872 = vmatprep.subr.mxu0 0.0
    %873 = vmatpush1.msra.mxu0 0.0
    %874 = vmatprep.subr.mxu0 0.0
    %875 = vmatpush1.msra.mxu0 0.0
    %876 = vmatprep.subr.mxu0 0.0
    %877 = vmatpush1.msra.mxu0 0.0
    %878 = vmatprep.subr.mxu0 0.0
    %879 = vmatpush1.msra.mxu0 0.0
    %880 = vmatprep.subr.mxu0 0.0
    %881 = vmatpush1.msra.mxu0 0.0
    %882 = vmatprep.subr.mxu0 0.0
    %883 = vmatpush1.msra.mxu0 0.0
    %884 = vmatprep.subr.mxu0 0.0
    %885 = vmatpush1.msra.mxu0 0.0
    %886 = vmatprep.subr.mxu0 0.0
    %887 = vmatpush1.msra.mxu0 0.0
    %888 = vmatprep.subr.mxu0 0.0
    %889 = vmatpush1.msra.mxu0 0.0
    %890 = vmatprep.subr.mxu0 0.0
    %891 = vmatpush1.msra.mxu0 0.0
    %892 = vmatprep.subr.mxu0 0.0
    %893 = vmatpush1.msra.mxu0 0.0
    %894 = vmatprep.subr.mxu0 0.0
    %895 = vmatpush1.msra.mxu0 0.0
    %896 = vmatprep.subr.mxu0 0.0
    %897 = vmatpush1.msra.mxu0 0.0
    %898 = vmatprep.subr.mxu0 0.0
    %899 = vmatpush1.msra.mxu0 0.0
    %900 = vmatprep.subr.mxu0 0.0
    %901 = vmatpush1.msra.mxu0 0.0
    %902 = vmatprep.subr.mxu0 0.0
    %903 = vmatpush1.msra.mxu0 0.0
    %904 = vmatprep.subr.mxu0 0.0
    %905 = vmatpush1.msra.mxu0 0.0
    %906 = vmatprep.subr.mxu0 0.0
    %907 = vmatpush1.msra.mxu0 0.0
    %908 = vmatprep.subr.mxu0 0.0
    %909 = vmatpush1.msra.mxu0 0.0
    %910 = vmatprep.subr.mxu0 0.0
    %911 = vmatpush1.msra.mxu0 0.0
    %912 = vmatprep.subr.mxu0 0.0
    %913 = vmatpush1.msra.mxu0 0.0
    %914 = vmatprep.subr.mxu0 0.0
    %915 = vmatpush1.msra.mxu0 0.0
    %916 = vmatprep.subr.mxu0 0.0
    %917 = vmatpush1.msra.mxu0 0.0
    %918 = vmatprep.subr.mxu0 0.0
    %919 = vmatpush1.msra.mxu0 0.0
    %920 = vmatprep.subr.mxu0 0.0
    %921 = vmatpush1.msra.mxu0 0.0
    %922 = vmatprep.subr.mxu0 0.0
    %923 = vmatpush1.msra.mxu0 0.0
    %924 = vmatprep.subr.mxu0 0.0
    %925 = vmatpush1.msra.mxu0 0.0
    %926 = vmatprep.subr.mxu0 0.0
    %927 = vmatpush1.msra.mxu0 0.0
    %928 = vmatprep.subr.mxu0 0.0
    %929 = vmatpush1.msra.mxu0 0.0
    %930 = vmatprep.subr.mxu0 0.0
    %931 = vmatpush1.msra.mxu0 0.0
    %932 = vmatprep.subr.mxu0 0.0
    %933 = vmatpush1.msra.mxu0 0.0
    %934 = vmatprep.mubr.f32.mxu0 0.0
    %935 = vmatmul.mubr.f32.gmra.mrb[0].mxu0 %v868
    %v936 = vpop.f32.mrb[0].mxu0
    %v937 = vadd.f32 0.0, %v936
    %v938 = vpop.f32.mrb[0].mxu0
    %939 = vdwg.mxu0
    %940 = vrot.lane.b32.xlu0 %v277, 112
    %v941 = vpop.permute.xlu0 %940
    %942 = vrot.lane.b32.xlu0 %v277, 80
    %v943 = vpop.permute.xlu0 %942
    %v944 = vsel %vm282, %v941, 0
    %v946 = vsel %vm282, %v943, 0
    %948 = vmatprep.subr.mxu0 0.0
    %949 = vmatpush1.xpose.msra.mxu0 %v946
    %950 = vmatprep.subr.mxu0 0.0
    %951 = vmatpush1.xpose.msra.mxu0 0.0
    %952 = vmatprep.subr.mxu0 0.0
    %953 = vmatpush1.xpose.msra.mxu0 0.0
    %954 = vmatprep.subr.mxu0 0.0
    %955 = vmatpush1.xpose.msra.mxu0 0.0
    %956 = vmatprep.subr.mxu0 0.0
    %957 = vmatpush1.xpose.msra.mxu0 0.0
    %958 = vmatprep.subr.mxu0 0.0
    %959 = vmatpush1.xpose.msra.mxu0 0.0
    %960 = vmatprep.subr.mxu0 0.0
    %961 = vmatpush1.xpose.msra.mxu0 0.0
    %962 = vmatprep.subr.mxu0 0.0
    %963 = vmatpush1.xpose.msra.mxu0 0.0
    %964 = vmatprep.subr.mxu0 0.0
    %965 = vmatpush1.xpose.msra.mxu0 0.0
    %966 = vmatprep.subr.mxu0 0.0
    %967 = vmatpush1.xpose.msra.mxu0 0.0
    %968 = vmatprep.subr.mxu0 0.0
    %969 = vmatpush1.xpose.msra.mxu0 0.0
    %970 = vmatprep.subr.mxu0 0.0
    %971 = vmatpush1.xpose.msra.mxu0 0.0
    %972 = vmatprep.subr.mxu0 0.0
    %973 = vmatpush1.xpose.msra.mxu0 0.0
    %974 = vmatprep.subr.mxu0 0.0
    %975 = vmatpush1.xpose.msra.mxu0 0.0
    %976 = vmatprep.subr.mxu0 0.0
    %977 = vmatpush1.xpose.msra.mxu0 0.0
    %978 = vmatprep.subr.mxu0 0.0
    %979 = vmatpush1.xpose.msra.mxu0 0.0
    %980 = vmatprep.subr.mxu0 0.0
    %981 = vmatpush1.xpose.msra.mxu0 0.0
    %982 = vmatprep.subr.mxu0 0.0
    %983 = vmatpush1.xpose.msra.mxu0 0.0
    %984 = vmatprep.subr.mxu0 0.0
    %985 = vmatpush1.xpose.msra.mxu0 0.0
    %986 = vmatprep.subr.mxu0 0.0
    %987 = vmatpush1.xpose.msra.mxu0 0.0
    %988 = vmatprep.subr.mxu0 0.0
    %989 = vmatpush1.xpose.msra.mxu0 0.0
    %990 = vmatprep.subr.mxu0 0.0
    %991 = vmatpush1.xpose.msra.mxu0 0.0
    %992 = vmatprep.subr.mxu0 0.0
    %993 = vmatpush1.xpose.msra.mxu0 0.0
    %994 = vmatprep.subr.mxu0 0.0
    %995 = vmatpush1.xpose.msra.mxu0 0.0
    %996 = vmatprep.subr.mxu0 0.0
    %997 = vmatpush1.xpose.msra.mxu0 0.0
    %998 = vmatprep.subr.mxu0 0.0
    %999 = vmatpush1.xpose.msra.mxu0 0.0
    %1000 = vmatprep.subr.mxu0 0.0
    %1001 = vmatpush1.xpose.msra.mxu0 0.0
    %1002 = vmatprep.subr.mxu0 0.0
    %1003 = vmatpush1.xpose.msra.mxu0 0.0
    %1004 = vmatprep.subr.mxu0 0.0
    %1005 = vmatpush1.xpose.msra.mxu0 0.0
    %1006 = vmatprep.subr.mxu0 0.0
    %1007 = vmatpush1.xpose.msra.mxu0 0.0
    %1008 = vmatprep.subr.mxu0 0.0
    %1009 = vmatpush1.xpose.msra.mxu0 0.0
    %1010 = vmatprep.subr.mxu0 0.0
    %1011 = vmatpush1.xpose.msra.mxu0 0.0
    %1012 = vmatprep.mubr.f32.mxu0 0.0
    %1013 = vmatmul.mubr.f32.gmra.mrb[0].mxu0 %v944
    %v1014 = vpop.f32.mrb[0].mxu0
    %v1015 = vadd.f32 0.0, %v1014
    %v1016 = vpop.f32.mrb[0].mxu0
    %1017 = vdwg.mxu0
    %1018 = vrot.lane.b32.xlu0 %v278, 112
    %v1019 = vpop.permute.xlu0 %1018
    %1020 = vrot.lane.b32.xlu0 %v278, 80
    %v1021 = vpop.permute.xlu0 %1020
    %v1022 = vsel %vm282, %v1019, 0
    %v1024 = vsel %vm282, %v1021, 0
    %1026 = vmatprep.subr.mxu0 0.0
    %1027 = vmatpush1.xpose.msra.mxu0 %v1024
    %1028 = vmatprep.subr.mxu0 0.0
    %1029 = vmatpush1.xpose.msra.mxu0 0.0
    %1030 = vmatprep.subr.mxu0 0.0
    %1031 = vmatpush1.xpose.msra.mxu0 0.0
    %1032 = vmatprep.subr.mxu0 0.0
    %1033 = vmatpush1.xpose.msra.mxu0 0.0
    %1034 = vmatprep.subr.mxu0 0.0
    %1035 = vmatpush1.xpose.msra.mxu0 0.0
    %1036 = vmatprep.subr.mxu0 0.0
    %1037 = vmatpush1.xpose.msra.mxu0 0.0
    %1038 = vmatprep.subr.mxu0 0.0
    %1039 = vmatpush1.xpose.msra.mxu0 0.0
    %1040 = vmatprep.subr.mxu0 0.0
    %1041 = vmatpush1.xpose.msra.mxu0 0.0
    %1042 = vmatprep.subr.mxu0 0.0
    %1043 = vmatpush1.xpose.msra.mxu0 0.0
    %1044 = vmatprep.subr.mxu0 0.0
    %1045 = vmatpush1.xpose.msra.mxu0 0.0
    %1046 = vmatprep.subr.mxu0 0.0
    %1047 = vmatpush1.xpose.msra.mxu0 0.0
    %1048 = vmatprep.subr.mxu0 0.0
    %1049 = vmatpush1.xpose.msra.mxu0 0.0
    %1050 = vmatprep.subr.mxu0 0.0
    %1051 = vmatpush1.xpose.msra.mxu0 0.0
    %1052 = vmatprep.subr.mxu0 0.0
    %1053 = vmatpush1.xpose.msra.mxu0 0.0
    %1054 = vmatprep.subr.mxu0 0.0
    %1055 = vmatpush1.xpose.msra.mxu0 0.0
    %1056 = vmatprep.subr.mxu0 0.0
    %1057 = vmatpush1.xpose.msra.mxu0 0.0
    %1058 = vmatprep.subr.mxu0 0.0
    %1059 = vmatpush1.xpose.msra.mxu0 0.0
    %1060 = vmatprep.subr.mxu0 0.0
    %1061 = vmatpush1.xpose.msra.mxu0 0.0
    %1062 = vmatprep.subr.mxu0 0.0
    %1063 = vmatpush1.xpose.msra.mxu0 0.0
    %1064 = vmatprep.subr.mxu0 0.0
    %1065 = vmatpush1.xpose.msra.mxu0 0.0
    %1066 = vmatprep.subr.mxu0 0.0
    %1067 = vmatpush1.xpose.msra.mxu0 0.0
    %1068 = vmatprep.subr.mxu0 0.0
    %1069 = vmatpush1.xpose.msra.mxu0 0.0
    %1070 = vmatprep.subr.mxu0 0.0
    %1071 = vmatpush1.xpose.msra.mxu0 0.0
    %1072 = vmatprep.subr.mxu0 0.0
    %1073 = vmatpush1.xpose.msra.mxu0 0.0
    %1074 = vmatprep.subr.mxu0 0.0
    %1075 = vmatpush1.xpose.msra.mxu0 0.0
    %1076 = vmatprep.subr.mxu0 0.0
    %1077 = vmatpush1.xpose.msra.mxu0 0.0
    %1078 = vmatprep.subr.mxu0 0.0
    %1079 = vmatpush1.xpose.msra.mxu0 0.0
    %1080 = vmatprep.subr.mxu0 0.0
    %1081 = vmatpush1.xpose.msra.mxu0 0.0
    %1082 = vmatprep.subr.mxu0 0.0
    %1083 = vmatpush1.xpose.msra.mxu0 0.0
    %1084 = vmatprep.subr.mxu0 0.0
    %1085 = vmatpush1.xpose.msra.mxu0 0.0
    %1086 = vmatprep.subr.mxu0 0.0
    %1087 = vmatpush1.xpose.msra.mxu0 0.0
    %1088 = vmatprep.subr.mxu0 0.0
    %1089 = vmatpush1.xpose.msra.mxu0 0.0
    %1090 = vmatprep.mubr.f32.mxu0 0.0
    %1091 = vmatmul.mubr.f32.gmra.mrb[0].mxu0 %v1022
    %v1092 = vpop.f32.mrb[0].mxu0
    %v1093 = vadd.f32 0.0, %v1092
    %v1094 = vpop.f32.mrb[0].mxu0
    %1095 = vdwg.mxu0
    %v1096 = vsel %vm282, %v1015, -inf
    %1097 = vmax.xlane.f32.xlu0 %v1096
    %v1098 = vpop.xlane.xlu0 %1097
    %v1099 = vsel %vm282, %v1093, -inf
    %1100 = vmax.xlane.f32.xlu0 %v1099
    %v1101 = vpop.xlane.xlu0 %1100
    %v1102 = vsub.f32 %v1015, %v1098
    %v1103 = vsub.f32 %v1093, %v1101
    %v1104 = vmul.f32 %v1102, 1.442695
    %v1105 = vpow.pop %v1104
    %v1106 = vmul.f32 %v1103, 1.442695
    %v1107 = vpow.pop %v1106
    %v1108 = vsel %vm282, %v1105, 0.0
    %1109 = vadd.xlane.f32.xlu0 %v1108
    %v1110 = vpop.xlane.xlu0 %1109
    %v1111 = vsel %vm282, %v1107, 0.0
    %1112 = vadd.xlane.f32.xlu0 %v1111
    %v1113 = vpop.xlane.xlu0 %1112
    %v1114 = vrcp.pop %v1110
    %v1115 = vrcp.pop %v1113
    %v1116 = vmul.f32 %v1105, %v1114
    %v1117 = vmul.f32 %v1107, %v1115
    %1118 = vrot.lane.b32.xlu0 %v269, 48
    %v1119 = vpop.permute.xlu0 %1118
    %v1122 = vsel %vm282, %v1116, 0
    %1124 = vmatprep.subr.mxu0 0.0
    %1125 = vmatpush1.msra.mxu0 %v1119
    %1126 = vmatprep.subr.mxu0 0.0
    %1127 = vmatpush1.msra.mxu0 0.0
    %1128 = vmatprep.subr.mxu0 0.0
    %1129 = vmatpush1.msra.mxu0 0.0
    %1130 = vmatprep.subr.mxu0 0.0
    %1131 = vmatpush1.msra.mxu0 0.0
    %1132 = vmatprep.subr.mxu0 0.0
    %1133 = vmatpush1.msra.mxu0 0.0
    %1134 = vmatprep.subr.mxu0 0.0
    %1135 = vmatpush1.msra.mxu0 0.0
    %1136 = vmatprep.subr.mxu0 0.0
    %1137 = vmatpush1.msra.mxu0 0.0
    %1138 = vmatprep.subr.mxu0 0.0
    %1139 = vmatpush1.msra.mxu0 0.0
    %1140 = vmatprep.subr.mxu0 0.0
    %1141 = vmatpush1.msra.mxu0 0.0
    %1142 = vmatprep.subr.mxu0 0.0
    %1143 = vmatpush1.msra.mxu0 0.0
    %1144 = vmatprep.subr.mxu0 0.0
    %1145 = vmatpush1.msra.mxu0 0.0
    %1146 = vmatprep.subr.mxu0 0.0
    %1147 = vmatpush1.msra.mxu0 0.0
    %1148 = vmatprep.subr.mxu0 0.0
    %1149 = vmatpush1.msra.mxu0 0.0
    %1150 = vmatprep.subr.mxu0 0.0
    %1151 = vmatpush1.msra.mxu0 0.0
    %1152 = vmatprep.subr.mxu0 0.0
    %1153 = vmatpush1.msra.mxu0 0.0
    %1154 = vmatprep.subr.mxu0 0.0
    %1155 = vmatpush1.msra.mxu0 0.0
    %1156 = vmatprep.subr.mxu0 0.0
    %1157 = vmatpush1.msra.mxu0 0.0
    %1158 = vmatprep.subr.mxu0 0.0
    %1159 = vmatpush1.msra.mxu0 0.0
    %1160 = vmatprep.subr.mxu0 0.0
    %1161 = vmatpush1.msra.mxu0 0.0
    %1162 = vmatprep.subr.mxu0 0.0
    %1163 = vmatpush1.msra.mxu0 0.0
    %1164 = vmatprep.subr.mxu0 0.0
    %1165 = vmatpush1.msra.mxu0 0.0
    %1166 = vmatprep.subr.mxu0 0.0
    %1167 = vmatpush1.msra.mxu0 0.0
    %1168 = vmatprep.subr.mxu0 0.0
    %1169 = vmatpush1.msra.mxu0 0.0
    %1170 = vmatprep.subr.mxu0 0.0
    %1171 = vmatpush1.msra.mxu0 0.0
    %1172 = vmatprep.subr.mxu0 0.0
    %1173 = vmatpush1.msra.mxu0 0.0
    %1174 = vmatprep.subr.mxu0 0.0
    %1175 = vmatpush1.msra.mxu0 0.0
    %1176 = vmatprep.subr.mxu0 0.0
    %1177 = vmatpush1.msra.mxu0 0.0
    %1178 = vmatprep.subr.mxu0 0.0
    %1179 = vmatpush1.msra.mxu0 0.0
    %1180 = vmatprep.subr.mxu0 0.0
    %1181 = vmatpush1.msra.mxu0 0.0
    %1182 = vmatprep.subr.mxu0 0.0
    %1183 = vmatpush1.msra.mxu0 0.0
    %1184 = vmatprep.subr.mxu0 0.0
    %1185 = vmatpush1.msra.mxu0 0.0
    %1186 = vmatprep.subr.mxu0 0.0
    %1187 = vmatpush1.msra.mxu0 0.0
    %1188 = vmatprep.mubr.f32.mxu0 0.0
    %1189 = vmatmul.mubr.f32.gmra.mrb[0].mxu0 %v1122
    %v1190 = vpop.f32.mrb[0].mxu0
    %v1191 = vadd.f32 0.0, %v1190
    %v1192 = vpop.f32.mrb[0].mxu0
    %1193 = vdwg.mxu0
    %1194 = vrot.lane.b32.xlu0 %v274, 48
    %v1195 = vpop.permute.xlu0 %1194
    %v1198 = vsel %vm282, %v1117, 0
    %1200 = vmatprep.subr.mxu0 0.0
    %1201 = vmatpush1.msra.mxu0 %v1195
    %1202 = vmatprep.subr.mxu0 0.0
    %1203 = vmatpush1.msra.mxu0 0.0
    %1204 = vmatprep.subr.mxu0 0.0
    %1205 = vmatpush1.msra.mxu0 0.0
    %1206 = vmatprep.subr.mxu0 0.0
    %1207 = vmatpush1.msra.mxu0 0.0
    %1208 = vmatprep.subr.mxu0 0.0
    %1209 = vmatpush1.msra.mxu0 0.0
    %1210 = vmatprep.subr.mxu0 0.0
    %1211 = vmatpush1.msra.mxu0 0.0
    %1212 = vmatprep.subr.mxu0 0.0
    %1213 = vmatpush1.msra.mxu0 0.0
    %1214 = vmatprep.subr.mxu0 0.0
    %1215 = vmatpush1.msra.mxu0 0.0
    %1216 = vmatprep.subr.mxu0 0.0
    %1217 = vmatpush1.msra.mxu0 0.0
    %1218 = vmatprep.subr.mxu0 0.0
    %1219 = vmatpush1.msra.mxu0 0.0
    %1220 = vmatprep.subr.mxu0 0.0
    %1221 = vmatpush1.msra.mxu0 0.0
    %1222 = vmatprep.subr.mxu0 0.0
    %1223 = vmatpush1.msra.mxu0 0.0
    %1224 = vmatprep.subr.mxu0 0.0
    %1225 = vmatpush1.msra.mxu0 0.0
    %1226 = vmatprep.subr.mxu0 0.0
    %1227 = vmatpush1.msra.mxu0 0.0
    %1228 = vmatprep.subr.mxu0 0.0
    %1229 = vmatpush1.msra.mxu0 0.0
    %1230 = vmatprep.subr.mxu0 0.0
    %1231 = vmatpush1.msra.mxu0 0.0
    %1232 = vmatprep.subr.mxu0 0.0
    %1233 = vmatpush1.msra.mxu0 0.0
    %1234 = vmatprep.subr.mxu0 0.0
    %1235 = vmatpush1.msra.mxu0 0.0
    %1236 = vmatprep.subr.mxu0 0.0
    %1237 = vmatpush1.msra.mxu0 0.0
    %1238 = vmatprep.subr.mxu0 0.0
    %1239 = vmatpush1.msra.mxu0 0.0
    %1240 = vmatprep.subr.mxu0 0.0
    %1241 = vmatpush1.msra.mxu0 0.0
    %1242 = vmatprep.subr.mxu0 0.0
    %1243 = vmatpush1.msra.mxu0 0.0
    %1244 = vmatprep.subr.mxu0 0.0
    %1245 = vmatpush1.msra.mxu0 0.0
    %1246 = vmatprep.subr.mxu0 0.0
    %1247 = vmatpush1.msra.mxu0 0.0
    %1248 = vmatprep.subr.mxu0 0.0
    %1249 = vmatpush1.msra.mxu0 0.0
    %1250 = vmatprep.subr.mxu0 0.0
    %1251 = vmatpush1.msra.mxu0 0.0
    %1252 = vmatprep.subr.mxu0 0.0
    %1253 = vmatpush1.msra.mxu0 0.0
    %1254 = vmatprep.subr.mxu0 0.0
    %1255 = vmatpush1.msra.mxu0 0.0
    %1256 = vmatprep.subr.mxu0 0.0
    %1257 = vmatpush1.msra.mxu0 0.0
    %1258 = vmatprep.subr.mxu0 0.0
    %1259 = vmatpush1.msra.mxu0 0.0
    %1260 = vmatprep.subr.mxu0 0.0
    %1261 = vmatpush1.msra.mxu0 0.0
    %1262 = vmatprep.subr.mxu0 0.0
    %1263 = vmatpush1.msra.mxu0 0.0
    %1264 = vmatprep.mubr.f32.mxu0 0.0
    %1265 = vmatmul.mubr.f32.gmra.mrb[0].mxu0 %v1198
    %v1266 = vpop.f32.mrb[0].mxu0
    %v1267 = vadd.f32 0.0, %v1266
    %v1268 = vpop.f32.mrb[0].mxu0
    %1269 = vdwg.mxu0
    %1270 = vrot.lane.b32.xlu0 %v277, 104
    %v1271 = vpop.permute.xlu0 %1270
    %1272 = vrot.lane.b32.xlu0 %v277, 72
    %v1273 = vpop.permute.xlu0 %1272
    %v1274 = vsel %vm282, %v1271, 0
    %v1276 = vsel %vm282, %v1273, 0
    %1278 = vmatprep.subr.mxu0 0.0
    %1279 = vmatpush1.xpose.msra.mxu0 %v1276
    %1280 = vmatprep.subr.mxu0 0.0
    %1281 = vmatpush1.xpose.msra.mxu0 0.0
    %1282 = vmatprep.subr.mxu0 0.0
    %1283 = vmatpush1.xpose.msra.mxu0 0.0
    %1284 = vmatprep.subr.mxu0 0.0
    %1285 = vmatpush1.xpose.msra.mxu0 0.0
    %1286 = vmatprep.subr.mxu0 0.0
    %1287 = vmatpush1.xpose.msra.mxu0 0.0
    %1288 = vmatprep.subr.mxu0 0.0
    %1289 = vmatpush1.xpose.msra.mxu0 0.0
    %1290 = vmatprep.subr.mxu0 0.0
    %1291 = vmatpush1.xpose.msra.mxu0 0.0
    %1292 = vmatprep.subr.mxu0 0.0
    %1293 = vmatpush1.xpose.msra.mxu0 0.0
    %1294 = vmatprep.subr.mxu0 0.0
    %1295 = vmatpush1.xpose.msra.mxu0 0.0
    %1296 = vmatprep.subr.mxu0 0.0
    %1297 = vmatpush1.xpose.msra.mxu0 0.0
    %1298 = vmatprep.subr.mxu0 0.0
    %1299 = vmatpush1.xpose.msra.mxu0 0.0
    %1300 = vmatprep.subr.mxu0 0.0
    %1301 = vmatpush1.xpose.msra.mxu0 0.0
    %1302 = vmatprep.subr.mxu0 0.0
    %1303 = vmatpush1.xpose.msra.mxu0 0.0
    %1304 = vmatprep.subr.mxu0 0.0
    %1305 = vmatpush1.xpose.msra.mxu0 0.0
    %1306 = vmatprep.subr.mxu0 0.0
    %1307 = vmatpush1.xpose.msra.mxu0 0.0
    %1308 = vmatprep.subr.mxu0 0.0
    %1309 = vmatpush1.xpose.msra.mxu0 0.0
    %1310 = vmatprep.subr.mxu0 0.0
    %1311 = vmatpush1.xpose.msra.mxu0 0.0
    %1312 = vmatprep.subr.mxu0 0.0
    %1313 = vmatpush1.xpose.msra.mxu0 0.0
    %1314 = vmatprep.subr.mxu0 0.0
    %1315 = vmatpush1.xpose.msra.mxu0 0.0
    %1316 = vmatprep.subr.mxu0 0.0
    %1317 = vmatpush1.xpose.msra.mxu0 0.0
    %1318 = vmatprep.subr.mxu0 0.0
    %1319 = vmatpush1.xpose.msra.mxu0 0.0
    %1320 = vmatprep.subr.mxu0 0.0
    %1321 = vmatpush1.xpose.msra.mxu0 0.0
    %1322 = vmatprep.subr.mxu0 0.0
    %1323 = vmatpush1.xpose.msra.mxu0 0.0
    %1324 = vmatprep.subr.mxu0 0.0
    %1325 = vmatpush1.xpose.msra.mxu0 0.0
    %1326 = vmatprep.subr.mxu0 0.0
    %1327 = vmatpush1.xpose.msra.mxu0 0.0
    %1328 = vmatprep.subr.mxu0 0.0
    %1329 = vmatpush1.xpose.msra.mxu0 0.0
    %1330 = vmatprep.subr.mxu0 0.0
    %1331 = vmatpush1.xpose.msra.mxu0 0.0
    %1332 = vmatprep.subr.mxu0 0.0
    %1333 = vmatpush1.xpose.msra.mxu0 0.0
    %1334 = vmatprep.subr.mxu0 0.0
    %1335 = vmatpush1.xpose.msra.mxu0 0.0
    %1336 = vmatprep.subr.mxu0 0.0
    %1337 = vmatpush1.xpose.msra.mxu0 0.0
    %1338 = vmatprep.subr.mxu0 0.0
    %1339 = vmatpush1.xpose.msra.mxu0 0.0
    %1340 = vmatprep.subr.mxu0 0.0
    %1341 = vmatpush1.xpose.msra.mxu0 0.0
    %1342 = vmatprep.mubr.f32.mxu0 0.0
    %1343 = vmatmul.mubr.f32.gmra.mrb[0].mxu0 %v1274
    %v1344 = vpop.f32.mrb[0].mxu0
    %v1345 = vadd.f32 0.0, %v1344
    %v1346 = vpop.f32.mrb[0].mxu0
    %1347 = vdwg.mxu0
    %1348 = vrot.lane.b32.xlu0 %v278, 104
    %v1349 = vpop.permute.xlu0 %1348
    %1350 = vrot.lane.b32.xlu0 %v278, 72
    %v1351 = vpop.permute.xlu0 %1350
    %v1352 = vsel %vm282, %v1349, 0
    %v1354 = vsel %vm282, %v1351, 0
    %1356 = vmatprep.subr.mxu0 0.0
    %1357 = vmatpush1.xpose.msra.mxu0 %v1354
    %1358 = vmatprep.subr.mxu0 0.0
    %1359 = vmatpush1.xpose.msra.mxu0 0.0
    %1360 = vmatprep.subr.mxu0 0.0
    %1361 = vmatpush1.xpose.msra.mxu0 0.0
    %1362 = vmatprep.subr.mxu0 0.0
    %1363 = vmatpush1.xpose.msra.mxu0 0.0
    %1364 = vmatprep.subr.mxu0 0.0
    %1365 = vmatpush1.xpose.msra.mxu0 0.0
    %1366 = vmatprep.subr.mxu0 0.0
    %1367 = vmatpush1.xpose.msra.mxu0 0.0
    %1368 = vmatprep.subr.mxu0 0.0
    %1369 = vmatpush1.xpose.msra.mxu0 0.0
    %1370 = vmatprep.subr.mxu0 0.0
    %1371 = vmatpush1.xpose.msra.mxu0 0.0
    %1372 = vmatprep.subr.mxu0 0.0
    %1373 = vmatpush1.xpose.msra.mxu0 0.0
    %1374 = vmatprep.subr.mxu0 0.0
    %1375 = vmatpush1.xpose.msra.mxu0 0.0
    %1376 = vmatprep.subr.mxu0 0.0
    %1377 = vmatpush1.xpose.msra.mxu0 0.0
    %1378 = vmatprep.subr.mxu0 0.0
    %1379 = vmatpush1.xpose.msra.mxu0 0.0
    %1380 = vmatprep.subr.mxu0 0.0
    %1381 = vmatpush1.xpose.msra.mxu0 0.0
    %1382 = vmatprep.subr.mxu0 0.0
    %1383 = vmatpush1.xpose.msra.mxu0 0.0
    %1384 = vmatprep.subr.mxu0 0.0
    %1385 = vmatpush1.xpose.msra.mxu0 0.0
    %1386 = vmatprep.subr.mxu0 0.0
    %1387 = vmatpush1.xpose.msra.mxu0 0.0
    %1388 = vmatprep.subr.mxu0 0.0
    %1389 = vmatpush1.xpose.msra.mxu0 0.0
    %1390 = vmatprep.subr.mxu0 0.0
    %1391 = vmatpush1.xpose.msra.mxu0 0.0
    %1392 = vmatprep.subr.mxu0 0.0
    %1393 = vmatpush1.xpose.msra.mxu0 0.0
    %1394 = vmatprep.subr.mxu0 0.0
    %1395 = vmatpush1.xpose.msra.mxu0 0.0
    %1396 = vmatprep.subr.mxu0 0.0
    %1397 = vmatpush1.xpose.msra.mxu0 0.0
    %1398 = vmatprep.subr.mxu0 0.0
    %1399 = vmatpush1.xpose.msra.mxu0 0.0
    %1400 = vmatprep.subr.mxu0 0.0
    %1401 = vmatpush1.xpose.msra.mxu0 0.0
    %1402 = vmatprep.subr.mxu0 0.0
    %1403 = vmatpush1.xpose.msra.mxu0 0.0
    %1404 = vmatprep.subr.mxu0 0.0
    %1405 = vmatpush1.xpose.msra.mxu0 0.0
    %1406 = vmatprep.subr.mxu0 0.0
    %1407 = vmatpush1.xpose.msra.mxu0 0.0
    %1408 = vmatprep.subr.mxu0 0.0
    %1409 = vmatpush1.xpose.msra.mxu0 0.0
    %1410 = vmatprep.subr.mxu0 0.0
    %1411 = vmatpush1.xpose.msra.mxu0 0.0
    %1412 = vmatprep.subr.mxu0 0.0
    %1413 = vmatpush1.xpose.msra.mxu0 0.0
    %1414 = vmatprep.subr.mxu0 0.0
    %1415 = vmatpush1.xpose.msra.mxu0 0.0
    %1416 = vmatprep.subr.mxu0 0.0
    %1417 = vmatpush1.xpose.msra.mxu0 0.0
    %1418 = vmatprep.subr.mxu0 0.0
    %1419 = vmatpush1.xpose.msra.mxu0 0.0
    %1420 = vmatprep.mubr.f32.mxu0 0.0
    %1421 = vmatmul.mubr.f32.gmra.mrb[0].mxu0 %v1352
    %v1422 = vpop.f32.mrb[0].mxu0
    %v1423 = vadd.f32 0.0, %v1422
    %v1424 = vpop.f32.mrb[0].mxu0
    %1425 = vdwg.mxu0
    %v1426 = vsel %vm282, %v1345, -inf
    %1427 = vmax.xlane.f32.xlu0 %v1426
    %v1428 = vpop.xlane.xlu0 %1427
    %v1429 = vsel %vm282, %v1423, -inf
    %1430 = vmax.xlane.f32.xlu0 %v1429
    %v1431 = vpop.xlane.xlu0 %1430
    %v1432 = vsub.f32 %v1345, %v1428
    %v1433 = vsub.f32 %v1423, %v1431
    %v1434 = vmul.f32 %v1432, 1.442695
    %v1435 = vpow.pop %v1434
    %v1436 = vmul.f32 %v1433, 1.442695
    %v1437 = vpow.pop %v1436
    %v1438 = vsel %vm282, %v1435, 0.0
    %1439 = vadd.xlane.f32.xlu0 %v1438
    %v1440 = vpop.xlane.xlu0 %1439
    %v1441 = vsel %vm282, %v1437, 0.0
    %1442 = vadd.xlane.f32.xlu0 %v1441
    %v1443 = vpop.xlane.xlu0 %1442
    %v1444 = vrcp.pop %v1440
    %v1445 = vrcp.pop %v1443
    %v1446 = vmul.f32 %v1435, %v1444
    %v1447 = vmul.f32 %v1437, %v1445
    %1448 = vrot.lane.b32.xlu0 %v269, 40
    %v1449 = vpop.permute.xlu0 %1448
    %v1452 = vsel %vm282, %v1446, 0
    %1454 = vmatprep.subr.mxu0 0.0
    %1455 = vmatpush1.msra.mxu0 %v1449
    %1456 = vmatprep.subr.mxu0 0.0
    %1457 = vmatpush1.msra.mxu0 0.0
    %1458 = vmatprep.subr.mxu0 0.0
    %1459 = vmatpush1.msra.mxu0 0.0
    %1460 = vmatprep.subr.mxu0 0.0
    %1461 = vmatpush1.msra.mxu0 0.0
    %1462 = vmatprep.subr.mxu0 0.0
    %1463 = vmatpush1.msra.mxu0 0.0
    %1464 = vmatprep.subr.mxu0 0.0
    %1465 = vmatpush1.msra.mxu0 0.0
    %1466 = vmatprep.subr.mxu0 0.0
    %1467 = vmatpush1.msra.mxu0 0.0
    %1468 = vmatprep.subr.mxu0 0.0
    %1469 = vmatpush1.msra.mxu0 0.0
    %1470 = vmatprep.subr.mxu0 0.0
    %1471 = vmatpush1.msra.mxu0 0.0
    %1472 = vmatprep.subr.mxu0 0.0
    %1473 = vmatpush1.msra.mxu0 0.0
    %1474 = vmatprep.subr.mxu0 0.0
    %1475 = vmatpush1.msra.mxu0 0.0
    %1476 = vmatprep.subr.mxu0 0.0
    %1477 = vmatpush1.msra.mxu0 0.0
    %1478 = vmatprep.subr.mxu0 0.0
    %1479 = vmatpush1.msra.mxu0 0.0
    %1480 = vmatprep.subr.mxu0 0.0
    %1481 = vmatpush1.msra.mxu0 0.0
    %1482 = vmatprep.subr.mxu0 0.0
    %1483 = vmatpush1.msra.mxu0 0.0
    %1484 = vmatprep.subr.mxu0 0.0
    %1485 = vmatpush1.msra.mxu0 0.0
    %1486 = vmatprep.subr.mxu0 0.0
    %1487 = vmatpush1.msra.mxu0 0.0
    %1488 = vmatprep.subr.mxu0 0.0
    %1489 = vmatpush1.msra.mxu0 0.0
    %1490 = vmatprep.subr.mxu0 0.0
    %1491 = vmatpush1.msra.mxu0 0.0
    %1492 = vmatprep.subr.mxu0 0.0
    %1493 = vmatpush1.msra.mxu0 0.0
    %1494 = vmatprep.subr.mxu0 0.0
    %1495 = vmatpush1.msra.mxu0 0.0
    %1496 = vmatprep.subr.mxu0 0.0
    %1497 = vmatpush1.msra.mxu0 0.0
    %1498 = vmatprep.subr.mxu0 0.0
    %1499 = vmatpush1.msra.mxu0 0.0
    %1500 = vmatprep.subr.mxu0 0.0
    %1501 = vmatpush1.msra.mxu0 0.0
    %1502 = vmatprep.subr.mxu0 0.0
    %1503 = vmatpush1.msra.mxu0 0.0
    %1504 = vmatprep.subr.mxu0 0.0
    %1505 = vmatpush1.msra.mxu0 0.0
    %1506 = vmatprep.subr.mxu0 0.0
    %1507 = vmatpush1.msra.mxu0 0.0
    %1508 = vmatprep.subr.mxu0 0.0
    %1509 = vmatpush1.msra.mxu0 0.0
    %1510 = vmatprep.subr.mxu0 0.0
    %1511 = vmatpush1.msra.mxu0 0.0
    %1512 = vmatprep.subr.mxu0 0.0
    %1513 = vmatpush1.msra.mxu0 0.0
    %1514 = vmatprep.subr.mxu0 0.0
    %1515 = vmatpush1.msra.mxu0 0.0
    %1516 = vmatprep.subr.mxu0 0.0
    %1517 = vmatpush1.msra.mxu0 0.0
    %1518 = vmatprep.mubr.f32.mxu0 0.0
    %1519 = vmatmul.mubr.f32.gmra.mrb[0].mxu0 %v1452
    %v1520 = vpop.f32.mrb[0].mxu0
    %v1521 = vadd.f32 0.0, %v1520
    %v1522 = vpop.f32.mrb[0].mxu0
    %1523 = vdwg.mxu0
    %1524 = vrot.lane.b32.xlu0 %v274, 40
    %v1525 = vpop.permute.xlu0 %1524
    %v1528 = vsel %vm282, %v1447, 0
    %1530 = vmatprep.subr.mxu0 0.0
    %1531 = vmatpush1.msra.mxu0 %v1525
    %1532 = vmatprep.subr.mxu0 0.0
    %1533 = vmatpush1.msra.mxu0 0.0
    %1534 = vmatprep.subr.mxu0 0.0
    %1535 = vmatpush1.msra.mxu0 0.0
    %1536 = vmatprep.subr.mxu0 0.0
    %1537 = vmatpush1.msra.mxu0 0.0
    %1538 = vmatprep.subr.mxu0 0.0
    %1539 = vmatpush1.msra.mxu0 0.0
    %1540 = vmatprep.subr.mxu0 0.0
    %1541 = vmatpush1.msra.mxu0 0.0
    %1542 = vmatprep.subr.mxu0 0.0
    %1543 = vmatpush1.msra.mxu0 0.0
    %1544 = vmatprep.subr.mxu0 0.0
    %1545 = vmatpush1.msra.mxu0 0.0
    %1546 = vmatprep.subr.mxu0 0.0
    %1547 = vmatpush1.msra.mxu0 0.0
    %1548 = vmatprep.subr.mxu0 0.0
    %1549 = vmatpush1.msra.mxu0 0.0
    %1550 = vmatprep.subr.mxu0 0.0
    %1551 = vmatpush1.msra.mxu0 0.0
    %1552 = vmatprep.subr.mxu0 0.0
    %1553 = vmatpush1.msra.mxu0 0.0
    %1554 = vmatprep.subr.mxu0 0.0
    %1555 = vmatpush1.msra.mxu0 0.0
    %1556 = vmatprep.subr.mxu0 0.0
    %1557 = vmatpush1.msra.mxu0 0.0
    %1558 = vmatprep.subr.mxu0 0.0
    %1559 = vmatpush1.msra.mxu0 0.0
    %1560 = vmatprep.subr.mxu0 0.0
    %1561 = vmatpush1.msra.mxu0 0.0
    %1562 = vmatprep.subr.mxu0 0.0
    %1563 = vmatpush1.msra.mxu0 0.0
    %1564 = vmatprep.subr.mxu0 0.0
    %1565 = vmatpush1.msra.mxu0 0.0
    %1566 = vmatprep.subr.mxu0 0.0
    %1567 = vmatpush1.msra.mxu0 0.0
    %1568 = vmatprep.subr.mxu0 0.0
    %1569 = vmatpush1.msra.mxu0 0.0
    %1570 = vmatprep.subr.mxu0 0.0
    %1571 = vmatpush1.msra.mxu0 0.0
    %1572 = vmatprep.subr.mxu0 0.0
    %1573 = vmatpush1.msra.mxu0 0.0
    %1574 = vmatprep.subr.mxu0 0.0
    %1575 = vmatpush1.msra.mxu0 0.0
    %1576 = vmatprep.subr.mxu0 0.0
    %1577 = vmatpush1.msra.mxu0 0.0
    %1578 = vmatprep.subr.mxu0 0.0
    %1579 = vmatpush1.msra.mxu0 0.0
    %1580 = vmatprep.subr.mxu0 0.0
    %1581 = vmatpush1.msra.mxu0 0.0
    %1582 = vmatprep.subr.mxu0 0.0
    %1583 = vmatpush1.msra.mxu0 0.0
    %1584 = vmatprep.subr.mxu0 0.0
    %1585 = vmatpush1.msra.mxu0 0.0
    %1586 = vmatprep.subr.mxu0 0.0
    %1587 = vmatpush1.msra.mxu0 0.0
    %1588 = vmatprep.subr.mxu0 0.0
    %1589 = vmatpush1.msra.mxu0 0.0
    %1590 = vmatprep.subr.mxu0 0.0
    %1591 = vmatpush1.msra.mxu0 0.0
    %1592 = vmatprep.subr.mxu0 0.0
    %1593 = vmatpush1.msra.mxu0 0.0
    %1594 = vmatprep.mubr.f32.mxu0 0.0
    %1595 = vmatmul.mubr.f32.gmra.mrb[0].mxu0 %v1528
    %v1596 = vpop.f32.mrb[0].mxu0
    %v1597 = vadd.f32 0.0, %v1596
    %v1598 = vpop.f32.mrb[0].mxu0
    %1599 = vdwg.mxu0
    %1602 = vrot.lane.b32.xlu0 %v861, 8
    %v1603 = vpop.permute.xlu0 %1602
    %1604 = vrot.lane.b32.xlu0 %v937, 8
    %v1605 = vpop.permute.xlu0 %1604
    %1610 = vrot.lane.b32.xlu0 %v1191, 16
    %v1611 = vpop.permute.xlu0 %1610
    %1612 = vrot.lane.b32.xlu0 %v1267, 16
    %v1613 = vpop.permute.xlu0 %1612
    %1618 = vrot.lane.b32.xlu0 %v1521, 24
    %v1619 = vpop.permute.xlu0 %1618
    %1620 = vrot.lane.b32.xlu0 %v1597, 24
    %v1621 = vpop.permute.xlu0 %1620
    %v1624 = vsel %vm282, %v530, %v1603
    %v1625 = vsel %vm282, %v607, %v1605
    %vm1626 = vcmask 130048
    %v1627 = vsel %vm1626, %v1624, %v1611
    %v1628 = vsel %vm1626, %v1625, %v1613
    %vm1629 = vcmask 195584
    %v1630 = vsel %vm1629, %v1627, %v1619
    %v1631 = vsel %vm1629, %v1628, %v1621
    %v1633 = vlaneseq
    %v1634 = vshrl.u32 %v1633, 7
    %v1635 = vsub.s32 0, %v1634
    %v1636 = vrot.slane %v89, %v1635
    %v1639 = vsel %vm108, %v1630, 0
    %v1642 = vsel %vm108, %v1631, 0
    %1644 = vmatprep.subr.mxu0 0.0
    %1645 = vmatpush1.msra.mxu0 %v85
    %1646 = vmatprep.subr.mxu0 0.0
    %1647 = vmatpush1.msra.mxu0 %v86
    %1648 = vmatprep.subr.mxu0 0.0
    %1649 = vmatpush1.msra.mxu0 %v87
    %1650 = vmatprep.subr.mxu0 0.0
    %1651 = vmatpush1.msra.mxu0 %v88
    %1652 = vmatprep.subr.mxu0 0.0
    %1653 = vmatpush1.msra.mxu0 0.0
    %1654 = vmatprep.subr.mxu0 0.0
    %1655 = vmatpush1.msra.mxu0 0.0
    %1656 = vmatprep.subr.mxu0 0.0
    %1657 = vmatpush1.msra.mxu0 0.0
    %1658 = vmatprep.subr.mxu0 0.0
    %1659 = vmatpush1.msra.mxu0 0.0
    %1660 = vmatprep.subr.mxu0 0.0
    %1661 = vmatpush1.msra.mxu0 0.0
    %1662 = vmatprep.subr.mxu0 0.0
    %1663 = vmatpush1.msra.mxu0 0.0
    %1664 = vmatprep.subr.mxu0 0.0
    %1665 = vmatpush1.msra.mxu0 0.0
    %1666 = vmatprep.subr.mxu0 0.0
    %1667 = vmatpush1.msra.mxu0 0.0
    %1668 = vmatprep.subr.mxu0 0.0
    %1669 = vmatpush1.msra.mxu0 0.0
    %1670 = vmatprep.subr.mxu0 0.0
    %1671 = vmatpush1.msra.mxu0 0.0
    %1672 = vmatprep.subr.mxu0 0.0
    %1673 = vmatpush1.msra.mxu0 0.0
    %1674 = vmatprep.subr.mxu0 0.0
    %1675 = vmatpush1.msra.mxu0 0.0
    %1676 = vmatprep.subr.mxu0 0.0
    %1677 = vmatpush1.msra.mxu0 0.0
    %1678 = vmatprep.subr.mxu0 0.0
    %1679 = vmatpush1.msra.mxu0 0.0
    %1680 = vmatprep.subr.mxu0 0.0
    %1681 = vmatpush1.msra.mxu0 0.0
    %1682 = vmatprep.subr.mxu0 0.0
    %1683 = vmatpush1.msra.mxu0 0.0
    %1684 = vmatprep.subr.mxu0 0.0
    %1685 = vmatpush1.msra.mxu0 0.0
    %1686 = vmatprep.subr.mxu0 0.0
    %1687 = vmatpush1.msra.mxu0 0.0
    %1688 = vmatprep.subr.mxu0 0.0
    %1689 = vmatpush1.msra.mxu0 0.0
    %1690 = vmatprep.subr.mxu0 0.0
    %1691 = vmatpush1.msra.mxu0 0.0
    %1692 = vmatprep.subr.mxu0 0.0
    %1693 = vmatpush1.msra.mxu0 0.0
    %1694 = vmatprep.subr.mxu0 0.0
    %1695 = vmatpush1.msra.mxu0 0.0
    %1696 = vmatprep.subr.mxu0 0.0
    %1697 = vmatpush1.msra.mxu0 0.0
    %1698 = vmatprep.subr.mxu0 0.0
    %1699 = vmatpush1.msra.mxu0 0.0
    %1700 = vmatprep.subr.mxu0 0.0
    %1701 = vmatpush1.msra.mxu0 0.0
    %1702 = vmatprep.subr.mxu0 0.0
    %1703 = vmatpush1.msra.mxu0 0.0
    %1704 = vmatprep.subr.mxu0 0.0
    %1705 = vmatpush1.msra.mxu0 0.0
    %1706 = vmatprep.subr.mxu0 0.0
    %1707 = vmatpush1.msra.mxu0 0.0
    %1708 = vmatprep.mubr.f32.mxu0 0.0
    %1709 = vmatmul.mubr.f32.gmra.mrb[0].mxu0 %v1639
    %v1710 = vpop.f32.mrb[0].mxu0
    %v1711 = vadd.f32 %v1636, %v1710
    %v1712 = vpop.f32.mrb[0].mxu0
    %1713 = vmatprep.mubr.f32.mxu0 0.0
    %1714 = vmatmul.mubr.f32.gmra.mrb[0].mxu0 %v1642
    %v1715 = vpop.f32.mrb[0].mxu0
    %v1716 = vadd.f32 %v1636, %v1715
    %v1717 = vpop.f32.mrb[0].mxu0
    %1718 = vdwg.mxu0
    %v1719 = vadd.f32 %v76, %v1711
    %v1720 = vadd.f32 %v77, %v1716
    %v1721 = vsel %vm108, %v1719, 0.0
    %1722 = vadd.xlane.f32.xlu0 %v1721
    %v1723 = vpop.xlane.xlu0 %1722
    %v1724 = vsel %vm108, %v1720, 0.0
    %1725 = vadd.xlane.f32.xlu0 %v1724
    %v1726 = vpop.xlane.xlu0 %1725
    %v1727 = vrcp.pop 32.0
    %v1728 = vmul.f32 %v1723, %v1727
    %v1729 = vmul.f32 %v1726, %v1727
    %v1730 = vsub.f32 %v1719, %v1728
    %v1731 = vsub.f32 %v1720, %v1729
    %v1732 = vmul.f32 %v1730, %v1730
    %v1733 = vmul.f32 %v1731, %v1731
    %v1734 = vsel %vm108, %v1732, 0.0
    %1735 = vadd.xlane.f32.xlu0 %v1734
    %v1736 = vpop.xlane.xlu0 %1735
    %v1737 = vsel %vm108, %v1733, 0.0
    %1738 = vadd.xlane.f32.xlu0 %v1737
    %v1739 = vpop.xlane.xlu0 %1738
    %v1740 = vmul.f32 %v1736, %v1727
    %v1741 = vmul.f32 %v1739, %v1727
    %v1742 = vadd.f32 %v1740, 1e-05
    %v1743 = vadd.f32 %v1741, 1e-05
    %v1744 = vrsqrt.pop %v1742
    %v1745 = vrsqrt.pop %v1743
    %v1746 = vmul.f32 %v1730, %v1744
    %v1747 = vmul.f32 %v1731, %v1745
    %v1749 = vlaneseq
    %v1750 = vshrl.u32 %v1749, 7
    %v1751 = vsub.s32 0, %v1750
    %v1752 = vrot.slane %v104, %v1751
    %v1754 = vmul.f32 %v1746, %v1752
    %v1755 = vmul.f32 %v1747, %v1752
    %v1757 = vlaneseq
    %v1758 = vshrl.u32 %v1757, 7
    %v1759 = vsub.s32 0, %v1758
    %v1760 = vrot.slane %v105, %v1759
    %v1762 = vadd.f32 %v1754, %v1760
    %v1763 = vadd.f32 %v1755, %v1760
    %v1765 = vlaneseq
    %v1766 = vshrl.u32 %v1765, 7
    %v1767 = vsub.s32 0, %v1766
    %v1768 = vrot.slane %v94, %v1767
    %v1771 = vsel %vm108, %v1762, 0
    %v1774 = vsel %vm108, %v1763, 0
    %1776 = vmatprep.subr.mxu0 0.0
    %1777 = vmatpush1.msra.mxu0 %v90
    %1778 = vmatprep.subr.mxu0 0.0
    %1779 = vmatpush1.msra.mxu0 %v91
    %1780 = vmatprep.subr.mxu0 0.0
    %1781 = vmatpush1.msra.mxu0 %v92
    %1782 = vmatprep.subr.mxu0 0.0
    %1783 = vmatpush1.msra.mxu0 %v93
    %1784 = vmatprep.subr.mxu0 0.0
    %1785 = vmatpush1.msra.mxu0 0.0
    %1786 = vmatprep.subr.mxu0 0.0
    %1787 = vmatpush1.msra.mxu0 0.0
    %1788 = vmatprep.subr.mxu0 0.0
    %1789 = vmatpush1.msra.mxu0 0.0
    %1790 = vmatprep.subr.mxu0 0.0
    %1791 = vmatpush1.msra.mxu0 0.0
    %1792 = vmatprep.subr.mxu0 0.0
    %1793 = vmatpush1.msra.mxu0 0.0
    %1794 = vmatprep.subr.mxu0 0.0
    %1795 = vmatpush1.msra.mxu0 0.0
    %1796 = vmatprep.subr.mxu0 0.0
    %1797 = vmatpush1.msra.mxu0 0.0
    %1798 = vmatprep.subr.mxu0 0.0
    %1799 = vmatpush1.msra.mxu0 0.0
    %1800 = vmatprep.subr.mxu0 0.0
    %1801 = vmatpush1.msra.mxu0 0.0
    %1802 = vmatprep.subr.mxu0 0.0
    %1803 = vmatpush1.msra.mxu0 0.0
    %1804 = vmatprep.subr.mxu0 0.0
    %1805 = vmatpush1.msra.mxu0 0.0
    %1806 = vmatprep.subr.mxu0 0.0
    %1807 = vmatpush1.msra.mxu0 0.0
    %1808 = vmatprep.subr.mxu0 0.0
    %1809 = vmatpush1.msra.mxu0 0.0
    %1810 = vmatprep.subr.mxu0 0.0
    %1811 = vmatpush1.msra.mxu0 0.0
    %1812 = vmatprep.subr.mxu0 0.0
    %1813 = vmatpush1.msra.mxu0 0.0
    %1814 = vmatprep.subr.mxu0 0.0
    %1815 = vmatpush1.msra.mxu0 0.0
    %1816 = vmatprep.subr.mxu0 0.0
    %1817 = vmatpush1.msra.mxu0 0.0
    %1818 = vmatprep.subr.mxu0 0.0
    %1819 = vmatpush1.msra.mxu0 0.0
    %1820 = vmatprep.subr.mxu0 0.0
    %1821 = vmatpush1.msra.mxu0 0.0
    %1822 = vmatprep.subr.mxu0 0.0
    %1823 = vmatpush1.msra.mxu0 0.0
    %1824 = vmatprep.subr.mxu0 0.0
    %1825 = vmatpush1.msra.mxu0 0.0
    %1826 = vmatprep.subr.mxu0 0.0
    %1827 = vmatpush1.msra.mxu0 0.0
    %1828 = vmatprep.subr.mxu0 0.0
    %1829 = vmatpush1.msra.mxu0 0.0
    %1830 = vmatprep.subr.mxu0 0.0
    %1831 = vmatpush1.msra.mxu0 0.0
    %1832 = vmatprep.subr.mxu0 0.0
    %1833 = vmatpush1.msra.mxu0 0.0
    %1834 = vmatprep.subr.mxu0 0.0
    %1835 = vmatpush1.msra.mxu0 0.0
    %1836 = vmatprep.subr.mxu0 0.0
    %1837 = vmatpush1.msra.mxu0 0.0
    %1838 = vmatprep.subr.mxu0 0.0
    %1839 = vmatpush1.msra.mxu0 0.0
    %1840 = vmatprep.mubr.f32.mxu0 0.0
    %1841 = vmatmul.mubr.f32.gmra.mrb[0].mxu0 %v1771
    %v1842 = vpop.f32.mrb[0].mxu0
    %v1843 = vadd.f32 %v1768, %v1842
    %v1844 = vpop.f32.mrb[0].mxu0
    %1845 = vmatprep.mubr.f32.mxu0 0.0
    %1846 = vmatmul.mubr.f32.gmra.mrb[0].mxu0 %v1774
    %v1847 = vpop.f32.mrb[0].mxu0
    %v1848 = vadd.f32 %v1768, %v1847
    %v1849 = vpop.f32.mrb[0].mxu0
    %1850 = vdwg.mxu0
    %v1851 = vmax.f32 %v1843, 0.0
    %v1852 = vmax.f32 %v1848, 0.0
    %v1854 = vlaneseq
    %v1855 = vshrl.u32 %v1854, 7
    %v1856 = vsub.s32 0, %v1855
    %v1857 = vrot.slane %v103, %v1856
    %vm1859 = vcmask 523264
    %v1861 = vsel %vm1859, %v1851, 0
    %v1864 = vsel %vm1859, %v1852, 0
    %1866 = vmatprep.subr.mxu0 0.0
    %1867 = vmatpush1.msra.mxu0 %v95
    %1868 = vmatprep.subr.mxu0 0.0
    %1869 = vmatpush1.msra.mxu0 %v96
    %1870 = vmatprep.subr.mxu0 0.0
    %1871 = vmatpush1.msra.mxu0 %v97
    %1872 = vmatprep.subr.mxu0 0.0
    %1873 = vmatpush1.msra.mxu0 %v98
    %1874 = vmatprep.subr.mxu0 0.0
    %1875 = vmatpush1.msra.mxu0 %v99
    %1876 = vmatprep.subr.mxu0 0.0
    %1877 = vmatpush1.msra.mxu0 %v100
    %1878 = vmatprep.subr.mxu0 0.0
    %1879 = vmatpush1.msra.mxu0 %v101
    %1880 = vmatprep.subr.mxu0 0.0
    %1881 = vmatpush1.msra.mxu0 %v102
    %1882 = vmatprep.subr.mxu0 0.0
    %1883 = vmatpush1.msra.mxu0 0.0
    %1884 = vmatprep.subr.mxu0 0.0
    %1885 = vmatpush1.msra.mxu0 0.0
    %1886 = vmatprep.subr.mxu0 0.0
    %1887 = vmatpush1.msra.mxu0 0.0
    %1888 = vmatprep.subr.mxu0 0.0
    %1889 = vmatpush1.msra.mxu0 0.0
    %1890 = vmatprep.subr.mxu0 0.0
    %1891 = vmatpush1.msra.mxu0 0.0
    %1892 = vmatprep.subr.mxu0 0.0
    %1893 = vmatpush1.msra.mxu0 0.0
    %1894 = vmatprep.subr.mxu0 0.0
    %1895 = vmatpush1.msra.mxu0 0.0
    %1896 = vmatprep.subr.mxu0 0.0
    %1897 = vmatpush1.msra.mxu0 0.0
    %1898 = vmatprep.subr.mxu0 0.0
    %1899 = vmatpush1.msra.mxu0 0.0
    %1900 = vmatprep.subr.mxu0 0.0
    %1901 = vmatpush1.msra.mxu0 0.0
    %1902 = vmatprep.subr.mxu0 0.0
    %1903 = vmatpush1.msra.mxu0 0.0
    %1904 = vmatprep.subr.mxu0 0.0
    %1905 = vmatpush1.msra.mxu0 0.0
    %1906 = vmatprep.subr.mxu0 0.0
    %1907 = vmatpush1.msra.mxu0 0.0
    %1908 = vmatprep.subr.mxu0 0.0
    %1909 = vmatpush1.msra.mxu0 0.0
    %1910 = vmatprep.subr.mxu0 0.0
    %1911 = vmatpush1.msra.mxu0 0.0
    %1912 = vmatprep.subr.mxu0 0.0
    %1913 = vmatpush1.msra.mxu0 0.0
    %1914 = vmatprep.subr.mxu0 0.0
    %1915 = vmatpush1.msra.mxu0 0.0
    %1916 = vmatprep.subr.mxu0 0.0
    %1917 = vmatpush1.msra.mxu0 0.0
    %1918 = vmatprep.subr.mxu0 0.0
    %1919 = vmatpush1.msra.mxu0 0.0
    %1920 = vmatprep.subr.mxu0 0.0
    %1921 = vmatpush1.msra.mxu0 0.0
    %1922 = vmatprep.subr.mxu0 0.0
    %1923 = vmatpush1.msra.mxu0 0.0
    %1924 = vmatprep.subr.mxu0 0.0
    %1925 = vmatpush1.msra.mxu0 0.0
    %1926 = vmatprep.subr.mxu0 0.0
    %1927 = vmatpush1.msra.mxu0 0.0
    %1928 = vmatprep.subr.mxu0 0.0
    %1929 = vmatpush1.msra.mxu0 0.0
    %1930 = vmatprep.mubr.f32.mxu0 0.0
    %1931 = vmatmul.mubr.f32.gmra.mrb[0].mxu0 %v1861
    %v1932 = vpop.f32.mrb[0].mxu0
    %v1933 = vadd.f32 %v1857, %v1932
    %v1934 = vpop.f32.mrb[0].mxu0
    %1935 = vmatprep.mubr.f32.mxu0 0.0
    %1936 = vmatmul.mubr.f32.gmra.mrb[0].mxu0 %v1864
    %v1937 = vpop.f32.mrb[0].mxu0
    %v1938 = vadd.f32 %v1857, %v1937
    %v1939 = vpop.f32.mrb[0].mxu0
    %1940 = vdwg.mxu0
    %v1941 = vadd.f32 %v1762, %v1933
    %v1942 = vadd.f32 %v1763, %v1938
    %v1943 = vsel %vm108, %v1941, 0.0
    %1944 = vadd.xlane.f32.xlu0 %v1943
    %v1945 = vpop.xlane.xlu0 %1944
    %v1946 = vsel %vm108, %v1942, 0.0
    %1947 = vadd.xlane.f32.xlu0 %v1946
    %v1948 = vpop.xlane.xlu0 %1947
    %v1949 = vmul.f32 %v1945, %v1727
    %v1950 = vmul.f32 %v1948, %v1727
    %v1951 = vsub.f32 %v1941, %v1949
    %v1952 = vsub.f32 %v1942, %v1950
    %v1953 = vmul.f32 %v1951, %v1951
    %v1954 = vmul.f32 %v1952, %v1952
    %v1955 = vsel %vm108, %v1953, 0.0
    %1956 = vadd.xlane.f32.xlu0 %v1955
    %v1957 = vpop.xlane.xlu0 %1956
    %v1958 = vsel %vm108, %v1954, 0.0
    %1959 = vadd.xlane.f32.xlu0 %v1958
    %v1960 = vpop.xlane.xlu0 %1959
    %v1961 = vmul.f32 %v1957, %v1727
    %v1962 = vmul.f32 %v1960, %v1727
    %v1963 = vadd.f32 %v1961, 1e-05
    %v1964 = vadd.f32 %v1962, 1e-05
    %v1965 = vrsqrt.pop %v1963
    %v1966 = vrsqrt.pop %v1964
    %v1967 = vmul.f32 %v1951, %v1965
    %v1968 = vmul.f32 %v1952, %v1966
    %v1970 = vlaneseq
    %v1971 = vshrl.u32 %v1970, 7
    %v1972 = vsub.s32 0, %v1971
    %v1973 = vrot.slane %v106, %v1972
    %v1975 = vmul.f32 %v1967, %v1973
    %v1976 = vmul.f32 %v1968, %v1973
    %v1978 = vlaneseq
    %v1979 = vshrl.u32 %v1978, 7
    %v1980 = vsub.s32 0, %v1979
    %v1981 = vrot.slane %v107, %v1980
    %v1983 = vadd.f32 %v1975, %v1981
    %v1984 = vadd.f32 %v1976, %v1981
    %v1986 = vsel %vm108, %v1983, 0
    %v1989 = vsel %vm108, %v1984, 0
    %1991 = vmatprep.subr.mxu0 0.0
    %1992 = vmatpush1.msra.mxu0 %v80
    %1993 = vmatprep.subr.mxu0 0.0
    %1994 = vmatpush1.msra.mxu0 %v81
    %1995 = vmatprep.subr.mxu0 0.0
    %1996 = vmatpush1.msra.mxu0 %v82
    %1997 = vmatprep.subr.mxu0 0.0
    %1998 = vmatpush1.msra.mxu0 %v83
    %1999 = vmatprep.subr.mxu0 0.0
    %2000 = vmatpush1.msra.mxu0 0.0
    %2001 = vmatprep.subr.mxu0 0.0
    %2002 = vmatpush1.msra.mxu0 0.0
    %2003 = vmatprep.subr.mxu0 0.0
    %2004 = vmatpush1.msra.mxu0 0.0
    %2005 = vmatprep.subr.mxu0 0.0
    %2006 = vmatpush1.msra.mxu0 0.0
    %2007 = vmatprep.subr.mxu0 0.0
    %2008 = vmatpush1.msra.mxu0 0.0
    %2009 = vmatprep.subr.mxu0 0.0
    %2010 = vmatpush1.msra.mxu0 0.0
    %2011 = vmatprep.subr.mxu0 0.0
    %2012 = vmatpush1.msra.mxu0 0.0
    %2013 = vmatprep.subr.mxu0 0.0
    %2014 = vmatpush1.msra.mxu0 0.0
    %2015 = vmatprep.subr.mxu0 0.0
    %2016 = vmatpush1.msra.mxu0 0.0
    %2017 = vmatprep.subr.mxu0 0.0
    %2018 = vmatpush1.msra.mxu0 0.0
    %2019 = vmatprep.subr.mxu0 0.0
    %2020 = vmatpush1.msra.mxu0 0.0
    %2021 = vmatprep.subr.mxu0 0.0
    %2022 = vmatpush1.msra.mxu0 0.0
    %2023 = vmatprep.subr.mxu0 0.0
    %2024 = vmatpush1.msra.mxu0 0.0
    %2025 = vmatprep.subr.mxu0 0.0
    %2026 = vmatpush1.msra.mxu0 0.0
    %2027 = vmatprep.subr.mxu0 0.0
    %2028 = vmatpush1.msra.mxu0 0.0
    %2029 = vmatprep.subr.mxu0 0.0
    %2030 = vmatpush1.msra.mxu0 0.0
    %2031 = vmatprep.subr.mxu0 0.0
    %2032 = vmatpush1.msra.mxu0 0.0
    %2033 = vmatprep.subr.mxu0 0.0
    %2034 = vmatpush1.msra.mxu0 0.0
    %2035 = vmatprep.subr.mxu0 0.0
    %2036 = vmatpush1.msra.mxu0 0.0
    %2037 = vmatprep.subr.mxu0 0.0
    %2038 = vmatpush1.msra.mxu0 0.0
    %2039 = vmatprep.subr.mxu0 0.0
    %2040 = vmatpush1.msra.mxu0 0.0
    %2041 = vmatprep.subr.mxu0 0.0
    %2042 = vmatpush1.msra.mxu0 0.0
    %2043 = vmatprep.subr.mxu0 0.0
    %2044 = vmatpush1.msra.mxu0 0.0
    %2045 = vmatprep.subr.mxu0 0.0
    %2046 = vmatpush1.msra.mxu0 0.0
    %2047 = vmatprep.subr.mxu0 0.0
    %2048 = vmatpush1.msra.mxu0 0.0
    %2049 = vmatprep.subr.mxu0 0.0
    %2050 = vmatpush1.msra.mxu0 0.0
    %2051 = vmatprep.subr.mxu0 0.0
    %2052 = vmatpush1.msra.mxu0 0.0
    %2053 = vmatprep.subr.mxu0 0.0
    %2054 = vmatpush1.msra.mxu0 0.0
    %2055 = vmatprep.mubr.f32.mxu0 0.0
    %2056 = vmatmul.mubr.f32.gmra.mrb[0].mxu0 %v1986
    %v2057 = vpop.f32.mrb[0].mxu0
    %v2058 = vadd.f32 %v194, %v2057
    %v2059 = vpop.f32.mrb[0].mxu0
    %2060 = vmatprep.mubr.f32.mxu0 0.0
    %2061 = vmatmul.mubr.f32.gmra.mrb[0].mxu0 %v1989
    %v2062 = vpop.f32.mrb[0].mxu0
    %v2063 = vadd.f32 %v194, %v2062
    %v2064 = vpop.f32.mrb[0].mxu0
    %2065 = vdwg.mxu0
    %v2066 = vadd.f32 %v2058, %v182
    %v2067 = vadd.f32 %v2063, %v187
    %2069 = vrot.lane.b32.xlu0 %v2066, 96
    %v2070 = vpop.permute.xlu0 %2069
    %v2071 = vsel %vm282, %v2066, 0
    %v2073 = vsel %vm282, %v2070, 0
    %2075 = vmatprep.subr.mxu0 0.0
    %2076 = vmatpush1.xpose.msra.mxu0 %v2073
    %2077 = vmatprep.subr.mxu0 0.0
    %2078 = vmatpush1.xpose.msra.mxu0 0.0
    %2079 = vmatprep.subr.mxu0 0.0
    %2080 = vmatpush1.xpose.msra.mxu0 0.0
    %2081 = vmatprep.subr.mxu0 0.0
    %2082 = vmatpush1.xpose.msra.mxu0 0.0
    %2083 = vmatprep.subr.mxu0 0.0
    %2084 = vmatpush1.xpose.msra.mxu0 0.0
    %2085 = vmatprep.subr.mxu0 0.0
    %2086 = vmatpush1.xpose.msra.mxu0 0.0
    %2087 = vmatprep.subr.mxu0 0.0
    %2088 = vmatpush1.xpose.msra.mxu0 0.0
    %2089 = vmatprep.subr.mxu0 0.0
    %2090 = vmatpush1.xpose.msra.mxu0 0.0
    %2091 = vmatprep.subr.mxu0 0.0
    %2092 = vmatpush1.xpose.msra.mxu0 0.0
    %2093 = vmatprep.subr.mxu0 0.0
    %2094 = vmatpush1.xpose.msra.mxu0 0.0
    %2095 = vmatprep.subr.mxu0 0.0
    %2096 = vmatpush1.xpose.msra.mxu0 0.0
    %2097 = vmatprep.subr.mxu0 0.0
    %2098 = vmatpush1.xpose.msra.mxu0 0.0
    %2099 = vmatprep.subr.mxu0 0.0
    %2100 = vmatpush1.xpose.msra.mxu0 0.0
    %2101 = vmatprep.subr.mxu0 0.0
    %2102 = vmatpush1.xpose.msra.mxu0 0.0
    %2103 = vmatprep.subr.mxu0 0.0
    %2104 = vmatpush1.xpose.msra.mxu0 0.0
    %2105 = vmatprep.subr.mxu0 0.0
    %2106 = vmatpush1.xpose.msra.mxu0 0.0
    %2107 = vmatprep.subr.mxu0 0.0
    %2108 = vmatpush1.xpose.msra.mxu0 0.0
    %2109 = vmatprep.subr.mxu0 0.0
    %2110 = vmatpush1.xpose.msra.mxu0 0.0
    %2111 = vmatprep.subr.mxu0 0.0
    %2112 = vmatpush1.xpose.msra.mxu0 0.0
    %2113 = vmatprep.subr.mxu0 0.0
    %2114 = vmatpush1.xpose.msra.mxu0 0.0
    %2115 = vmatprep.subr.mxu0 0.0
    %2116 = vmatpush1.xpose.msra.mxu0 0.0
    %2117 = vmatprep.subr.mxu0 0.0
    %2118 = vmatpush1.xpose.msra.mxu0 0.0
    %2119 = vmatprep.subr.mxu0 0.0
    %2120 = vmatpush1.xpose.msra.mxu0 0.0
    %2121 = vmatprep.subr.mxu0 0.0
    %2122 = vmatpush1.xpose.msra.mxu0 0.0
    %2123 = vmatprep.subr.mxu0 0.0
    %2124 = vmatpush1.xpose.msra.mxu0 0.0
    %2125 = vmatprep.subr.mxu0 0.0
    %2126 = vmatpush1.xpose.msra.mxu0 0.0
    %2127 = vmatprep.subr.mxu0 0.0
    %2128 = vmatpush1.xpose.msra.mxu0 0.0
    %2129 = vmatprep.subr.mxu0 0.0
    %2130 = vmatpush1.xpose.msra.mxu0 0.0
    %2131 = vmatprep.subr.mxu0 0.0
    %2132 = vmatpush1.xpose.msra.mxu0 0.0
    %2133 = vmatprep.subr.mxu0 0.0
    %2134 = vmatpush1.xpose.msra.mxu0 0.0
    %2135 = vmatprep.subr.mxu0 0.0
    %2136 = vmatpush1.xpose.msra.mxu0 0.0
    %2137 = vmatprep.subr.mxu0 0.0
    %2138 = vmatpush1.xpose.msra.mxu0 0.0
    %2139 = vmatprep.mubr.f32.mxu0 0.0
    %2140 = vmatmul.mubr.f32.gmra.mrb[0].mxu0 %v2071
    %v2141 = vpop.f32.mrb[0].mxu0
    %v2142 = vadd.f32 0.0, %v2141
    %v2143 = vpop.f32.mrb[0].mxu0
    %2144 = vdwg.mxu0
    %2146 = vrot.lane.b32.xlu0 %v2067, 96
    %v2147 = vpop.permute.xlu0 %2146
    %v2148 = vsel %vm282, %v2067, 0
    %v2150 = vsel %vm282, %v2147, 0
    %2152 = vmatprep.subr.mxu0 0.0
    %2153 = vmatpush1.xpose.msra.mxu0 %v2150
    %2154 = vmatprep.subr.mxu0 0.0
    %2155 = vmatpush1.xpose.msra.mxu0 0.0
    %2156 = vmatprep.subr.mxu0 0.0
    %2157 = vmatpush1.xpose.msra.mxu0 0.0
    %2158 = vmatprep.subr.mxu0 0.0
    %2159 = vmatpush1.xpose.msra.mxu0 0.0
    %2160 = vmatprep.subr.mxu0 0.0
    %2161 = vmatpush1.xpose.msra.mxu0 0.0
    %2162 = vmatprep.subr.mxu0 0.0
    %2163 = vmatpush1.xpose.msra.mxu0 0.0
    %2164 = vmatprep.subr.mxu0 0.0
    %2165 = vmatpush1.xpose.msra.mxu0 0.0
    %2166 = vmatprep.subr.mxu0 0.0
    %2167 = vmatpush1.xpose.msra.mxu0 0.0
    %2168 = vmatprep.subr.mxu0 0.0
    %2169 = vmatpush1.xpose.msra.mxu0 0.0
    %2170 = vmatprep.subr.mxu0 0.0
    %2171 = vmatpush1.xpose.msra.mxu0 0.0
    %2172 = vmatprep.subr.mxu0 0.0
    %2173 = vmatpush1.xpose.msra.mxu0 0.0
    %2174 = vmatprep.subr.mxu0 0.0
    %2175 = vmatpush1.xpose.msra.mxu0 0.0
    %2176 = vmatprep.subr.mxu0 0.0
    %2177 = vmatpush1.xpose.msra.mxu0 0.0
    %2178 = vmatprep.subr.mxu0 0.0
    %2179 = vmatpush1.xpose.msra.mxu0 0.0
    %2180 = vmatprep.subr.mxu0 0.0
    %2181 = vmatpush1.xpose.msra.mxu0 0.0
    %2182 = vmatprep.subr.mxu0 0.0
    %2183 = vmatpush1.xpose.msra.mxu0 0.0
    %2184 = vmatprep.subr.mxu0 0.0
    %2185 = vmatpush1.xpose.msra.mxu0 0.0
    %2186 = vmatprep.subr.mxu0 0.0
    %2187 = vmatpush1.xpose.msra.mxu0 0.0
    %2188 = vmatprep.subr.mxu0 0.0
    %2189 = vmatpush1.xpose.msra.mxu0 0.0
    %2190 = vmatprep.subr.mxu0 0.0
    %2191 = vmatpush1.xpose.msra.mxu0 0.0
    %2192 = vmatprep.subr.mxu0 0.0
    %2193 = vmatpush1.xpose.msra.mxu0 0.0
    %2194 = vmatprep.subr.mxu0 0.0
    %2195 = vmatpush1.xpose.msra.mxu0 0.0
    %2196 = vmatprep.subr.mxu0 0.0
    %2197 = vmatpush1.xpose.msra.mxu0 0.0
    %2198 = vmatprep.subr.mxu0 0.0
    %2199 = vmatpush1.xpose.msra.mxu0 0.0
    %2200 = vmatprep.subr.mxu0 0.0
    %2201 = vmatpush1.xpose.msra.mxu0 0.0
    %2202 = vmatprep.subr.mxu0 0.0
    %2203 = vmatpush1.xpose.msra.mxu0 0.0
    %2204 = vmatprep.subr.mxu0 0.0
    %2205 = vmatpush1.xpose.msra.mxu0 0.0
    %2206 = vmatprep.subr.mxu0 0.0
    %2207 = vmatpush1.xpose.msra.mxu0 0.0
    %2208 = vmatprep.subr.mxu0 0.0
    %2209 = vmatpush1.xpose.msra.mxu0 0.0
    %2210 = vmatprep.subr.mxu0 0.0
    %2211 = vmatpush1.xpose.msra.mxu0 0.0
    %2212 = vmatprep.subr.mxu0 0.0
    %2213 = vmatpush1.xpose.msra.mxu0 0.0
    %2214 = vmatprep.subr.mxu0 0.0
    %2215 = vmatpush1.xpose.msra.mxu0 0.0
    %2216 = vmatprep.mubr.f32.mxu0 0.0
    %2217 = vmatmul.mubr.f32.gmra.mrb[0].mxu0 %v2148
    %v2218 = vpop.f32.mrb[0].mxu0
    %v2219 = vadd.f32 0.0, %v2218
    %v2220 = vpop.f32.mrb[0].mxu0
    %2221 = vdwg.mxu0
    %v2222 = vsel %vm282, %v2142, -inf
    %2223 = vmax.xlane.f32.xlu0 %v2222
    %v2224 = vpop.xlane.xlu0 %2223
    %v2225 = vsel %vm282, %v2219, -inf
    %2226 = vmax.xlane.f32.xlu0 %v2225
    %v2227 = vpop.xlane.xlu0 %2226
    %v2228 = vsub.f32 %v2142, %v2224
    %v2229 = vsub.f32 %v2219, %v2227
    %v2230 = vmul.f32 %v2228, 1.442695
    %v2231 = vpow.pop %v2230
    %v2232 = vmul.f32 %v2229, 1.442695
    %v2233 = vpow.pop %v2232
    %v2234 = vsel %vm282, %v2231, 0.0
    %2235 = vadd.xlane.f32.xlu0 %v2234
    %v2236 = vpop.xlane.xlu0 %2235
    %v2237 = vsel %vm282, %v2233, 0.0
    %2238 = vadd.xlane.f32.xlu0 %v2237
    %v2239 = vpop.xlane.xlu0 %2238
    %v2240 = vrcp.pop %v2236
    %v2241 = vrcp.pop %v2239
    %v2242 = vmul.f32 %v2231, %v2240
    %v2243 = vmul.f32 %v2233, %v2241
    %2245 = vrot.lane.b32.xlu0 %v2058, 64
    %v2246 = vpop.permute.xlu0 %2245
    %v2249 = vsel %vm282, %v2242, 0
    %2251 = vmatprep.subr.mxu0 0.0
    %2252 = vmatpush1.msra.mxu0 %v2246
    %2253 = vmatprep.subr.mxu0 0.0
    %2254 = vmatpush1.msra.mxu0 0.0
    %2255 = vmatprep.subr.mxu0 0.0
    %2256 = vmatpush1.msra.mxu0 0.0
    %2257 = vmatprep.subr.mxu0 0.0
    %2258 = vmatpush1.msra.mxu0 0.0
    %2259 = vmatprep.subr.mxu0 0.0
    %2260 = vmatpush1.msra.mxu0 0.0
    %2261 = vmatprep.subr.mxu0 0.0
    %2262 = vmatpush1.msra.mxu0 0.0
    %2263 = vmatprep.subr.mxu0 0.0
    %2264 = vmatpush1.msra.mxu0 0.0
    %2265 = vmatprep.subr.mxu0 0.0
    %2266 = vmatpush1.msra.mxu0 0.0
    %2267 = vmatprep.subr.mxu0 0.0
    %2268 = vmatpush1.msra.mxu0 0.0
    %2269 = vmatprep.subr.mxu0 0.0
    %2270 = vmatpush1.msra.mxu0 0.0
    %2271 = vmatprep.subr.mxu0 0.0
    %2272 = vmatpush1.msra.mxu0 0.0
    %2273 = vmatprep.subr.mxu0 0.0
    %2274 = vmatpush1.msra.mxu0 0.0
    %2275 = vmatprep.subr.mxu0 0.0
    %2276 = vmatpush1.msra.mxu0 0.0
    %2277 = vmatprep.subr.mxu0 0.0
    %2278 = vmatpush1.msra.mxu0 0.0
    %2279 = vmatprep.subr.mxu0 0.0
    %2280 = vmatpush1.msra.mxu0 0.0
    %2281 = vmatprep.subr.mxu0 0.0
    %2282 = vmatpush1.msra.mxu0 0.0
    %2283 = vmatprep.subr.mxu0 0.0
    %2284 = vmatpush1.msra.mxu0 0.0
    %2285 = vmatprep.subr.mxu0 0.0
    %2286 = vmatpush1.msra.mxu0 0.0
    %2287 = vmatprep.subr.mxu0 0.0
    %2288 = vmatpush1.msra.mxu0 0.0
    %2289 = vmatprep.subr.mxu0 0.0
    %2290 = vmatpush1.msra.mxu0 0.0
    %2291 = vmatprep.subr.mxu0 0.0
    %2292 = vmatpush1.msra.mxu0 0.0
    %2293 = vmatprep.subr.mxu0 0.0
    %2294 = vmatpush1.msra.mxu0 0.0
    %2295 = vmatprep.subr.mxu0 0.0
    %2296 = vmatpush1.msra.mxu0 0.0
    %2297 = vmatprep.subr.mxu0 0.0
    %2298 = vmatpush1.msra.mxu0 0.0
    %2299 = vmatprep.subr.mxu0 0.0
    %2300 = vmatpush1.msra.mxu0 0.0
    %2301 = vmatprep.subr.mxu0 0.0
    %2302 = vmatpush1.msra.mxu0 0.0
    %2303 = vmatprep.subr.mxu0 0.0
    %2304 = vmatpush1.msra.mxu0 0.0
    %2305 = vmatprep.subr.mxu0 0.0
    %2306 = vmatpush1.msra.mxu0 0.0
    %2307 = vmatprep.subr.mxu0 0.0
    %2308 = vmatpush1.msra.mxu0 0.0
    %2309 = vmatprep.subr.mxu0 0.0
    %2310 = vmatpush1.msra.mxu0 0.0
    %2311 = vmatprep.subr.mxu0 0.0
    %2312 = vmatpush1.msra.mxu0 0.0
    %2313 = vmatprep.subr.mxu0 0.0
    %2314 = vmatpush1.msra.mxu0 0.0
    %2315 = vmatprep.mubr.f32.mxu0 0.0
    %2316 = vmatmul.mubr.f32.gmra.mrb[0].mxu0 %v2249
    %v2317 = vpop.f32.mrb[0].mxu0
    %v2318 = vadd.f32 0.0, %v2317
    %v2319 = vpop.f32.mrb[0].mxu0
    %2320 = vdwg.mxu0
    %2322 = vrot.lane.b32.xlu0 %v2063, 64
    %v2323 = vpop.permute.xlu0 %2322
    %v2326 = vsel %vm282, %v2243, 0
    %2328 = vmatprep.subr.mxu0 0.0
    %2329 = vmatpush1.msra.mxu0 %v2323
    %2330 = vmatprep.subr.mxu0 0.0
    %2331 = vmatpush1.msra.mxu0 0.0
    %2332 = vmatprep.subr.mxu0 0.0
    %2333 = vmatpush1.msra.mxu0 0.0
    %2334 = vmatprep.subr.mxu0 0.0
    %2335 = vmatpush1.msra.mxu0 0.0
    %2336 = vmatprep.subr.mxu0 0.0
    %2337 = vmatpush1.msra.mxu0 0.0
    %2338 = vmatprep.subr.mxu0 0.0
    %2339 = vmatpush1.msra.mxu0 0.0
    %2340 = vmatprep.subr.mxu0 0.0
    %2341 = vmatpush1.msra.mxu0 0.0
    %2342 = vmatprep.subr.mxu0 0.0
    %2343 = vmatpush1.msra.mxu0 0.0
    %2344 = vmatprep.subr.mxu0 0.0
    %2345 = vmatpush1.msra.mxu0 0.0
    %2346 = vmatprep.subr.mxu0 0.0
    %2347 = vmatpush1.msra.mxu0 0.0
    %2348 = vmatprep.subr.mxu0 0.0
    %2349 = vmatpush1.msra.mxu0 0.0
    %2350 = vmatprep.subr.mxu0 0.0
    %2351 = vmatpush1.msra.mxu0 0.0
    %2352 = vmatprep.subr.mxu0 0.0
    %2353 = vmatpush1.msra.mxu0 0.0
    %2354 = vmatprep.subr.mxu0 0.0
    %2355 = vmatpush1.msra.mxu0 0.0
    %2356 = vmatprep.subr.mxu0 0.0
    %2357 = vmatpush1.msra.mxu0 0.0
    %2358 = vmatprep.subr.mxu0 0.0
    %2359 = vmatpush1.msra.mxu0 0.0
    %2360 = vmatprep.subr.mxu0 0.0
    %2361 = vmatpush1.msra.mxu0 0.0
    %2362 = vmatprep.subr.mxu0 0.0
    %2363 = vmatpush1.msra.mxu0 0.0
    %2364 = vmatprep.subr.mxu0 0.0
    %2365 = vmatpush1.msra.mxu0 0.0
    %2366 = vmatprep.subr.mxu0 0.0
    %2367 = vmatpush1.msra.mxu0 0.0
    %2368 = vmatprep.subr.mxu0 0.0
    %2369 = vmatpush1.msra.mxu0 0.0
    %2370 = vmatprep.subr.mxu0 0.0
    %2371 = vmatpush1.msra.mxu0 0.0
    %2372 = vmatprep.subr.mxu0 0.0
    %2373 = vmatpush1.msra.mxu0 0.0
    %2374 = vmatprep.subr.mxu0 0.0
    %2375 = vmatpush1.msra.mxu0 0.0
    %2376 = vmatprep.subr.mxu0 0.0
    %2377 = vmatpush1.msra.mxu0 0.0
    %2378 = vmatprep.subr.mxu0 0.0
    %2379 = vmatpush1.msra.mxu0 0.0
    %2380 = vmatprep.subr.mxu0 0.0
    %2381 = vmatpush1.msra.mxu0 0.0
    %2382 = vmatprep.subr.mxu0 0.0
    %2383 = vmatpush1.msra.mxu0 0.0
    %2384 = vmatprep.subr.mxu0 0.0
    %2385 = vmatpush1.msra.mxu0 0.0
    %2386 = vmatprep.subr.mxu0 0.0
    %2387 = vmatpush1.msra.mxu0 0.0
    %2388 = vmatprep.subr.mxu0 0.0
    %2389 = vmatpush1.msra.mxu0 0.0
    %2390 = vmatprep.subr.mxu0 0.0
    %2391 = vmatpush1.msra.mxu0 0.0
    %2392 = vmatprep.mubr.f32.mxu0 0.0
    %2393 = vmatmul.mubr.f32.gmra.mrb[0].mxu0 %v2326
    %v2394 = vpop.f32.mrb[0].mxu0
    %v2395 = vadd.f32 0.0, %v2394
    %v2396 = vpop.f32.mrb[0].mxu0
    %2397 = vdwg.mxu0
    %2398 = vrot.lane.b32.xlu0 %v2066, 120
    %v2399 = vpop.permute.xlu0 %2398
    %2400 = vrot.lane.b32.xlu0 %v2066, 88
    %v2401 = vpop.permute.xlu0 %2400
    %v2402 = vsel %vm282, %v2399, 0
    %v2404 = vsel %vm282, %v2401, 0
    %2406 = vmatprep.subr.mxu0 0.0
    %2407 = vmatpush1.xpose.msra.mxu0 %v2404
    %2408 = vmatprep.subr.mxu0 0.0
    %2409 = vmatpush1.xpose.msra.mxu0 0.0
    %2410 = vmatprep.subr.mxu0 0.0
    %2411 = vmatpush1.xpose.msra.mxu0 0.0
    %2412 = vmatprep.subr.mxu0 0.0
    %2413 = vmatpush1.xpose.msra.mxu0 0.0
    %2414 = vmatprep.subr.mxu0 0.0
    %2415 = vmatpush1.xpose.msra.mxu0 0.0
    %2416 = vmatprep.subr.mxu0 0.0
    %2417 = vmatpush1.xpose.msra.mxu0 0.0
    %2418 = vmatprep.subr.mxu0 0.0
    %2419 = vmatpush1.xpose.msra.mxu0 0.0
    %2420 = vmatprep.subr.mxu0 0.0
    %2421 = vmatpush1.xpose.msra.mxu0 0.0
    %2422 = vmatprep.subr.mxu0 0.0
    %2423 = vmatpush1.xpose.msra.mxu0 0.0
    %2424 = vmatprep.subr.mxu0 0.0
    %2425 = vmatpush1.xpose.msra.mxu0 0.0
    %2426 = vmatprep.subr.mxu0 0.0
    %2427 = vmatpush1.xpose.msra.mxu0 0.0
    %2428 = vmatprep.subr.mxu0 0.0
    %2429 = vmatpush1.xpose.msra.mxu0 0.0
    %2430 = vmatprep.subr.mxu0 0.0
    %2431 = vmatpush1.xpose.msra.mxu0 0.0
    %2432 = vmatprep.subr.mxu0 0.0
    %2433 = vmatpush1.xpose.msra.mxu0 0.0
    %2434 = vmatprep.subr.mxu0 0.0
    %2435 = vmatpush1.xpose.msra.mxu0 0.0
    %2436 = vmatprep.subr.mxu0 0.0
    %2437 = vmatpush1.xpose.msra.mxu0 0.0
    %2438 = vmatprep.subr.mxu0 0.0
    %2439 = vmatpush1.xpose.msra.mxu0 0.0
    %2440 = vmatprep.subr.mxu0 0.0
    %2441 = vmatpush1.xpose.msra.mxu0 0.0
    %2442 = vmatprep.subr.mxu0 0.0
    %2443 = vmatpush1.xpose.msra.mxu0 0.0
    %2444 = vmatprep.subr.mxu0 0.0
    %2445 = vmatpush1.xpose.msra.mxu0 0.0
    %2446 = vmatprep.subr.mxu0 0.0
    %2447 = vmatpush1.xpose.msra.mxu0 0.0
    %2448 = vmatprep.subr.mxu0 0.0
    %2449 = vmatpush1.xpose.msra.mxu0 0.0
    %2450 = vmatprep.subr.mxu0 0.0
    %2451 = vmatpush1.xpose.msra.mxu0 0.0
    %2452 = vmatprep.subr.mxu0 0.0
    %2453 = vmatpush1.xpose.msra.mxu0 0.0
    %2454 = vmatprep.subr.mxu0 0.0
    %2455 = vmatpush1.xpose.msra.mxu0 0.0
    %2456 = vmatprep.subr.mxu0 0.0
    %2457 = vmatpush1.xpose.msra.mxu0 0.0
    %2458 = vmatprep.subr.mxu0 0.0
    %2459 = vmatpush1.xpose.msra.mxu0 0.0
    %2460 = vmatprep.subr.mxu0 0.0
    %2461 = vmatpush1.xpose.msra.mxu0 0.0
    %2462 = vmatprep.subr.mxu0 0.0
    %2463 = vmatpush1.xpose.msra.mxu0 0.0
    %2464 = vmatprep.subr.mxu0 0.0
    %2465 = vmatpush1.xpose.msra.mxu0 0.0
    %2466 = vmatprep.subr.mxu0 0.0
    %2467 = vmatpush1.xpose.msra.mxu0 0.0
    %2468 = vmatprep.subr.mxu0 0.0
    %2469 = vmatpush1.xpose.msra.mxu0 0.0
    %2470 = vmatprep.mubr.f32.mxu0 0.0
    %2471 = vmatmul.mubr.f32.gmra.mrb[0].mxu0 %v2402
    %v2472 = vpop.f32.mrb[0].mxu0
    %v2473 = vadd.f32 0.0, %v2472
    %v2474 = vpop.f32.mrb[0].mxu0
    %2475 = vdwg.mxu0
    %2476 = vrot.lane.b32.xlu0 %v2067, 120
    %v2477 = vpop.permute.xlu0 %2476
    %2478 = vrot.lane.b32.xlu0 %v2067, 88
    %v2479 = vpop.permute.xlu0 %2478
    %v2480 = vsel %vm282, %v2477, 0
    %v2482 = vsel %vm282, %v2479, 0
    %2484 = vmatprep.subr.mxu0 0.0
    %2485 = vmatpush1.xpose.msra.mxu0 %v2482
    %2486 = vmatprep.subr.mxu0 0.0
    %2487 = vmatpush1.xpose.msra.mxu0 0.0
    %2488 = vmatprep.subr.mxu0 0.0
    %2489 = vmatpush1.xpose.msra.mxu0 0.0
    %2490 = vmatprep.subr.mxu0 0.0
    %2491 = vmatpush1.xpose.msra.mxu0 0.0
    %2492 = vmatprep.subr.mxu0 0.0
    %2493 = vmatpush1.xpose.msra.mxu0 0.0
    %2494 = vmatprep.subr.mxu0 0.0
    %2495 = vmatpush1.xpose.msra.mxu0 0.0
    %2496 = vmatprep.subr.mxu0 0.0
    %2497 = vmatpush1.xpose.msra.mxu0 0.0
    %2498 = vmatprep.subr.mxu0 0.0
    %2499 = vmatpush1.xpose.msra.mxu0 0.0
    %2500 = vmatprep.subr.mxu0 0.0
    %2501 = vmatpush1.xpose.msra.mxu0 0.0
    %2502 = vmatprep.subr.mxu0 0.0
    %2503 = vmatpush1.xpose.msra.mxu0 0.0
    %2504 = vmatprep.subr.mxu0 0.0
    %2505 = vmatpush1.xpose.msra.mxu0 0.0
    %2506 = vmatprep.subr.mxu0 0.0
    %2507 = vmatpush1.xpose.msra.mxu0 0.0
    %2508 = vmatprep.subr.mxu0 0.0
    %2509 = vmatpush1.xpose.msra.mxu0 0.0
    %2510 = vmatprep.subr.mxu0 0.0
    %2511 = vmatpush1.xpose.msra.mxu0 0.0
    %2512 = vmatprep.subr.mxu0 0.0
    %2513 = vmatpush1.xpose.msra.mxu0 0.0
    %2514 = vmatprep.subr.mxu0 0.0
    %2515 = vmatpush1.xpose.msra.mxu0 0.0
    %2516 = vmatprep.subr.mxu0 0.0
    %2517 = vmatpush1.xpose.msra.mxu0 0.0
    %2518 = vmatprep.subr.mxu0 0.0
    %2519 = vmatpush1.xpose.msra.mxu0 0.0
    %2520 = vmatprep.subr.mxu0 0.0
    %2521 = vmatpush1.xpose.msra.mxu0 0.0
    %2522 = vmatprep.subr.mxu0 0.0
    %2523 = vmatpush1.xpose.msra.mxu0 0.0
    %2524 = vmatprep.subr.mxu0 0.0
    %2525 = vmatpush1.xpose.msra.mxu0 0.0
    %2526 = vmatprep.subr.mxu0 0.0
    %2527 = vmatpush1.xpose.msra.mxu0 0.0
    %2528 = vmatprep.subr.mxu0 0.0
    %2529 = vmatpush1.xpose.msra.mxu0 0.0
    %2530 = vmatprep.subr.mxu0 0.0
    %2531 = vmatpush1.xpose.msra.mxu0 0.0
    %2532 = vmatprep.subr.mxu0 0.0
    %2533 = vmatpush1.xpose.msra.mxu0 0.0
    %2534 = vmatprep.subr.mxu0 0.0
    %2535 = vmatpush1.xpose.msra.mxu0 0.0
    %2536 = vmatprep.subr.mxu0 0.0
    %2537 = vmatpush1.xpose.msra.mxu0 0.0
    %2538 = vmatprep.subr.mxu0 0.0
    %2539 = vmatpush1.xpose.msra.mxu0 0.0
    %2540 = vmatprep.subr.mxu0 0.0
    %2541 = vmatpush1.xpose.msra.mxu0 0.0
    %2542 = vmatprep.subr.mxu0 0.0
    %2543 = vmatpush1.xpose.msra.mxu0 0.0
    %2544 = vmatprep.subr.mxu0 0.0
    %2545 = vmatpush1.xpose.msra.mxu0 0.0
    %2546 = vmatprep.subr.mxu0 0.0
    %2547 = vmatpush1.xpose.msra.mxu0 0.0
    %2548 = vmatprep.mubr.f32.mxu0 0.0
    %2549 = vmatmul.mubr.f32.gmra.mrb[0].mxu0 %v2480
    %v2550 = vpop.f32.mrb[0].mxu0
    %v2551 = vadd.f32 0.0, %v2550
    %v2552 = vpop.f32.mrb[0].mxu0
    %2553 = vdwg.mxu0
    %v2554 = vsel %vm282, %v2473, -inf
    %2555 = vmax.xlane.f32.xlu0 %v2554
    %v2556 = vpop.xlane.xlu0 %2555
    %v2557 = vsel %vm282, %v2551, -inf
    %2558 = vmax.xlane.f32.xlu0 %v2557
    %v2559 = vpop.xlane.xlu0 %2558
    %v2560 = vsub.f32 %v2473, %v2556
    %v2561 = vsub.f32 %v2551, %v2559
    %v2562 = vmul.f32 %v2560, 1.442695
    %v2563 = vpow.pop %v2562
    %v2564 = vmul.f32 %v2561, 1.442695
    %v2565 = vpow.pop %v2564
    %v2566 = vsel %vm282, %v2563, 0.0
    %2567 = vadd.xlane.f32.xlu0 %v2566
    %v2568 = vpop.xlane.xlu0 %2567
    %v2569 = vsel %vm282, %v2565, 0.0
    %2570 = vadd.xlane.f32.xlu0 %v2569
    %v2571 = vpop.xlane.xlu0 %2570
    %v2572 = vrcp.pop %v2568
    %v2573 = vrcp.pop %v2571
    %v2574 = vmul.f32 %v2563, %v2572
    %v2575 = vmul.f32 %v2565, %v2573
    %2576 = vrot.lane.b32.xlu0 %v2058, 56
    %v2577 = vpop.permute.xlu0 %2576
    %v2580 = vsel %vm282, %v2574, 0
    %2582 = vmatprep.subr.mxu0 0.0
    %2583 = vmatpush1.msra.mxu0 %v2577
    %2584 = vmatprep.subr.mxu0 0.0
    %2585 = vmatpush1.msra.mxu0 0.0
    %2586 = vmatprep.subr.mxu0 0.0
    %2587 = vmatpush1.msra.mxu0 0.0
    %2588 = vmatprep.subr.mxu0 0.0
    %2589 = vmatpush1.msra.mxu0 0.0
    %2590 = vmatprep.subr.mxu0 0.0
    %2591 = vmatpush1.msra.mxu0 0.0
    %2592 = vmatprep.subr.mxu0 0.0
    %2593 = vmatpush1.msra.mxu0 0.0
    %2594 = vmatprep.subr.mxu0 0.0
    %2595 = vmatpush1.msra.mxu0 0.0
    %2596 = vmatprep.subr.mxu0 0.0
    %2597 = vmatpush1.msra.mxu0 0.0
    %2598 = vmatprep.subr.mxu0 0.0
    %2599 = vmatpush1.msra.mxu0 0.0
    %2600 = vmatprep.subr.mxu0 0.0
    %2601 = vmatpush1.msra.mxu0 0.0
    %2602 = vmatprep.subr.mxu0 0.0
    %2603 = vmatpush1.msra.mxu0 0.0
    %2604 = vmatprep.subr.mxu0 0.0
    %2605 = vmatpush1.msra.mxu0 0.0
    %2606 = vmatprep.subr.mxu0 0.0
    %2607 = vmatpush1.msra.mxu0 0.0
    %2608 = vmatprep.subr.mxu0 0.0
    %2609 = vmatpush1.msra.mxu0 0.0
    %2610 = vmatprep.subr.mxu0 0.0
    %2611 = vmatpush1.msra.mxu0 0.0
    %2612 = vmatprep.subr.mxu0 0.0
    %2613 = vmatpush1.msra.mxu0 0.0
    %2614 = vmatprep.subr.mxu0 0.0
    %2615 = vmatpush1.msra.mxu0 0.0
    %2616 = vmatprep.subr.mxu0 0.0
    %2617 = vmatpush1.msra.mxu0 0.0
    %2618 = vmatprep.subr.mxu0 0.0
    %2619 = vmatpush1.msra.mxu0 0.0
    %2620 = vmatprep.subr.mxu0 0.0
    %2621 = vmatpush1.msra.mxu0 0.0
    %2622 = vmatprep.subr.mxu0 0.0
    %2623 = vmatpush1.msra.mxu0 0.0
    %2624 = vmatprep.subr.mxu0 0.0
    %2625 = vmatpush1.msra.mxu0 0.0
    %2626 = vmatprep.subr.mxu0 0.0
    %2627 = vmatpush1.msra.mxu0 0.0
    %2628 = vmatprep.subr.mxu0 0.0
    %2629 = vmatpush1.msra.mxu0 0.0
    %2630 = vmatprep.subr.mxu0 0.0
    %2631 = vmatpush1.msra.mxu0 0.0
    %2632 = vmatprep.subr.mxu0 0.0
    %2633 = vmatpush1.msra.mxu0 0.0
    %2634 = vmatprep.subr.mxu0 0.0
    %2635 = vmatpush1.msra.mxu0 0.0
    %2636 = vmatprep.subr.mxu0 0.0
    %2637 = vmatpush1.msra.mxu0 0.0
    %2638 = vmatprep.subr.mxu0 0.0
    %2639 = vmatpush1.msra.mxu0 0.0
    %2640 = vmatprep.subr.mxu0 0.0
    %2641 = vmatpush1.msra.mxu0 0.0
    %2642 = vmatprep.subr.mxu0 0.0
    %2643 = vmatpush1.msra.mxu0 0.0
    %2644 = vmatprep.subr.mxu0 0.0
    %2645 = vmatpush1.msra.mxu0 0.0
    %2646 = vmatprep.mubr.f32.mxu0 0.0
    %2647 = vmatmul.mubr.f32.gmra.mrb[0].mxu0 %v2580
    %v2648 = vpop.f32.mrb[0].mxu0
    %v2649 = vadd.f32 0.0, %v2648
    %v2650 = vpop.f32.mrb[0].mxu0
    %2651 = vdwg.mxu0
    %2652 = vrot.lane.b32.xlu0 %v2063, 56
    %v2653 = vpop.permute.xlu0 %2652
    %v2656 = vsel %vm282, %v2575, 0
    %2658 = vmatprep.subr.mxu0 0.0
    %2659 = vmatpush1.msra.mxu0 %v2653
    %2660 = vmatprep.subr.mxu0 0.0
    %2661 = vmatpush1.msra.mxu0 0.0
    %2662 = vmatprep.subr.mxu0 0.0
    %2663 = vmatpush1.msra.mxu0 0.0
    %2664 = vmatprep.subr.mxu0 0.0
    %2665 = vmatpush1.msra.mxu0 0.0
    %2666 = vmatprep.subr.mxu0 0.0
    %2667 = vmatpush1.msra.mxu0 0.0
    %2668 = vmatprep.subr.mxu0 0.0
    %2669 = vmatpush1.msra.mxu0 0.0
    %2670 = vmatprep.subr.mxu0 0.0
    %2671 = vmatpush1.msra.mxu0 0.0
    %2672 = vmatprep.subr.mxu0 0.0
    %2673 = vmatpush1.msra.mxu0 0.0
    %2674 = vmatprep.subr.mxu0 0.0
    %2675 = vmatpush1.msra.mxu0 0.0
    %2676 = vmatprep.subr.mxu0 0.0
    %2677 = vmatpush1.msra.mxu0 0.0
    %2678 = vmatprep.subr.mxu0 0.0
    %2679 = vmatpush1.msra.mxu0 0.0
    %2680 = vmatprep.subr.mxu0 0.0
    %2681 = vmatpush1.msra.mxu0 0.0
    %2682 = vmatprep.subr.mxu0 0.0
    %2683 = vmatpush1.msra.mxu0 0.0
    %2684 = vmatprep.subr.mxu0 0.0
    %2685 = vmatpush1.msra.mxu0 0.0
    %2686 = vmatprep.subr.mxu0 0.0
    %2687 = vmatpush1.msra.mxu0 0.0
    %2688 = vmatprep.subr.mxu0 0.0
    %2689 = vmatpush1.msra.mxu0 0.0
    %2690 = vmatprep.subr.mxu0 0.0
    %2691 = vmatpush1.msra.mxu0 0.0
    %2692 = vmatprep.subr.mxu0 0.0
    %2693 = vmatpush1.msra.mxu0 0.0
    %2694 = vmatprep.subr.mxu0 0.0
    %2695 = vmatpush1.msra.mxu0 0.0
    %2696 = vmatprep.subr.mxu0 0.0
    %2697 = vmatpush1.msra.mxu0 0.0
    %2698 = vmatprep.subr.mxu0 0.0
    %2699 = vmatpush1.msra.mxu0 0.0
    %2700 = vmatprep.subr.mxu0 0.0
    %2701 = vmatpush1.msra.mxu0 0.0
    %2702 = vmatprep.subr.mxu0 0.0
    %2703 = vmatpush1.msra.mxu0 0.0
    %2704 = vmatprep.subr.mxu0 0.0
    %2705 = vmatpush1.msra.mxu0 0.0
    %2706 = vmatprep.subr.mxu0 0.0
    %2707 = vmatpush1.msra.mxu0 0.0
    %2708 = vmatprep.subr.mxu0 0.0
    %2709 = vmatpush1.msra.mxu0 0.0
    %2710 = vmatprep.subr.mxu0 0.0
    %2711 = vmatpush1.msra.mxu0 0.0
    %2712 = vmatprep.subr.mxu0 0.0
    %2713 = vmatpush1.msra.mxu0 0.0
    %2714 = vmatprep.subr.mxu0 0.0
    %2715 = vmatpush1.msra.mxu0 0.0
    %2716 = vmatprep.subr.mxu0 0.0
    %2717 = vmatpush1.msra.mxu0 0.0
    %2718 = vmatprep.subr.mxu0 0.0
    %2719 = vmatpush1.msra.mxu0 0.0
    %2720 = vmatprep.subr.mxu0 0.0
    %2721 = vmatpush1.msra.mxu0 0.0
    %2722 = vmatprep.mubr.f32.mxu0 0.0
    %2723 = vmatmul.mubr.f32.gmra.mrb[0].mxu0 %v2656
    %v2724 = vpop.f32.mrb[0].mxu0
    %v2725 = vadd.f32 0.0, %v2724
    %v2726 = vpop.f32.mrb[0].mxu0
    %2727 = vdwg.mxu0
    %2728 = vrot.lane.b32.xlu0 %v2066, 112
    %v2729 = vpop.permute.xlu0 %2728
    %2730 = vrot.lane.b32.xlu0 %v2066, 80
    %v2731 = vpop.permute.xlu0 %2730
    %v2732 = vsel %vm282, %v2729, 0
    %v2734 = vsel %vm282, %v2731, 0
    %2736 = vmatprep.subr.mxu0 0.0
    %2737 = vmatpush1.xpose.msra.mxu0 %v2734
    %2738 = vmatprep.subr.mxu0 0.0
    %2739 = vmatpush1.xpose.msra.mxu0 0.0
    %2740 = vmatprep.subr.mxu0 0.0
    %2741 = vmatpush1.xpose.msra.mxu0 0.0
    %2742 = vmatprep.subr.mxu0 0.0
    %2743 = vmatpush1.xpose.msra.mxu0 0.0
    %2744 = vmatprep.subr.mxu0 0.0
    %2745 = vmatpush1.xpose.msra.mxu0 0.0
    %2746 = vmatprep.subr.mxu0 0.0
    %2747 = vmatpush1.xpose.msra.mxu0 0.0
    %2748 = vmatprep.subr.mxu0 0.0
    %2749 = vmatpush1.xpose.msra.mxu0 0.0
    %2750 = vmatprep.subr.mxu0 0.0
    %2751 = vmatpush1.xpose.msra.mxu0 0.0
    %2752 = vmatprep.subr.mxu0 0.0
    %2753 = vmatpush1.xpose.msra.mxu0 0.0
    %2754 = vmatprep.subr.mxu0 0.0
    %2755 = vmatpush1.xpose.msra.mxu0 0.0
    %2756 = vmatprep.subr.mxu0 0.0
    %2757 = vmatpush1.xpose.msra.mxu0 0.0
    %2758 = vmatprep.subr.mxu0 0.0
    %2759 = vmatpush1.xpose.msra.mxu0 0.0
    %2760 = vmatprep.subr.mxu0 0.0
    %2761 = vmatpush1.xpose.msra.mxu0 0.0
    %2762 = vmatprep.subr.mxu0 0.0
    %2763 = vmatpush1.xpose.msra.mxu0 0.0
    %2764 = vmatprep.subr.mxu0 0.0
    %2765 = vmatpush1.xpose.msra.mxu0 0.0
    %2766 = vmatprep.subr.mxu0 0.0
    %2767 = vmatpush1.xpose.msra.mxu0 0.0
    %2768 = vmatprep.subr.mxu0 0.0
    %2769 = vmatpush1.xpose.msra.mxu0 0.0
    %2770 = vmatprep.subr.mxu0 0.0
    %2771 = vmatpush1.xpose.msra.mxu0 0.0
    %2772 = vmatprep.subr.mxu0 0.0
    %2773 = vmatpush1.xpose.msra.mxu0 0.0
    %2774 = vmatprep.subr.mxu0 0.0
    %2775 = vmatpush1.xpose.msra.mxu0 0.0
    %2776 = vmatprep.subr.mxu0 0.0
    %2777 = vmatpush1.xpose.msra.mxu0 0.0
    %2778 = vmatprep.subr.mxu0 0.0
    %2779 = vmatpush1.xpose.msra.mxu0 0.0
    %2780 = vmatprep.subr.mxu0 0.0
    %2781 = vmatpush1.xpose.msra.mxu0 0.0
    %2782 = vmatprep.subr.mxu0 0.0
    %2783 = vmatpush1.xpose.msra.mxu0 0.0
    %2784 = vmatprep.subr.mxu0 0.0
    %2785 = vmatpush1.xpose.msra.mxu0 0.0
    %2786 = vmatprep.subr.mxu0 0.0
    %2787 = vmatpush1.xpose.msra.mxu0 0.0
    %2788 = vmatprep.subr.mxu0 0.0
    %2789 = vmatpush1.xpose.msra.mxu0 0.0
    %2790 = vmatprep.subr.mxu0 0.0
    %2791 = vmatpush1.xpose.msra.mxu0 0.0
    %2792 = vmatprep.subr.mxu0 0.0
    %2793 = vmatpush1.xpose.msra.mxu0 0.0
    %2794 = vmatprep.subr.mxu0 0.0
    %2795 = vmatpush1.xpose.msra.mxu0 0.0
    %2796 = vmatprep.subr.mxu0 0.0
    %2797 = vmatpush1.xpose.msra.mxu0 0.0
    %2798 = vmatprep.subr.mxu0 0.0
    %2799 = vmatpush1.xpose.msra.mxu0 0.0
    %2800 = vmatprep.mubr.f32.mxu0 0.0
    %2801 = vmatmul.mubr.f32.gmra.mrb[0].mxu0 %v2732
    %v2802 = vpop.f32.mrb[0].mxu0
    %v2803 = vadd.f32 0.0, %v2802
    %v2804 = vpop.f32.mrb[0].mxu0
    %2805 = vdwg.mxu0
    %2806 = vrot.lane.b32.xlu0 %v2067, 112
    %v2807 = vpop.permute.xlu0 %2806
    %2808 = vrot.lane.b32.xlu0 %v2067, 80
    %v2809 = vpop.permute.xlu0 %2808
    %v2810 = vsel %vm282, %v2807, 0
    %v2812 = vsel %vm282, %v2809, 0
    %2814 = vmatprep.subr.mxu0 0.0
    %2815 = vmatpush1.xpose.msra.mxu0 %v2812
    %2816 = vmatprep.subr.mxu0 0.0
    %2817 = vmatpush1.xpose.msra.mxu0 0.0
    %2818 = vmatprep.subr.mxu0 0.0
    %2819 = vmatpush1.xpose.msra.mxu0 0.0
    %2820 = vmatprep.subr.mxu0 0.0
    %2821 = vmatpush1.xpose.msra.mxu0 0.0
    %2822 = vmatprep.subr.mxu0 0.0
    %2823 = vmatpush1.xpose.msra.mxu0 0.0
    %2824 = vmatprep.subr.mxu0 0.0
    %2825 = vmatpush1.xpose.msra.mxu0 0.0
    %2826 = vmatprep.subr.mxu0 0.0
    %2827 = vmatpush1.xpose.msra.mxu0 0.0
    %2828 = vmatprep.subr.mxu0 0.0
    %2829 = vmatpush1.xpose.msra.mxu0 0.0
    %2830 = vmatprep.subr.mxu0 0.0
    %2831 = vmatpush1.xpose.msra.mxu0 0.0
    %2832 = vmatprep.subr.mxu0 0.0
    %2833 = vmatpush1.xpose.msra.mxu0 0.0
    %2834 = vmatprep.subr.mxu0 0.0
    %2835 = vmatpush1.xpose.msra.mxu0 0.0
    %2836 = vmatprep.subr.mxu0 0.0
    %2837 = vmatpush1.xpose.msra.mxu0 0.0
    %2838 = vmatprep.subr.mxu0 0.0
    %2839 = vmatpush1.xpose.msra.mxu0 0.0
    %2840 = vmatprep.subr.mxu0 0.0
    %2841 = vmatpush1.xpose.msra.mxu0 0.0
    %2842 = vmatprep.subr.mxu0 0.0
    %2843 = vmatpush1.xpose.msra.mxu0 0.0
    %2844 = vmatprep.subr.mxu0 0.0
    %2845 = vmatpush1.xpose.msra.mxu0 0.0
    %2846 = vmatprep.subr.mxu0 0.0
    %2847 = vmatpush1.xpose.msra.mxu0 0.0
    %2848 = vmatprep.subr.mxu0 0.0
    %2849 = vmatpush1.xpose.msra.mxu0 0.0
    %2850 = vmatprep.subr.mxu0 0.0
    %2851 = vmatpush1.xpose.msra.mxu0 0.0
    %2852 = vmatprep.subr.mxu0 0.0
    %2853 = vmatpush1.xpose.msra.mxu0 0.0
    %2854 = vmatprep.subr.mxu0 0.0
    %2855 = vmatpush1.xpose.msra.mxu0 0.0
    %2856 = vmatprep.subr.mxu0 0.0
    %2857 = vmatpush1.xpose.msra.mxu0 0.0
    %2858 = vmatprep.subr.mxu0 0.0
    %2859 = vmatpush1.xpose.msra.mxu0 0.0
    %2860 = vmatprep.subr.mxu0 0.0
    %2861 = vmatpush1.xpose.msra.mxu0 0.0
    %2862 = vmatprep.subr.mxu0 0.0
    %2863 = vmatpush1.xpose.msra.mxu0 0.0
    %2864 = vmatprep.subr.mxu0 0.0
    %2865 = vmatpush1.xpose.msra.mxu0 0.0
    %2866 = vmatprep.subr.mxu0 0.0
    %2867 = vmatpush1.xpose.msra.mxu0 0.0
    %2868 = vmatprep.subr.mxu0 0.0
    %2869 = vmatpush1.xpose.msra.mxu0 0.0
    %2870 = vmatprep.subr.mxu0 0.0
    %2871 = vmatpush1.xpose.msra.mxu0 0.0
    %2872 = vmatprep.subr.mxu0 0.0
    %2873 = vmatpush1.xpose.msra.mxu0 0.0
    %2874 = vmatprep.subr.mxu0 0.0
    %2875 = vmatpush1.xpose.msra.mxu0 0.0
    %2876 = vmatprep.subr.mxu0 0.0
    %2877 = vmatpush1.xpose.msra.mxu0 0.0
    %2878 = vmatprep.mubr.f32.mxu0 0.0
    %2879 = vmatmul.mubr.f32.gmra.mrb[0].mxu0 %v2810
    %v2880 = vpop.f32.mrb[0].mxu0
    %v2881 = vadd.f32 0.0, %v2880
    %v2882 = vpop.f32.mrb[0].mxu0
    %2883 = vdwg.mxu0
    %v2884 = vsel %vm282, %v2803, -inf
    %2885 = vmax.xlane.f32.xlu0 %v2884
    %v2886 = vpop.xlane.xlu0 %2885
    %v2887 = vsel %vm282, %v2881, -inf
    %2888 = vmax.xlane.f32.xlu0 %v2887
    %v2889 = vpop.xlane.xlu0 %2888
    %v2890 = vsub.f32 %v2803, %v2886
    %v2891 = vsub.f32 %v2881, %v2889
    %v2892 = vmul.f32 %v2890, 1.442695
    %v2893 = vpow.pop %v2892
    %v2894 = vmul.f32 %v2891, 1.442695
    %v2895 = vpow.pop %v2894
    %v2896 = vsel %vm282, %v2893, 0.0
    %2897 = vadd.xlane.f32.xlu0 %v2896
    %v2898 = vpop.xlane.xlu0 %2897
    %v2899 = vsel %vm282, %v2895, 0.0
    %2900 = vadd.xlane.f32.xlu0 %v2899
    %v2901 = vpop.xlane.xlu0 %2900
    %v2902 = vrcp.pop %v2898
    %v2903 = vrcp.pop %v2901
    %v2904 = vmul.f32 %v2893, %v2902
    %v2905 = vmul.f32 %v2895, %v2903
    %2906 = vrot.lane.b32.xlu0 %v2058, 48
    %v2907 = vpop.permute.xlu0 %2906
    %v2910 = vsel %vm282, %v2904, 0
    %2912 = vmatprep.subr.mxu0 0.0
    %2913 = vmatpush1.msra.mxu0 %v2907
    %2914 = vmatprep.subr.mxu0 0.0
    %2915 = vmatpush1.msra.mxu0 0.0
    %2916 = vmatprep.subr.mxu0 0.0
    %2917 = vmatpush1.msra.mxu0 0.0
    %2918 = vmatprep.subr.mxu0 0.0
    %2919 = vmatpush1.msra.mxu0 0.0
    %2920 = vmatprep.subr.mxu0 0.0
    %2921 = vmatpush1.msra.mxu0 0.0
    %2922 = vmatprep.subr.mxu0 0.0
    %2923 = vmatpush1.msra.mxu0 0.0
    %2924 = vmatprep.subr.mxu0 0.0
    %2925 = vmatpush1.msra.mxu0 0.0
    %2926 = vmatprep.subr.mxu0 0.0
    %2927 = vmatpush1.msra.mxu0 0.0
    %2928 = vmatprep.subr.mxu0 0.0
    %2929 = vmatpush1.msra.mxu0 0.0
    %2930 = vmatprep.subr.mxu0 0.0
    %2931 = vmatpush1.msra.mxu0 0.0
    %2932 = vmatprep.subr.mxu0 0.0
    %2933 = vmatpush1.msra.mxu0 0.0
    %2934 = vmatprep.subr.mxu0 0.0
    %2935 = vmatpush1.msra.mxu0 0.0
    %2936 = vmatprep.subr.mxu0 0.0
    %2937 = vmatpush1.msra.mxu0 0.0
    %2938 = vmatprep.subr.mxu0 0.0
    %2939 = vmatpush1.msra.mxu0 0.0
    %2940 = vmatprep.subr.mxu0 0.0
    %2941 = vmatpush1.msra.mxu0 0.0
    %2942 = vmatprep.subr.mxu0 0.0
    %2943 = vmatpush1.msra.mxu0 0.0
    %2944 = vmatprep.subr.mxu0 0.0
    %2945 = vmatpush1.msra.mxu0 0.0
    %2946 = vmatprep.subr.mxu0 0.0
    %2947 = vmatpush1.msra.mxu0 0.0
    %2948 = vmatprep.subr.mxu0 0.0
    %2949 = vmatpush1.msra.mxu0 0.0
    %2950 = vmatprep.subr.mxu0 0.0
    %2951 = vmatpush1.msra.mxu0 0.0
    %2952 = vmatprep.subr.mxu0 0.0
    %2953 = vmatpush1.msra.mxu0 0.0
    %2954 = vmatprep.subr.mxu0 0.0
    %2955 = vmatpush1.msra.mxu0 0.0
    %2956 = vmatprep.subr.mxu0 0.0
    %2957 = vmatpush1.msra.mxu0 0.0
    %2958 = vmatprep.subr.mxu0 0.0
    %2959 = vmatpush1.msra.mxu0 0.0
    %2960 = vmatprep.subr.mxu0 0.0
    %2961 = vmatpush1.msra.mxu0 0.0
    %2962 = vmatprep.subr.mxu0 0.0
    %2963 = vmatpush1.msra.mxu0 0.0
    %2964 = vmatprep.subr.mxu0 0.0
    %2965 = vmatpush1.msra.mxu0 0.0
    %2966 = vmatprep.subr.mxu0 0.0
    %2967 = vmatpush1.msra.mxu0 0.0
    %2968 = vmatprep.subr.mxu0 0.0
    %2969 = vmatpush1.msra.mxu0 0.0
    %2970 = vmatprep.subr.mxu0 0.0
    %2971 = vmatpush1.msra.mxu0 0.0
    %2972 = vmatprep.subr.mxu0 0.0
    %2973 = vmatpush1.msra.mxu0 0.0
    %2974 = vmatprep.subr.mxu0 0.0
    %2975 = vmatpush1.msra.mxu0 0.0
    %2976 = vmatprep.mubr.f32.mxu0 0.0
    %2977 = vmatmul.mubr.f32.gmra.mrb[0].mxu0 %v2910
    %v2978 = vpop.f32.mrb[0].mxu0
    %v2979 = vadd.f32 0.0, %v2978
    %v2980 = vpop.f32.mrb[0].mxu0
    %2981 = vdwg.mxu0
    %2982 = vrot.lane.b32.xlu0 %v2063, 48
    %v2983 = vpop.permute.xlu0 %2982
    %v2986 = vsel %vm282, %v2905, 0
    %2988 = vmatprep.subr.mxu0 0.0
    %2989 = vmatpush1.msra.mxu0 %v2983
    %2990 = vmatprep.subr.mxu0 0.0
    %2991 = vmatpush1.msra.mxu0 0.0
    %2992 = vmatprep.subr.mxu0 0.0
    %2993 = vmatpush1.msra.mxu0 0.0
    %2994 = vmatprep.subr.mxu0 0.0
    %2995 = vmatpush1.msra.mxu0 0.0
    %2996 = vmatprep.subr.mxu0 0.0
    %2997 = vmatpush1.msra.mxu0 0.0
    %2998 = vmatprep.subr.mxu0 0.0
    %2999 = vmatpush1.msra.mxu0 0.0
    %3000 = vmatprep.subr.mxu0 0.0
    %3001 = vmatpush1.msra.mxu0 0.0
    %3002 = vmatprep.subr.mxu0 0.0
    %3003 = vmatpush1.msra.mxu0 0.0
    %3004 = vmatprep.subr.mxu0 0.0
    %3005 = vmatpush1.msra.mxu0 0.0
    %3006 = vmatprep.subr.mxu0 0.0
    %3007 = vmatpush1.msra.mxu0 0.0
    %3008 = vmatprep.subr.mxu0 0.0
    %3009 = vmatpush1.msra.mxu0 0.0
    %3010 = vmatprep.subr.mxu0 0.0
    %3011 = vmatpush1.msra.mxu0 0.0
    %3012 = vmatprep.subr.mxu0 0.0
    %3013 = vmatpush1.msra.mxu0 0.0
    %3014 = vmatprep.subr.mxu0 0.0
    %3015 = vmatpush1.msra.mxu0 0.0
    %3016 = vmatprep.subr.mxu0 0.0
    %3017 = vmatpush1.msra.mxu0 0.0
    %3018 = vmatprep.subr.mxu0 0.0
    %3019 = vmatpush1.msra.mxu0 0.0
    %3020 = vmatprep.subr.mxu0 0.0
    %3021 = vmatpush1.msra.mxu0 0.0
    %3022 = vmatprep.subr.mxu0 0.0
    %3023 = vmatpush1.msra.mxu0 0.0
    %3024 = vmatprep.subr.mxu0 0.0
    %3025 = vmatpush1.msra.mxu0 0.0
    %3026 = vmatprep.subr.mxu0 0.0
    %3027 = vmatpush1.msra.mxu0 0.0
    %3028 = vmatprep.subr.mxu0 0.0
    %3029 = vmatpush1.msra.mxu0 0.0
    %3030 = vmatprep.subr.mxu0 0.0
    %3031 = vmatpush1.msra.mxu0 0.0
    %3032 = vmatprep.subr.mxu0 0.0
    %3033 = vmatpush1.msra.mxu0 0.0
    %3034 = vmatprep.subr.mxu0 0.0
    %3035 = vmatpush1.msra.mxu0 0.0
    %3036 = vmatprep.subr.mxu0 0.0
    %3037 = vmatpush1.msra.mxu0 0.0
    %3038 = vmatprep.subr.mxu0 0.0
    %3039 = vmatpush1.msra.mxu0 0.0
    %3040 = vmatprep.subr.mxu0 0.0
    %3041 = vmatpush1.msra.mxu0 0.0
    %3042 = vmatprep.subr.mxu0 0.0
    %3043 = vmatpush1.msra.mxu0 0.0
    %3044 = vmatprep.subr.mxu0 0.0
    %3045 = vmatpush1.msra.mxu0 0.0
    %3046 = vmatprep.subr.mxu0 0.0
    %3047 = vmatpush1.msra.mxu0 0.0
    %3048 = vmatprep.subr.mxu0 0.0
    %3049 = vmatpush1.msra.mxu0 0.0
    %3050 = vmatprep.subr.mxu0 0.0
    %3051 = vmatpush1.msra.mxu0 0.0
    %3052 = vmatprep.mubr.f32.mxu0 0.0
    %3053 = vmatmul.mubr.f32.gmra.mrb[0].mxu0 %v2986
    %v3054 = vpop.f32.mrb[0].mxu0
    %v3055 = vadd.f32 0.0, %v3054
    %v3056 = vpop.f32.mrb[0].mxu0
    %3057 = vdwg.mxu0
    %3058 = vrot.lane.b32.xlu0 %v2066, 104
    %v3059 = vpop.permute.xlu0 %3058
    %3060 = vrot.lane.b32.xlu0 %v2066, 72
    %v3061 = vpop.permute.xlu0 %3060
    %v3062 = vsel %vm282, %v3059, 0
    %v3064 = vsel %vm282, %v3061, 0
    %3066 = vmatprep.subr.mxu0 0.0
    %3067 = vmatpush1.xpose.msra.mxu0 %v3064
    %3068 = vmatprep.subr.mxu0 0.0
    %3069 = vmatpush1.xpose.msra.mxu0 0.0
    %3070 = vmatprep.subr.mxu0 0.0
    %3071 = vmatpush1.xpose.msra.mxu0 0.0
    %3072 = vmatprep.subr.mxu0 0.0
    %3073 = vmatpush1.xpose.msra.mxu0 0.0
    %3074 = vmatprep.subr.mxu0 0.0
    %3075 = vmatpush1.xpose.msra.mxu0 0.0
    %3076 = vmatprep.subr.mxu0 0.0
    %3077 = vmatpush1.xpose.msra.mxu0 0.0
    %3078 = vmatprep.subr.mxu0 0.0
    %3079 = vmatpush1.xpose.msra.mxu0 0.0
    %3080 = vmatprep.subr.mxu0 0.0
    %3081 = vmatpush1.xpose.msra.mxu0 0.0
    %3082 = vmatprep.subr.mxu0 0.0
    %3083 = vmatpush1.xpose.msra.mxu0 0.0
    %3084 = vmatprep.subr.mxu0 0.0
    %3085 = vmatpush1.xpose.msra.mxu0 0.0
    %3086 = vmatprep.subr.mxu0 0.0
    %3087 = vmatpush1.xpose.msra.mxu0 0.0
    %3088 = vmatprep.subr.mxu0 0.0
    %3089 = vmatpush1.xpose.msra.mxu0 0.0
    %3090 = vmatprep.subr.mxu0 0.0
    %3091 = vmatpush1.xpose.msra.mxu0 0.0
    %3092 = vmatprep.subr.mxu0 0.0
    %3093 = vmatpush1.xpose.msra.mxu0 0.0
    %3094 = vmatprep.subr.mxu0 0.0
    %3095 = vmatpush1.xpose.msra.mxu0 0.0
    %3096 = vmatprep.subr.mxu0 0.0
    %3097 = vmatpush1.xpose.msra.mxu0 0.0
    %3098 = vmatprep.subr.mxu0 0.0
    %3099 = vmatpush1.xpose.msra.mxu0 0.0
    %3100 = vmatprep.subr.mxu0 0.0
    %3101 = vmatpush1.xpose.msra.mxu0 0.0
    %3102 = vmatprep.subr.mxu0 0.0
    %3103 = vmatpush1.xpose.msra.mxu0 0.0
    %3104 = vmatprep.subr.mxu0 0.0
    %3105 = vmatpush1.xpose.msra.mxu0 0.0
    %3106 = vmatprep.subr.mxu0 0.0
    %3107 = vmatpush1.xpose.msra.mxu0 0.0
    %3108 = vmatprep.subr.mxu0 0.0
    %3109 = vmatpush1.xpose.msra.mxu0 0.0
    %3110 = vmatprep.subr.mxu0 0.0
    %3111 = vmatpush1.xpose.msra.mxu0 0.0
    %3112 = vmatprep.subr.mxu0 0.0
    %3113 = vmatpush1.xpose.msra.mxu0 0.0
    %3114 = vmatprep.subr.mxu0 0.0
    %3115 = vmatpush1.xpose.msra.mxu0 0.0
    %3116 = vmatprep.subr.mxu0 0.0
    %3117 = vmatpush1.xpose.msra.mxu0 0.0
    %3118 = vmatprep.subr.mxu0 0.0
    %3119 = vmatpush1.xpose.msra.mxu0 0.0
    %3120 = vmatprep.subr.mxu0 0.0
    %3121 = vmatpush1.xpose.msra.mxu0 0.0
    %3122 = vmatprep.subr.mxu0 0.0
    %3123 = vmatpush1.xpose.msra.mxu0 0.0
    %3124 = vmatprep.subr.mxu0 0.0
    %3125 = vmatpush1.xpose.msra.mxu0 0.0
    %3126 = vmatprep.subr.mxu0 0.0
    %3127 = vmatpush1.xpose.msra.mxu0 0.0
    %3128 = vmatprep.subr.mxu0 0.0
    %3129 = vmatpush1.xpose.msra.mxu0 0.0
    %3130 = vmatprep.mubr.f32.mxu0 0.0
    %3131 = vmatmul.mubr.f32.gmra.mrb[0].mxu0 %v3062
    %v3132 = vpop.f32.mrb[0].mxu0
    %v3133 = vadd.f32 0.0, %v3132
    %v3134 = vpop.f32.mrb[0].mxu0
    %3135 = vdwg.mxu0
    %3136 = vrot.lane.b32.xlu0 %v2067, 104
    %v3137 = vpop.permute.xlu0 %3136
    %3138 = vrot.lane.b32.xlu0 %v2067, 72
    %v3139 = vpop.permute.xlu0 %3138
    %v3140 = vsel %vm282, %v3137, 0
    %v3142 = vsel %vm282, %v3139, 0
    %3144 = vmatprep.subr.mxu0 0.0
    %3145 = vmatpush1.xpose.msra.mxu0 %v3142
    %3146 = vmatprep.subr.mxu0 0.0
    %3147 = vmatpush1.xpose.msra.mxu0 0.0
    %3148 = vmatprep.subr.mxu0 0.0
    %3149 = vmatpush1.xpose.msra.mxu0 0.0
    %3150 = vmatprep.subr.mxu0 0.0
    %3151 = vmatpush1.xpose.msra.mxu0 0.0
    %3152 = vmatprep.subr.mxu0 0.0
    %3153 = vmatpush1.xpose.msra.mxu0 0.0
    %3154 = vmatprep.subr.mxu0 0.0
    %3155 = vmatpush1.xpose.msra.mxu0 0.0
    %3156 = vmatprep.subr.mxu0 0.0
    %3157 = vmatpush1.xpose.msra.mxu0 0.0
    %3158 = vmatprep.subr.mxu0 0.0
    %3159 = vmatpush1.xpose.msra.mxu0 0.0
    %3160 = vmatprep.subr.mxu0 0.0
    %3161 = vmatpush1.xpose.msra.mxu0 0.0
    %3162 = vmatprep.subr.mxu0 0.0
    %3163 = vmatpush1.xpose.msra.mxu0 0.0
    %3164 = vmatprep.subr.mxu0 0.0
    %3165 = vmatpush1.xpose.msra.mxu0 0.0
    %3166 = vmatprep.subr.mxu0 0.0
    %3167 = vmatpush1.xpose.msra.mxu0 0.0
    %3168 = vmatprep.subr.mxu0 0.0
    %3169 = vmatpush1.xpose.msra.mxu0 0.0
    %3170 = vmatprep.subr.mxu0 0.0
    %3171 = vmatpush1.xpose.msra.mxu0 0.0
    %3172 = vmatprep.subr.mxu0 0.0
    %3173 = vmatpush1.xpose.msra.mxu0 0.0
    %3174 = vmatprep.subr.mxu0 0.0
    %3175 = vmatpush1.xpose.msra.mxu0 0.0
    %3176 = vmatprep.subr.mxu0 0.0
    %3177 = vmatpush1.xpose.msra.mxu0 0.0
    %3178 = vmatprep.subr.mxu0 0.0
    %3179 = vmatpush1.xpose.msra.mxu0 0.0
    %3180 = vmatprep.subr.mxu0 0.0
    %3181 = vmatpush1.xpose.msra.mxu0 0.0
    %3182 = vmatprep.subr.mxu0 0.0
    %3183 = vmatpush1.xpose.msra.mxu0 0.0
    %3184 = vmatprep.subr.mxu0 0.0
    %3185 = vmatpush1.xpose.msra.mxu0 0.0
    %3186 = vmatprep.subr.mxu0 0.0
    %3187 = vmatpush1.xpose.msra.mxu0 0.0
    %3188 = vmatprep.subr.mxu0 0.0
    %3189 = vmatpush1.xpose.msra.mxu0 0.0
    %3190 = vmatprep.subr.mxu0 0.0
    %3191 = vmatpush1.xpose.msra.mxu0 0.0
    %3192 = vmatprep.subr.mxu0 0.0
    %3193 = vmatpush1.xpose.msra.mxu0 0.0
    %3194 = vmatprep.subr.mxu0 0.0
    %3195 = vmatpush1.xpose.msra.mxu0 0.0
    %3196 = vmatprep.subr.mxu0 0.0
    %3197 = vmatpush1.xpose.msra.mxu0 0.0
    %3198 = vmatprep.subr.mxu0 0.0
    %3199 = vmatpush1.xpose.msra.mxu0 0.0
    %3200 = vmatprep.subr.mxu0 0.0
    %3201 = vmatpush1.xpose.msra.mxu0 0.0
    %3202 = vmatprep.subr.mxu0 0.0
    %3203 = vmatpush1.xpose.msra.mxu0 0.0
    %3204 = vmatprep.subr.mxu0 0.0
    %3205 = vmatpush1.xpose.msra.mxu0 0.0
    %3206 = vmatprep.subr.mxu0 0.0
    %3207 = vmatpush1.xpose.msra.mxu0 0.0
    %3208 = vmatprep.mubr.f32.mxu0 0.0
    %3209 = vmatmul.mubr.f32.gmra.mrb[0].mxu0 %v3140
    %v3210 = vpop.f32.mrb[0].mxu0
    %v3211 = vadd.f32 0.0, %v3210
    %v3212 = vpop.f32.mrb[0].mxu0
    %3213 = vdwg.mxu0
    %v3214 = vsel %vm282, %v3133, -inf
    %3215 = vmax.xlane.f32.xlu0 %v3214
    %v3216 = vpop.xlane.xlu0 %3215
    %v3217 = vsel %vm282, %v3211, -inf
    %3218 = vmax.xlane.f32.xlu0 %v3217
    %v3219 = vpop.xlane.xlu0 %3218
    %v3220 = vsub.f32 %v3133, %v3216
    %v3221 = vsub.f32 %v3211, %v3219
    %v3222 = vmul.f32 %v3220, 1.442695
    %v3223 = vpow.pop %v3222
    %v3224 = vmul.f32 %v3221, 1.442695
    %v3225 = vpow.pop %v3224
    %v3226 = vsel %vm282, %v3223, 0.0
    %3227 = vadd.xlane.f32.xlu0 %v3226
    %v3228 = vpop.xlane.xlu0 %3227
    %v3229 = vsel %vm282, %v3225, 0.0
    %3230 = vadd.xlane.f32.xlu0 %v3229
    %v3231 = vpop.xlane.xlu0 %3230
    %v3232 = vrcp.pop %v3228
    %v3233 = vrcp.pop %v3231
    %v3234 = vmul.f32 %v3223, %v3232
    %v3235 = vmul.f32 %v3225, %v3233
    %3236 = vrot.lane.b32.xlu0 %v2058, 40
    %v3237 = vpop.permute.xlu0 %3236
    %v3240 = vsel %vm282, %v3234, 0
    %3242 = vmatprep.subr.mxu0 0.0
    %3243 = vmatpush1.msra.mxu0 %v3237
    %3244 = vmatprep.subr.mxu0 0.0
    %3245 = vmatpush1.msra.mxu0 0.0
    %3246 = vmatprep.subr.mxu0 0.0
    %3247 = vmatpush1.msra.mxu0 0.0
    %3248 = vmatprep.subr.mxu0 0.0
    %3249 = vmatpush1.msra.mxu0 0.0
    %3250 = vmatprep.subr.mxu0 0.0
    %3251 = vmatpush1.msra.mxu0 0.0
    %3252 = vmatprep.subr.mxu0 0.0
    %3253 = vmatpush1.msra.mxu0 0.0
    %3254 = vmatprep.subr.mxu0 0.0
    %3255 = vmatpush1.msra.mxu0 0.0
    %3256 = vmatprep.subr.mxu0 0.0
    %3257 = vmatpush1.msra.mxu0 0.0
    %3258 = vmatprep.subr.mxu0 0.0
    %3259 = vmatpush1.msra.mxu0 0.0
    %3260 = vmatprep.subr.mxu0 0.0
    %3261 = vmatpush1.msra.mxu0 0.0
    %3262 = vmatprep.subr.mxu0 0.0
    %3263 = vmatpush1.msra.mxu0 0.0
    %3264 = vmatprep.subr.mxu0 0.0
    %3265 = vmatpush1.msra.mxu0 0.0
    %3266 = vmatprep.subr.mxu0 0.0
    %3267 = vmatpush1.msra.mxu0 0.0
    %3268 = vmatprep.subr.mxu0 0.0
    %3269 = vmatpush1.msra.mxu0 0.0
    %3270 = vmatprep.subr.mxu0 0.0
    %3271 = vmatpush1.msra.mxu0 0.0
    %3272 = vmatprep.subr.mxu0 0.0
    %3273 = vmatpush1.msra.mxu0 0.0
    %3274 = vmatprep.subr.mxu0 0.0
    %3275 = vmatpush1.msra.mxu0 0.0
    %3276 = vmatprep.subr.mxu0 0.0
    %3277 = vmatpush1.msra.mxu0 0.0
    %3278 = vmatprep.subr.mxu0 0.0
    %3279 = vmatpush1.msra.mxu0 0.0
    %3280 = vmatprep.subr.mxu0 0.0
    %3281 = vmatpush1.msra.mxu0 0.0
    %3282 = vmatprep.subr.mxu0 0.0
    %3283 = vmatpush1.msra.mxu0 0.0
    %3284 = vmatprep.subr.mxu0 0.0
    %3285 = vmatpush1.msra.mxu0 0.0
    %3286 = vmatprep.subr.mxu0 0.0
    %3287 = vmatpush1.msra.mxu0 0.0
    %3288 = vmatprep.subr.mxu0 0.0
    %3289 = vmatpush1.msra.mxu0 0.0
    %3290 = vmatprep.subr.mxu0 0.0
    %3291 = vmatpush1.msra.mxu0 0.0
    %3292 = vmatprep.subr.mxu0 0.0
    %3293 = vmatpush1.msra.mxu0 0.0
    %3294 = vmatprep.subr.mxu0 0.0
    %3295 = vmatpush1.msra.mxu0 0.0
    %3296 = vmatprep.subr.mxu0 0.0
    %3297 = vmatpush1.msra.mxu0 0.0
    %3298 = vmatprep.subr.mxu0 0.0
    %3299 = vmatpush1.msra.mxu0 0.0
    %3300 = vmatprep.subr.mxu0 0.0
    %3301 = vmatpush1.msra.mxu0 0.0
    %3302 = vmatprep.subr.mxu0 0.0
    %3303 = vmatpush1.msra.mxu0 0.0
    %3304 = vmatprep.subr.mxu0 0.0
    %3305 = vmatpush1.msra.mxu0 0.0
    %3306 = vmatprep.mubr.f32.mxu0 0.0
    %3307 = vmatmul.mubr.f32.gmra.mrb[0].mxu0 %v3240
    %v3308 = vpop.f32.mrb[0].mxu0
    %v3309 = vadd.f32 0.0, %v3308
    %v3310 = vpop.f32.mrb[0].mxu0
    %3311 = vdwg.mxu0
    %3312 = vrot.lane.b32.xlu0 %v2063, 40
    %v3313 = vpop.permute.xlu0 %3312
    %v3316 = vsel %vm282, %v3235, 0
    %3318 = vmatprep.subr.mxu0 0.0
    %3319 = vmatpush1.msra.mxu0 %v3313
    %3320 = vmatprep.subr.mxu0 0.0
    %3321 = vmatpush1.msra.mxu0 0.0
    %3322 = vmatprep.subr.mxu0 0.0
    %3323 = vmatpush1.msra.mxu0 0.0
    %3324 = vmatprep.subr.mxu0 0.0
    %3325 = vmatpush1.msra.mxu0 0.0
    %3326 = vmatprep.subr.mxu0 0.0
    %3327 = vmatpush1.msra.mxu0 0.0
    %3328 = vmatprep.subr.mxu0 0.0
    %3329 = vmatpush1.msra.mxu0 0.0
    %3330 = vmatprep.subr.mxu0 0.0
    %3331 = vmatpush1.msra.mxu0 0.0
    %3332 = vmatprep.subr.mxu0 0.0
    %3333 = vmatpush1.msra.mxu0 0.0
    %3334 = vmatprep.subr.mxu0 0.0
    %3335 = vmatpush1.msra.mxu0 0.0
    %3336 = vmatprep.subr.mxu0 0.0
    %3337 = vmatpush1.msra.mxu0 0.0
    %3338 = vmatprep.subr.mxu0 0.0
    %3339 = vmatpush1.msra.mxu0 0.0
    %3340 = vmatprep.subr.mxu0 0.0
    %3341 = vmatpush1.msra.mxu0 0.0
    %3342 = vmatprep.subr.mxu0 0.0
    %3343 = vmatpush1.msra.mxu0 0.0
    %3344 = vmatprep.subr.mxu0 0.0
    %3345 = vmatpush1.msra.mxu0 0.0
    %3346 = vmatprep.subr.mxu0 0.0
    %3347 = vmatpush1.msra.mxu0 0.0
    %3348 = vmatprep.subr.mxu0 0.0
    %3349 = vmatpush1.msra.mxu0 0.0
    %3350 = vmatprep.subr.mxu0 0.0
    %3351 = vmatpush1.msra.mxu0 0.0
    %3352 = vmatprep.subr.mxu0 0.0
    %3353 = vmatpush1.msra.mxu0 0.0
    %3354 = vmatprep.subr.mxu0 0.0
    %3355 = vmatpush1.msra.mxu0 0.0
    %3356 = vmatprep.subr.mxu0 0.0
    %3357 = vmatpush1.msra.mxu0 0.0
    %3358 = vmatprep.subr.mxu0 0.0
    %3359 = vmatpush1.msra.mxu0 0.0
    %3360 = vmatprep.subr.mxu0 0.0
    %3361 = vmatpush1.msra.mxu0 0.0
    %3362 = vmatprep.subr.mxu0 0.0
    %3363 = vmatpush1.msra.mxu0 0.0
    %3364 = vmatprep.subr.mxu0 0.0
    %3365 = vmatpush1.msra.mxu0 0.0
    %3366 = vmatprep.subr.mxu0 0.0
    %3367 = vmatpush1.msra.mxu0 0.0
    %3368 = vmatprep.subr.mxu0 0.0
    %3369 = vmatpush1.msra.mxu0 0.0
    %3370 = vmatprep.subr.mxu0 0.0
    %3371 = vmatpush1.msra.mxu0 0.0
    %3372 = vmatprep.subr.mxu0 0.0
    %3373 = vmatpush1.msra.mxu0 0.0
    %3374 = vmatprep.subr.mxu0 0.0
    %3375 = vmatpush1.msra.mxu0 0.0
    %3376 = vmatprep.subr.mxu0 0.0
    %3377 = vmatpush1.msra.mxu0 0.0
    %3378 = vmatprep.subr.mxu0 0.0
    %3379 = vmatpush1.msra.mxu0 0.0
    %3380 = vmatprep.subr.mxu0 0.0
    %3381 = vmatpush1.msra.mxu0 0.0
    %3382 = vmatprep.mubr.f32.mxu0 0.0
    %3383 = vmatmul.mubr.f32.gmra.mrb[0].mxu0 %v3316
    %v3384 = vpop.f32.mrb[0].mxu0
    %v3385 = vadd.f32 0.0, %v3384
    %v3386 = vpop.f32.mrb[0].mxu0
    %3387 = vdwg.mxu0
    %3390 = vrot.lane.b32.xlu0 %v2649, 8
    %v3391 = vpop.permute.xlu0 %3390
    %3392 = vrot.lane.b32.xlu0 %v2725, 8
    %v3393 = vpop.permute.xlu0 %3392
    %3398 = vrot.lane.b32.xlu0 %v2979, 16
    %v3399 = vpop.permute.xlu0 %3398
    %3400 = vrot.lane.b32.xlu0 %v3055, 16
    %v3401 = vpop.permute.xlu0 %3400
    %3406 = vrot.lane.b32.xlu0 %v3309, 24
    %v3407 = vpop.permute.xlu0 %3406
    %3408 = vrot.lane.b32.xlu0 %v3385, 24
    %v3409 = vpop.permute.xlu0 %3408
    %v3412 = vsel %vm282, %v2318, %v3391
    %v3413 = vsel %vm282, %v2395, %v3393
    %v3414 = vsel %vm1626, %v3412, %v3399
    %v3415 = vsel %vm1626, %v3413, %v3401
    %v3416 = vsel %vm1629, %v3414, %v3407
    %v3417 = vsel %vm1629, %v3415, %v3409
    %v3419 = vsel %vm108, %v3416, 0
    %v3422 = vsel %vm108, %v3417, 0
    %3424 = vmatprep.subr.mxu0 0.0
    %3425 = vmatpush1.msra.mxu0 %v85
    %3426 = vmatprep.subr.mxu0 0.0
    %3427 = vmatpush1.msra.mxu0 %v86
    %3428 = vmatprep.subr.mxu0 0.0
    %3429 = vmatpush1.msra.mxu0 %v87
    %3430 = vmatprep.subr.mxu0 0.0
    %3431 = vmatpush1.msra.mxu0 %v88
    %3432 = vmatprep.subr.mxu0 0.0
    %3433 = vmatpush1.msra.mxu0 0.0
    %3434 = vmatprep.subr.mxu0 0.0
    %3435 = vmatpush1.msra.mxu0 0.0
    %3436 = vmatprep.subr.mxu0 0.0
    %3437 = vmatpush1.msra.mxu0 0.0
    %3438 = vmatprep.subr.mxu0 0.0
    %3439 = vmatpush1.msra.mxu0 0.0
    %3440 = vmatprep.subr.mxu0 0.0
    %3441 = vmatpush1.msra.mxu0 0.0
    %3442 = vmatprep.subr.mxu0 0.0
    %3443 = vmatpush1.msra.mxu0 0.0
    %3444 = vmatprep.subr.mxu0 0.0
    %3445 = vmatpush1.msra.mxu0 0.0
    %3446 = vmatprep.subr.mxu0 0.0
    %3447 = vmatpush1.msra.mxu0 0.0
    %3448 = vmatprep.subr.mxu0 0.0
    %3449 = vmatpush1.msra.mxu0 0.0
    %3450 = vmatprep.subr.mxu0 0.0
    %3451 = vmatpush1.msra.mxu0 0.0
    %3452 = vmatprep.subr.mxu0 0.0
    %3453 = vmatpush1.msra.mxu0 0.0
    %3454 = vmatprep.subr.mxu0 0.0
    %3455 = vmatpush1.msra.mxu0 0.0
    %3456 = vmatprep.subr.mxu0 0.0
    %3457 = vmatpush1.msra.mxu0 0.0
    %3458 = vmatprep.subr.mxu0 0.0
    %3459 = vmatpush1.msra.mxu0 0.0
    %3460 = vmatprep.subr.mxu0 0.0
    %3461 = vmatpush1.msra.mxu0 0.0
    %3462 = vmatprep.subr.mxu0 0.0
    %3463 = vmatpush1.msra.mxu0 0.0
    %3464 = vmatprep.subr.mxu0 0.0
    %3465 = vmatpush1.msra.mxu0 0.0
    %3466 = vmatprep.subr.mxu0 0.0
    %3467 = vmatpush1.msra.mxu0 0.0
    %3468 = vmatprep.subr.mxu0 0.0
    %3469 = vmatpush1.msra.mxu0 0.0
    %3470 = vmatprep.subr.mxu0 0.0
    %3471 = vmatpush1.msra.mxu0 0.0
    %3472 = vmatprep.subr.mxu0 0.0
    %3473 = vmatpush1.msra.mxu0 0.0
    %3474 = vmatprep.subr.mxu0 0.0
    %3475 = vmatpush1.msra.mxu0 0.0
    %3476 = vmatprep.subr.mxu0 0.0
    %3477 = vmatpush1.msra.mxu0 0.0
    %3478 = vmatprep.subr.mxu0 0.0
    %3479 = vmatpush1.msra.mxu0 0.0
    %3480 = vmatprep.subr.mxu0 0.0
    %3481 = vmatpush1.msra.mxu0 0.0
    %3482 = vmatprep.subr.mxu0 0.0
    %3483 = vmatpush1.msra.mxu0 0.0
    %3484 = vmatprep.subr.mxu0 0.0
    %3485 = vmatpush1.msra.mxu0 0.0
    %3486 = vmatprep.subr.mxu0 0.0
    %3487 = vmatpush1.msra.mxu0 0.0
    %3488 = vmatprep.mubr.f32.mxu0 0.0
    %3489 = vmatmul.mubr.f32.gmra.mrb[0].mxu0 %v3419
    %v3490 = vpop.f32.mrb[0].mxu0
    %v3491 = vadd.f32 %v1636, %v3490
    %v3492 = vpop.f32.mrb[0].mxu0
    %3493 = vmatprep.mubr.f32.mxu0 0.0
    %3494 = vmatmul.mubr.f32.gmra.mrb[0].mxu0 %v3422
    %v3495 = vpop.f32.mrb[0].mxu0
    %v3496 = vadd.f32 %v1636, %v3495
    %v3497 = vpop.f32.mrb[0].mxu0
    %3498 = vdwg.mxu0
    %v3499 = vadd.f32 %v1983, %v3491
    %v3500 = vadd.f32 %v1984, %v3496
    %v3501 = vsel %vm108, %v3499, 0.0
    %3502 = vadd.xlane.f32.xlu0 %v3501
    %v3503 = vpop.xlane.xlu0 %3502
    %v3504 = vsel %vm108, %v3500, 0.0
    %3505 = vadd.xlane.f32.xlu0 %v3504
    %v3506 = vpop.xlane.xlu0 %3505
    %v3507 = vmul.f32 %v3503, %v1727
    %v3508 = vmul.f32 %v3506, %v1727
    %v3509 = vsub.f32 %v3499, %v3507
    %v3510 = vsub.f32 %v3500, %v3508
    %v3511 = vmul.f32 %v3509, %v3509
    %v3512 = vmul.f32 %v3510, %v3510
    %v3513 = vsel %vm108, %v3511, 0.0
    %3514 = vadd.xlane.f32.xlu0 %v3513
    %v3515 = vpop.xlane.xlu0 %3514
    %v3516 = vsel %vm108, %v3512, 0.0
    %3517 = vadd.xlane.f32.xlu0 %v3516
    %v3518 = vpop.xlane.xlu0 %3517
    %v3519 = vmul.f32 %v3515, %v1727
    %v3520 = vmul.f32 %v3518, %v1727
    %v3521 = vadd.f32 %v3519, 1e-05
    %v3522 = vadd.f32 %v3520, 1e-05
    %v3523 = vrsqrt.pop %v3521
    %v3524 = vrsqrt.pop %v3522
    %v3525 = vmul.f32 %v3509, %v3523
    %v3526 = vmul.f32 %v3510, %v3524
    %v3527 = vmul.f32 %v3525, %v1752
    %v3528 = vmul.f32 %v3526, %v1752
    %v3529 = vadd.f32 %v3527, %v1760
    %v3530 = vadd.f32 %v3528, %v1760
    %v3532 = vsel %vm108, %v3529, 0
    %v3535 = vsel %vm108, %v3530, 0
    %3537 = vmatprep.subr.mxu0 0.0
    %3538 = vmatpush1.msra.mxu0 %v90
    %3539 = vmatprep.subr.mxu0 0.0
    %3540 = vmatpush1.msra.mxu0 %v91
    %3541 = vmatprep.subr.mxu0 0.0
    %3542 = vmatpush1.msra.mxu0 %v92
    %3543 = vmatprep.subr.mxu0 0.0
    %3544 = vmatpush1.msra.mxu0 %v93
    %3545 = vmatprep.subr.mxu0 0.0
    %3546 = vmatpush1.msra.mxu0 0.0
    %3547 = vmatprep.subr.mxu0 0.0
    %3548 = vmatpush1.msra.mxu0 0.0
    %3549 = vmatprep.subr.mxu0 0.0
    %3550 = vmatpush1.msra.mxu0 0.0
    %3551 = vmatprep.subr.mxu0 0.0
    %3552 = vmatpush1.msra.mxu0 0.0
    %3553 = vmatprep.subr.mxu0 0.0
    %3554 = vmatpush1.msra.mxu0 0.0
    %3555 = vmatprep.subr.mxu0 0.0
    %3556 = vmatpush1.msra.mxu0 0.0
    %3557 = vmatprep.subr.mxu0 0.0
    %3558 = vmatpush1.msra.mxu0 0.0
    %3559 = vmatprep.subr.mxu0 0.0
    %3560 = vmatpush1.msra.mxu0 0.0
    %3561 = vmatprep.subr.mxu0 0.0
    %3562 = vmatpush1.msra.mxu0 0.0
    %3563 = vmatprep.subr.mxu0 0.0
    %3564 = vmatpush1.msra.mxu0 0.0
    %3565 = vmatprep.subr.mxu0 0.0
    %3566 = vmatpush1.msra.mxu0 0.0
    %3567 = vmatprep.subr.mxu0 0.0
    %3568 = vmatpush1.msra.mxu0 0.0
    %3569 = vmatprep.subr.mxu0 0.0
    %3570 = vmatpush1.msra.mxu0 0.0
    %3571 = vmatprep.subr.mxu0 0.0
    %3572 = vmatpush1.msra.mxu0 0.0
    %3573 = vmatprep.subr.mxu0 0.0
    %3574 = vmatpush1.msra.mxu0 0.0
    %3575 = vmatprep.subr.mxu0 0.0
    %3576 = vmatpush1.msra.mxu0 0.0
    %3577 = vmatprep.subr.mxu0 0.0
    %3578 = vmatpush1.msra.mxu0 0.0
    %3579 = vmatprep.subr.mxu0 0.0
    %3580 = vmatpush1.msra.mxu0 0.0
    %3581 = vmatprep.subr.mxu0 0.0
    %3582 = vmatpush1.msra.mxu0 0.0
    %3583 = vmatprep.subr.mxu0 0.0
    %3584 = vmatpush1.msra.mxu0 0.0
    %3585 = vmatprep.subr.mxu0 0.0
    %3586 = vmatpush1.msra.mxu0 0.0
    %3587 = vmatprep.subr.mxu0 0.0
    %3588 = vmatpush1.msra.mxu0 0.0
    %3589 = vmatprep.subr.mxu0 0.0
    %3590 = vmatpush1.msra.mxu0 0.0
    %3591 = vmatprep.subr.mxu0 0.0
    %3592 = vmatpush1.msra.mxu0 0.0
    %3593 = vmatprep.subr.mxu0 0.0
    %3594 = vmatpush1.msra.mxu0 0.0
    %3595 = vmatprep.subr.mxu0 0.0
    %3596 = vmatpush1.msra.mxu0 0.0
    %3597 = vmatprep.subr.mxu0 0.0
    %3598 = vmatpush1.msra.mxu0 0.0
    %3599 = vmatprep.subr.mxu0 0.0
    %3600 = vmatpush1.msra.mxu0 0.0
    %3601 = vmatprep.mubr.f32.mxu0 0.0
    %3602 = vmatmul.mubr.f32.gmra.mrb[0].mxu0 %v3532
    %v3603 = vpop.f32.mrb[0].mxu0
    %v3604 = vadd.f32 %v1768, %v3603
    %v3605 = vpop.f32.mrb[0].mxu0
    %3606 = vmatprep.mubr.f32.mxu0 0.0
    %3607 = vmatmul.mubr.f32.gmra.mrb[0].mxu0 %v3535
    %v3608 = vpop.f32.mrb[0].mxu0
    %v3609 = vadd.f32 %v1768, %v3608
    %v3610 = vpop.f32.mrb[0].mxu0
    %3611 = vdwg.mxu0
    %v3612 = vmax.f32 %v3604, 0.0
    %v3613 = vmax.f32 %v3609, 0.0
    %v3615 = vsel %vm1859, %v3612, 0
    %v3618 = vsel %vm1859, %v3613, 0
    %3620 = vmatprep.subr.mxu0 0.0
    %3621 = vmatpush1.msra.mxu0 %v95
    %3622 = vmatprep.subr.mxu0 0.0
    %3623 = vmatpush1.msra.mxu0 %v96
    %3624 = vmatprep.subr.mxu0 0.0
    %3625 = vmatpush1.msra.mxu0 %v97
    %3626 = vmatprep.subr.mxu0 0.0
    %3627 = vmatpush1.msra.mxu0 %v98
    %3628 = vmatprep.subr.mxu0 0.0
    %3629 = vmatpush1.msra.mxu0 %v99
    %3630 = vmatprep.subr.mxu0 0.0
    %3631 = vmatpush1.msra.mxu0 %v100
    %3632 = vmatprep.subr.mxu0 0.0
    %3633 = vmatpush1.msra.mxu0 %v101
    %3634 = vmatprep.subr.mxu0 0.0
    %3635 = vmatpush1.msra.mxu0 %v102
    %3636 = vmatprep.subr.mxu0 0.0
    %3637 = vmatpush1.msra.mxu0 0.0
    %3638 = vmatprep.subr.mxu0 0.0
    %3639 = vmatpush1.msra.mxu0 0.0
    %3640 = vmatprep.subr.mxu0 0.0
    %3641 = vmatpush1.msra.mxu0 0.0
    %3642 = vmatprep.subr.mxu0 0.0
    %3643 = vmatpush1.msra.mxu0 0.0
    %3644 = vmatprep.subr.mxu0 0.0
    %3645 = vmatpush1.msra.mxu0 0.0
    %3646 = vmatprep.subr.mxu0 0.0
    %3647 = vmatpush1.msra.mxu0 0.0
    %3648 = vmatprep.subr.mxu0 0.0
    %3649 = vmatpush1.msra.mxu0 0.0
    %3650 = vmatprep.subr.mxu0 0.0
    %3651 = vmatpush1.msra.mxu0 0.0
    %3652 = vmatprep.subr.mxu0 0.0
    %3653 = vmatpush1.msra.mxu0 0.0
    %3654 = vmatprep.subr.mxu0 0.0
    %3655 = vmatpush1.msra.mxu0 0.0
    %3656 = vmatprep.subr.mxu0 0.0
    %3657 = vmatpush1.msra.mxu0 0.0
    %3658 = vmatprep.subr.mxu0 0.0
    %3659 = vmatpush1.msra.mxu0 0.0
    %3660 = vmatprep.subr.mxu0 0.0
    %3661 = vmatpush1.msra.mxu0 0.0
    %3662 = vmatprep.subr.mxu0 0.0
    %3663 = vmatpush1.msra.mxu0 0.0
    %3664 = vmatprep.subr.mxu0 0.0
    %3665 = vmatpush1.msra.mxu0 0.0
    %3666 = vmatprep.subr.mxu0 0.0
    %3667 = vmatpush1.msra.mxu0 0.0
    %3668 = vmatprep.subr.mxu0 0.0
    %3669 = vmatpush1.msra.mxu0 0.0
    %3670 = vmatprep.subr.mxu0 0.0
    %3671 = vmatpush1.msra.mxu0 0.0
    %3672 = vmatprep.subr.mxu0 0.0
    %3673 = vmatpush1.msra.mxu0 0.0
    %3674 = vmatprep.subr.mxu0 0.0
    %3675 = vmatpush1.msra.mxu0 0.0
    %3676 = vmatprep.subr.mxu0 0.0
    %3677 = vmatpush1.msra.mxu0 0.0
    %3678 = vmatprep.subr.mxu0 0.0
    %3679 = vmatpush1.msra.mxu0 0.0
    %3680 = vmatprep.subr.mxu0 0.0
    %3681 = vmatpush1.msra.mxu0 0.0
    %3682 = vmatprep.subr.mxu0 0.0
    %3683 = vmatpush1.msra.mxu0 0.0
    %3684 = vmatprep.mubr.f32.mxu0 0.0
    %3685 = vmatmul.mubr.f32.gmra.mrb[0].mxu0 %v3615
    %v3686 = vpop.f32.mrb[0].mxu0
    %v3687 = vadd.f32 %v1857, %v3686
    %v3688 = vpop.f32.mrb[0].mxu0
    %3689 = vmatprep.mubr.f32.mxu0 0.0
    %3690 = vmatmul.mubr.f32.gmra.mrb[0].mxu0 %v3618
    %v3691 = vpop.f32.mrb[0].mxu0
    %v3692 = vadd.f32 %v1857, %v3691
    %v3693 = vpop.f32.mrb[0].mxu0
    %3694 = vdwg.mxu0
    %v3695 = vadd.f32 %v3529, %v3687
    %v3696 = vadd.f32 %v3530, %v3692
    %v3697 = vsel %vm108, %v3695, 0.0
    %3698 = vadd.xlane.f32.xlu0 %v3697
    %v3699 = vpop.xlane.xlu0 %3698
    %v3700 = vsel %vm108, %v3696, 0.0
    %3701 = vadd.xlane.f32.xlu0 %v3700
    %v3702 = vpop.xlane.xlu0 %3701
    %v3703 = vmul.f32 %v3699, %v1727
    %v3704 = vmul.f32 %v3702, %v1727
    %v3705 = vsub.f32 %v3695, %v3703
    %v3706 = vsub.f32 %v3696, %v3704
    %v3707 = vmul.f32 %v3705, %v3705
    %v3708 = vmul.f32 %v3706, %v3706
    %v3709 = vsel %vm108, %v3707, 0.0
    %3710 = vadd.xlane.f32.xlu0 %v3709
    %v3711 = vpop.xlane.xlu0 %3710
    %v3712 = vsel %vm108, %v3708, 0.0
    %3713 = vadd.xlane.f32.xlu0 %v3712
    %v3714 = vpop.xlane.xlu0 %3713
    %v3715 = vmul.f32 %v3711, %v1727
    %v3716 = vmul.f32 %v3714, %v1727
    %v3717 = vadd.f32 %v3715, 1e-05
    %v3718 = vadd.f32 %v3716, 1e-05
    %v3719 = vrsqrt.pop %v3717
    %v3720 = vrsqrt.pop %v3718
    %v3721 = vmul.f32 %v3705, %v3719
    %v3722 = vmul.f32 %v3706, %v3720
    %v3723 = vmul.f32 %v3721, %v1973
    %v3724 = vmul.f32 %v3722, %v1973
    %v3725 = vadd.f32 %v3723, %v1981
    %v3726 = vadd.f32 %v3724, %v1981
    %3727 = vst.msk [vmem:[#allocation7] sm:$0xff] %vm108, %v3725
    %3728 = vst.msk [vmem:[#allocation7 + $0x8] sm:$0xff] %vm108, %v3726
    // Predicated region
    $region66: #{tpu_custom_call.1} parent=1 // pred_check
      _
    $region67: #{tpu_custom_call.1} parent=1 // pred_check_branch
      %3730 = sbr.rel (0) target = $region69
    $region68: #{tpu_custom_call.1} parent=1 // pred_region
      %s3732 = ssub.s32 256, 256
      %3733 = vsyncadd [#allocation4], %s3732
      %s3734 = sshll.u32 [#allocation7], 4
      %s3735 = int_to_ptr.vmem [resolvable:$true] %s3734
      %3740 = dma.vmem_to_hbm [thread:$0]  %s3735, 256, %s14, [#allocation4], 128, 128, 8
    $region69: #{tpu_custom_call.1} parent=1 // pred_fallthru
      _
    // Predicated region
    $region70: #{tpu_custom_call.1} parent=1 // pred_check
      _
    $region71: #{tpu_custom_call.1} parent=1 // pred_check_branch
      %3742 = sbr.rel (0) target = $region73
    $region72: #{tpu_custom_call.1} parent=1 // pred_region
      %3743 = dma.done [#allocation4], 256
    $region73: #{tpu_custom_call.1} parent=1 // pred_fallthru
      _
    %3744 = vsyncpa [#allocation3], 1
    %3745 = vsyncpa [#allocation6], 1
    %3746 = vsyncpa [#allocation4], 1

</llo_original>
